<compile_context>
chip_gen: v6e
topology: v6e:2x2x1
jax: 0.10.0
libtpu: 0.0.40
codegen_flags: <defaults>
</compile_context>

<pallas_src>
import jax
import jax.numpy as jnp
import numpy as np
from jax import lax
from jax.experimental import pallas as pl
from jax.experimental.pallas import tpu as pltpu

IN_DIM = 128
H1 = 64
H2 = 32
LSTM_H = 16
ACTION_SPACE = 6             # small synthetic action space
HEAD_OUT = ACTION_SPACE + 1  # actor logits + critic value, fused head
OUT_LANES = 128              # lane-dense packed output slab width

# packed-slab offsets: [h(16) | c(16) | prob(6) | logp(6) | ent(1) | v(1) | pad]
_H_OFF = 0
_C_OFF = LSTM_H
_P_OFF = 2 * LSTM_H
_LP_OFF = _P_OFF + ACTION_SPACE
_ENT_OFF = _LP_OFF + ACTION_SPACE
_V_OFF = _ENT_OFF + 1
_PACKED = _V_OFF + 1  # 46


def pixel_rnn_kernel(
    s1_ref, s2_ref, hx0_ref, cx0_ref,
    w1_ref, b1_ref, w2_ref, b2_ref,
    wih_ref, whh_ref, bl_ref, wh_ref, bh_ref,
    out_ref, gx_sc, h_sc, c_sc,
):
    f32 = jnp.float32
    T, Bb, _ = s1_ref.shape
    TB = T * Bb

    # --- hoisted state-independent phase: one M=T*Bb matmul chain -------------
    # preprocessing folded into layer 1: (s1 - s2) @ (w1/255) + b1'
    d = (s1_ref[...] - s2_ref[...]).reshape(TB, IN_DIM)
    x = jnp.dot(d, w1_ref[...], preferred_element_type=f32) + b1_ref[...]
    x = jnp.maximum(x, 0.0)                                        # (TB, 64)
    x = jnp.dot(x, w2_ref[...], preferred_element_type=f32) + b2_ref[...]
    x = jnp.maximum(x, 0.0)                                        # (TB, 32)
    gx = jnp.dot(x, wih_ref[...], preferred_element_type=f32) + bl_ref[...]
    gx_sc[...] = gx.reshape(T, Bb, 4 * LSTM_H)                     # x@wih + (bih+bhh)

    # --- serial recurrence: only h_prev @ whh + elementwise per step ----------
    whh = whh_ref[...]

    def step(t, carry):
        h_prev, c_prev = carry
        gates = gx_sc[t] + jnp.dot(h_prev, whh, preferred_element_type=f32)
        sg = jax.nn.sigmoid(gates)                                 # (Bb, 64)
        tg = jnp.tanh(gates)                                       # (Bb, 64)
        i_g = sg[:, 0 * LSTM_H:1 * LSTM_H]                         # PyTorch order i,f,g,o
        f_g = sg[:, 1 * LSTM_H:2 * LSTM_H]
        g_g = tg[:, 2 * LSTM_H:3 * LSTM_H]
        o_g = sg[:, 3 * LSTM_H:4 * LSTM_H]
        c_new = f_g * c_prev + i_g * g_g
        h_new = o_g * jnp.tanh(c_new)
        h_sc[t] = h_new
        c_sc[t] = c_new
        return h_new, c_new

    lax.fori_loop(0, T, step, (hx0_ref[...], cx0_ref[...]), unroll=True)

    # --- batched actor+critic head + softmax over all T*Bb rows ---------------
    h_flat = h_sc[...].reshape(TB, LSTM_H)
    c_flat = c_sc[...].reshape(TB, LSTM_H)
    head = jnp.dot(h_flat, wh_ref[...], preferred_element_type=f32) + bh_ref[...]
    logit = head[:, 0:ACTION_SPACE]
    v = head[:, ACTION_SPACE:ACTION_SPACE + 1]

    m = jnp.max(logit, axis=-1, keepdims=True)
    sh = logit - m
    e = jnp.exp(sh)
    denom = jnp.sum(e, axis=-1, keepdims=True)
    logp = sh - jnp.log(denom)
    prob = e * pl.reciprocal(denom, approx=False)
    ent = -jnp.sum(logp * prob, axis=-1, keepdims=True)

    # --- one lane-dense packed slab, written back to HBM once per block -------
    pad = jnp.zeros((TB, OUT_LANES - _PACKED), f32)
    packed = jnp.concatenate([h_flat, c_flat, prob, logp, ent, v, pad], axis=1)
    out_ref[...] = packed.reshape(T, Bb, OUT_LANES)


def pixel_rnn_forward(state1_seq, state2_seq, hx0, cx0, fp, *,
                      batch_block=None, core_parallel=False):
    """state1_seq/state2_seq: (T, B, 128) f32; hx0/cx0: (B, 16) f32.

    Default: one batch block (nb=1) -> single kernel invocation (v5e/v6e).
    On v7x pass batch_block=B//2, core_parallel=True to split across the two
    TensorCores.
    """
    T, B, _ = state1_seq.shape
    if batch_block is None:
        batch_block = B
    assert B % batch_block == 0
    nb = B // batch_block

    const = lambda b: (0, 0)
    step_in = pl.BlockSpec((T, batch_block, IN_DIM), lambda b: (0, b, 0))
    rec_in = pl.BlockSpec((batch_block, LSTM_H), lambda b: (b, 0))
    in_specs = [
        step_in, step_in, rec_in, rec_in,
        pl.BlockSpec((IN_DIM, H1), const), pl.BlockSpec((1, H1), const),
        pl.BlockSpec((H1, H2), const), pl.BlockSpec((1, H2), const),
        pl.BlockSpec((H2, 4 * LSTM_H), const),
        pl.BlockSpec((LSTM_H, 4 * LSTM_H), const),
        pl.BlockSpec((1, 4 * LSTM_H), const),
        pl.BlockSpec((LSTM_H, HEAD_OUT), const),
        pl.BlockSpec((1, HEAD_OUT), const),
    ]
    out_spec = pl.BlockSpec((T, batch_block, OUT_LANES), lambda b: (0, b, 0))

    sem = (pltpu.CORE_PARALLEL,) if core_parallel else ("parallel",)

    slab = pl.pallas_call(
        pixel_rnn_kernel,
        out_shape=jax.ShapeDtypeStruct((T, B, OUT_LANES), jnp.float32),
        grid=(nb,),
        in_specs=in_specs,
        out_specs=out_spec,
        scratch_shapes=[
            pltpu.VMEM((T, batch_block, 4 * LSTM_H), jnp.float32),  # x@wih + bias
            pltpu.VMEM((T, batch_block, LSTM_H), jnp.float32),      # h per step
            pltpu.VMEM((T, batch_block, LSTM_H), jnp.float32),      # c per step
        ],
        compiler_params=pltpu.CompilerParams(dimension_semantics=sem),
    )(state1_seq, state2_seq, hx0, cx0,
      fp["w1p"], fp["b1p"], fp["w2"], fp["b2"],
      fp["wih"], fp["whh"], fp["b_lstm"], fp["w_head"], fp["b_head"])

    h = slab[..., _H_OFF:_H_OFF + LSTM_H]
    c = slab[..., _C_OFF:_C_OFF + LSTM_H]
    prob = slab[..., _P_OFF:_P_OFF + ACTION_SPACE]
    logp = slab[..., _LP_OFF:_LP_OFF + ACTION_SPACE]
    ent = slab[..., _ENT_OFF:_ENT_OFF + 1]
    v = slab[..., _V_OFF:_V_OFF + 1]
    return h, c, prob, logp, ent, v


def init_params(key):
    """Deterministic synthetic parameters matching the torch module shapes
    (weights pre-transposed to [in, out])."""
    ks = jax.random.split(key, 12)

    def lin(kw, kb, fan_in, fan_out):
        bound = 1.0 / np.sqrt(fan_in)
        w = jax.random.uniform(kw, (fan_in, fan_out), jnp.float32, -bound, bound)
        b = jax.random.uniform(kb, (1, fan_out), jnp.float32, -bound, bound)
        return w, b

    def norm_cols(k, fan_in, fan_out, std):
        w = jax.random.normal(k, (fan_in, fan_out), jnp.float32)
        w = w * std / jnp.sqrt(jnp.sum(jnp.square(w), axis=0, keepdims=True))
        return w

    w1, b1 = lin(ks[0], ks[1], IN_DIM, H1)
    w2, b2 = lin(ks[2], ks[3], H1, H2)
    wih, bih = lin(ks[4], ks[5], H2, 4 * LSTM_H)
    whh, bhh = lin(ks[6], ks[7], LSTM_H, 4 * LSTM_H)
    wa = norm_cols(ks[8], LSTM_H, ACTION_SPACE, 0.01)
    ba = jnp.zeros((1, ACTION_SPACE), jnp.float32)
    wc = norm_cols(ks[9], LSTM_H, 1, 1.0)
    bc = jnp.zeros((1, 1), jnp.float32)
    return dict(w1=w1, b1=b1, w2=w2, b2=b2, wih=wih, whh=whh, bih=bih, bhh=bhh,
                wa=wa, ba=ba, wc=wc, bc=bc)


def fuse_params(p):
    """One-time weight transforms: fold pixel preprocessing into layer 1, fuse
    the LSTM biases, and fuse the actor/critic heads."""
    w1p = p["w1"] * (1.0 / 255.0)
    b1p = p["b1"] + jnp.sum(p["w1"], axis=0, keepdims=True)        # ones(1,128) @ w1
    b_lstm = p["bih"] + p["bhh"]                                   # (1, 64)
    w_head = jnp.concatenate([p["wa"], p["wc"]], axis=1)           # (16, 7)
    b_head = jnp.concatenate([p["ba"], p["bc"]], axis=1)           # (1, 7)
    return dict(w1p=w1p, b1p=b1p, w2=p["w2"], b2=p["b2"],
                wih=p["wih"], whh=p["whh"], b_lstm=b_lstm,
                w_head=w_head, b_head=b_head)


def reference_forward(s1_seq, s2_seq, hx, cx, p):
    """Plain-JAX reference in the ORIGINAL (unfused) parameterization."""
    T = s1_seq.shape[0]
    hs, cs, ps, lps, ents, vs = [], [], [], [], [], []
    h, c = hx, cx
    for t in range(T):
        s = (s1_seq[t] + 255.0 - s2_seq[t]) / 255.0
        x = jax.nn.relu(s @ p["w1"] + p["b1"])
        x = jax.nn.relu(x @ p["w2"] + p["b2"])
        gates = x @ p["wih"] + p["bih"] + h @ p["whh"] + p["bhh"]
        i, f, g, o = jnp.split(gates, 4, axis=1)
        c = jax.nn.sigmoid(f) * c + jax.nn.sigmoid(i) * jnp.tanh(g)
        h = jax.nn.sigmoid(o) * jnp.tanh(c)
        logit = h @ p["wa"] + p["ba"]
        prob = jax.nn.softmax(logit, axis=1)
        logp = jax.nn.log_softmax(logit, axis=1)
        ent = -jnp.sum(logp * prob, axis=1, keepdims=True)
        v = h @ p["wc"] + p["bc"]
        hs.append(h); cs.append(c); ps.append(prob)
        lps.append(logp); ents.append(ent); vs.append(v)
    st = lambda xs: jnp.stack(xs, axis=0)
    return st(hs), st(cs), st(ps), st(lps), st(ents), st(vs)


if __name__ == "__main__":
    key = jax.random.PRNGKey(0)
    k_par, k_s1, k_s2, k_h, k_c, k_samp = jax.random.split(key, 6)

    T, B = 8, 16   # 8 timesteps, 16 parallel environments (one batch block)
    params = init_params(k_par)
    fused = fuse_params(params)
    action_map = list(range(ACTION_SPACE))  # synthetic action map

    # synthetic "pixel" observations (uint8-like values), cast once to f32
    state1 = jax.random.randint(k_s1, (T, B, IN_DIM), 0, 256, jnp.int32).astype(jnp.float32)
    state2 = jax.random.randint(k_s2, (T, B, IN_DIM), 0, 256, jnp.int32).astype(jnp.float32)
    hx0 = jax.random.normal(k_h, (B, LSTM_H), jnp.float32) * 0.1
    cx0 = jax.random.normal(k_c, (B, LSTM_H), jnp.float32) * 0.1

    h, c, prob, logp, entropy, value = jax.block_until_ready(
        pixel_rnn_forward(state1, state2, hx0, cx0, fused)
    )

    # validate against plain-JAX reference
    ref = reference_forward(state1, state2, hx0, cx0, params)
    for got, want in zip((h, c, prob, logp, entropy, value), ref):
        np.testing.assert_allclose(np.asarray(got), np.asarray(want),
                                   rtol=2e-4, atol=2e-5)

    # TODO(synk): multinomial sampling + action_map gather are host-side glue
    # (outside the kernel), matching prob.multinomial / self.action_map[...].
    selected = jax.random.categorical(k_samp, logp[-1], axis=-1)   # (B,)
    sel_np = np.asarray(selected)
    actions = [action_map[int(s)] for s in sel_np]
    log_prob = np.asarray(logp[-1])[np.arange(B), sel_np]
    _ = (actions, log_prob, np.asarray(entropy[-1]), np.asarray(value[-1]))

    print("KERNEL_OK")
</pallas_src>

<mosaic_0001>
module attributes {stable_mosaic.version = 11 : i64} {
  func.func @pixel_rnn_kernel(%arg0: i32, %arg1: memref<8x16x128xf32, #tpu.memory_space<vmem>>, %arg2: memref<8x16x128xf32, #tpu.memory_space<vmem>>, %arg3: memref<16x16xf32, #tpu.memory_space<vmem>>, %arg4: memref<16x16xf32, #tpu.memory_space<vmem>>, %arg5: memref<128x64xf32, #tpu.memory_space<vmem>>, %arg6: memref<1x64xf32, #tpu.memory_space<vmem>>, %arg7: memref<64x32xf32, #tpu.memory_space<vmem>>, %arg8: memref<1x32xf32, #tpu.memory_space<vmem>>, %arg9: memref<32x64xf32, #tpu.memory_space<vmem>>, %arg10: memref<16x64xf32, #tpu.memory_space<vmem>>, %arg11: memref<1x64xf32, #tpu.memory_space<vmem>>, %arg12: memref<16x7xf32, #tpu.memory_space<vmem>>, %arg13: memref<1x7xf32, #tpu.memory_space<vmem>>, %arg14: memref<8x16x128xf32, #tpu.memory_space<vmem>>, %arg15: memref<8x16x64xf32, #tpu.memory_space<vmem>>, %arg16: memref<8x16x16xf32, #tpu.memory_space<vmem>>, %arg17: memref<8x16x16xf32, #tpu.memory_space<vmem>>) attributes {dimension_semantics = [#tpu.dimension_semantics<parallel>], iteration_bounds = array<i64: 1>, scalar_prefetch = 0 : i64, scratch_operands = 3 : i64, tpu.core_type = #tpu.core_type<tc>, window_params = [{transform_indices = @transform_0, window_bounds = array<i64: 8, 16, 128>}, {transform_indices = @transform_1, window_bounds = array<i64: 8, 16, 128>}, {transform_indices = @transform_2, window_bounds = array<i64: 16, 16>}, {transform_indices = @transform_3, window_bounds = array<i64: 16, 16>}, {pipeline_mode = #tpu.pipeline_mode<synchronous>, transform_indices = @transform_4, window_bounds = array<i64: 128, 64>}, {pipeline_mode = #tpu.pipeline_mode<synchronous>, transform_indices = @transform_5, window_bounds = array<i64: 1, 64>}, {pipeline_mode = #tpu.pipeline_mode<synchronous>, transform_indices = @transform_6, window_bounds = array<i64: 64, 32>}, {pipeline_mode = #tpu.pipeline_mode<synchronous>, transform_indices = @transform_7, window_bounds = array<i64: 1, 32>}, {pipeline_mode = #tpu.pipeline_mode<synchronous>, transform_indices = @transform_8, window_bounds = array<i64: 32, 64>}, {pipeline_mode = #tpu.pipeline_mode<synchronous>, transform_indices = @transform_9, window_bounds = array<i64: 16, 64>}, {pipeline_mode = #tpu.pipeline_mode<synchronous>, transform_indices = @transform_10, window_bounds = array<i64: 1, 64>}, {pipeline_mode = #tpu.pipeline_mode<synchronous>, transform_indices = @transform_11, window_bounds = array<i64: 16, 7>}, {pipeline_mode = #tpu.pipeline_mode<synchronous>, transform_indices = @transform_12, window_bounds = array<i64: 1, 7>}, {transform_indices = @transform_13, window_bounds = array<i64: 8, 16, 128>}]} {
    %c0 = arith.constant 0 : index
    %c0_0 = arith.constant 0 : index
    %c0_1 = arith.constant 0 : index
    %0 = vector.load %arg1[%c0, %c0_0, %c0_1] : memref<8x16x128xf32, #tpu.memory_space<vmem>>, vector<8x16x128xf32>
    %c0_2 = arith.constant 0 : index
    %c0_3 = arith.constant 0 : index
    %c0_4 = arith.constant 0 : index
    %1 = vector.load %arg2[%c0_2, %c0_3, %c0_4] : memref<8x16x128xf32, #tpu.memory_space<vmem>>, vector<8x16x128xf32>
    %2 = arith.subf %0, %1 : vector<8x16x128xf32>
    %3 = vector.shape_cast %2 : vector<8x16x128xf32> to vector<128x128xf32>
    %c0_5 = arith.constant 0 : index
    %c0_6 = arith.constant 0 : index
    %4 = vector.load %arg5[%c0_5, %c0_6] : memref<128x64xf32, #tpu.memory_space<vmem>>, vector<128x64xf32>
    %cst = arith.constant dense<0.000000e+00> : vector<128x64xf32>
    %5 = tpu.matmul %3, %4, %cst {dimension_numbers = #tpu.dot_dimension_numbers<[1], [0], [0], [1], [0, 0, 1, 1], [], []>} : vector<128x128xf32>, vector<128x64xf32>, vector<128x64xf32> -> vector<128x64xf32>
    %c0_7 = arith.constant 0 : index
    %c0_8 = arith.constant 0 : index
    %6 = vector.load %arg6[%c0_7, %c0_8] : memref<1x64xf32, #tpu.memory_space<vmem>>, vector<1x64xf32>
    %7 = vector.broadcast %6 : vector<1x64xf32> to vector<128x64xf32>
    %8 = arith.addf %5, %7 : vector<128x64xf32>
    %cst_9 = arith.constant 0.000000e+00 : f32
    %9 = vector.broadcast %cst_9 : f32 to vector<128x64xf32>
    %10 = arith.maximumf %8, %9 : vector<128x64xf32>
    %c0_10 = arith.constant 0 : index
    %c0_11 = arith.constant 0 : index
    %11 = vector.load %arg7[%c0_10, %c0_11] : memref<64x32xf32, #tpu.memory_space<vmem>>, vector<64x32xf32>
    %cst_12 = arith.constant dense<0.000000e+00> : vector<128x32xf32>
    %12 = tpu.matmul %10, %11, %cst_12 {dimension_numbers = #tpu.dot_dimension_numbers<[1], [0], [0], [1], [0, 0, 1, 1], [], []>} : vector<128x64xf32>, vector<64x32xf32>, vector<128x32xf32> -> vector<128x32xf32>
    %c0_13 = arith.constant 0 : index
    %c0_14 = arith.constant 0 : index
    %13 = vector.load %arg8[%c0_13, %c0_14] : memref<1x32xf32, #tpu.memory_space<vmem>>, vector<1x32xf32>
    %14 = vector.broadcast %13 : vector<1x32xf32> to vector<128x32xf32>
    %15 = arith.addf %12, %14 : vector<128x32xf32>
    %cst_15 = arith.constant 0.000000e+00 : f32
    %16 = vector.broadcast %cst_15 : f32 to vector<128x32xf32>
    %17 = arith.maximumf %15, %16 : vector<128x32xf32>
    %c0_16 = arith.constant 0 : index
    %c0_17 = arith.constant 0 : index
    %18 = vector.load %arg9[%c0_16, %c0_17] : memref<32x64xf32, #tpu.memory_space<vmem>>, vector<32x64xf32>
    %cst_18 = arith.constant dense<0.000000e+00> : vector<128x64xf32>
    %19 = tpu.matmul %17, %18, %cst_18 {dimension_numbers = #tpu.dot_dimension_numbers<[1], [0], [0], [1], [0, 0, 1, 1], [], []>} : vector<128x32xf32>, vector<32x64xf32>, vector<128x64xf32> -> vector<128x64xf32>
    %c0_19 = arith.constant 0 : index
    %c0_20 = arith.constant 0 : index
    %20 = vector.load %arg11[%c0_19, %c0_20] : memref<1x64xf32, #tpu.memory_space<vmem>>, vector<1x64xf32>
    %21 = vector.broadcast %20 : vector<1x64xf32> to vector<128x64xf32>
    %22 = arith.addf %19, %21 : vector<128x64xf32>
    %23 = vector.shape_cast %22 : vector<128x64xf32> to vector<8x16x64xf32>
    %c0_21 = arith.constant 0 : index
    %c0_22 = arith.constant 0 : index
    %c0_23 = arith.constant 0 : index
    %24 = vector.load %arg15[%c0_21, %c0_22, %c0_23] : memref<8x16x64xf32, #tpu.memory_space<vmem>>, vector<8x16x64xf32>
    tpu.vector_store %arg15[%c0_21, %c0_22, %c0_23], %23 {strides = array<i32>} : memref<8x16x64xf32, #tpu.memory_space<vmem>>, vector<8x16x64xf32>,
    %c0_24 = arith.constant 0 : index
    %c0_25 = arith.constant 0 : index
    %25 = vector.load %arg10[%c0_24, %c0_25] : memref<16x64xf32, #tpu.memory_space<vmem>>, vector<16x64xf32>
    %c0_26 = arith.constant 0 : index
    %c0_27 = arith.constant 0 : index
    %26 = vector.load %arg3[%c0_26, %c0_27] : memref<16x16xf32, #tpu.memory_space<vmem>>, vector<16x16xf32>
    %c0_28 = arith.constant 0 : index
    %c0_29 = arith.constant 0 : index
    %27 = vector.load %arg4[%c0_28, %c0_29] : memref<16x16xf32, #tpu.memory_space<vmem>>, vector<16x16xf32>
    %c0_i32 = arith.constant 0 : i32
    %28 = arith.index_cast %c0_i32 : i32 to index
    %c0_30 = arith.constant 0 : index
    %c0_31 = arith.constant 0 : index
    %29 = vector.load %arg15[%28, %c0_30, %c0_31] : memref<8x16x64xf32, #tpu.memory_space<vmem>>, vector<1x16x64xf32>
    %30 = vector.shape_cast %29 : vector<1x16x64xf32> to vector<16x64xf32>
    %cst_32 = arith.constant dense<0.000000e+00> : vector<16x64xf32>
    %31 = tpu.matmul %26, %25, %cst_32 {dimension_numbers = #tpu.dot_dimension_numbers<[1], [0], [0], [1], [0, 0, 1, 1], [], []>} : vector<16x16xf32>, vector<16x64xf32>, vector<16x64xf32> -> vector<16x64xf32>
    %32 = arith.addf %30, %31 : vector<16x64xf32>
    %33 = arith.negf %32 : vector<16x64xf32>
    %34 = math.exp %33 : vector<16x64xf32>
    %cst_33 = arith.constant 1.000000e+00 : f32
    %35 = vector.broadcast %cst_33 : f32 to vector<16x64xf32>
    %36 = arith.addf %35, %34 : vector<16x64xf32>
    %37 = arith.divf %35, %36 : vector<16x64xf32>
    %38 = math.tanh %32 : vector<16x64xf32>
    %39 = vector.extract_strided_slice %37 {offsets = [0, 0], sizes = [16, 16], strides = [1, 1]} : vector<16x64xf32> to vector<16x16xf32>
    %40 = vector.extract_strided_slice %37 {offsets = [0, 16], sizes = [16, 16], strides = [1, 1]} : vector<16x64xf32> to vector<16x16xf32>
    %41 = vector.extract_strided_slice %38 {offsets = [0, 32], sizes = [16, 16], strides = [1, 1]} : vector<16x64xf32> to vector<16x16xf32>
    %42 = vector.extract_strided_slice %37 {offsets = [0, 48], sizes = [16, 16], strides = [1, 1]} : vector<16x64xf32> to vector<16x16xf32>
    %43 = arith.mulf %40, %27 : vector<16x16xf32>
    %44 = arith.mulf %39, %41 : vector<16x16xf32>
    %45 = arith.addf %43, %44 : vector<16x16xf32>
    %46 = math.tanh %45 : vector<16x16xf32>
    %47 = arith.mulf %42, %46 : vector<16x16xf32>
    %48 = arith.index_cast %c0_i32 : i32 to index
    %c0_34 = arith.constant 0 : index
    %c0_35 = arith.constant 0 : index
    %49 = vector.load %arg16[%48, %c0_34, %c0_35] : memref<8x16x16xf32, #tpu.memory_space<vmem>>, vector<1x16x16xf32>
    %50 = vector.shape_cast %49 : vector<1x16x16xf32> to vector<16x16xf32>
    %51 = vector.shape_cast %47 : vector<16x16xf32> to vector<1x16x16xf32>
    tpu.vector_store %arg16[%48, %c0_34, %c0_35], %51 {strides = array<i32>} : memref<8x16x16xf32, #tpu.memory_space<vmem>>, vector<1x16x16xf32>,
    %52 = arith.index_cast %c0_i32 : i32 to index
    %c0_36 = arith.constant 0 : index
    %c0_37 = arith.constant 0 : index
    %53 = vector.load %arg17[%52, %c0_36, %c0_37] : memref<8x16x16xf32, #tpu.memory_space<vmem>>, vector<1x16x16xf32>
    %54 = vector.shape_cast %53 : vector<1x16x16xf32> to vector<16x16xf32>
    %55 = vector.shape_cast %45 : vector<16x16xf32> to vector<1x16x16xf32>
    tpu.vector_store %arg17[%52, %c0_36, %c0_37], %55 {strides = array<i32>} : memref<8x16x16xf32, #tpu.memory_space<vmem>>, vector<1x16x16xf32>,
    %c1_i32 = arith.constant 1 : i32
    %56 = arith.index_cast %c1_i32 : i32 to index
    %c0_38 = arith.constant 0 : index
    %c0_39 = arith.constant 0 : index
    %57 = vector.load %arg15[%56, %c0_38, %c0_39] : memref<8x16x64xf32, #tpu.memory_space<vmem>>, vector<1x16x64xf32>
    %58 = vector.shape_cast %57 : vector<1x16x64xf32> to vector<16x64xf32>
    %cst_40 = arith.constant dense<0.000000e+00> : vector<16x64xf32>
    %59 = tpu.matmul %47, %25, %cst_40 {dimension_numbers = #tpu.dot_dimension_numbers<[1], [0], [0], [1], [0, 0, 1, 1], [], []>} : vector<16x16xf32>, vector<16x64xf32>, vector<16x64xf32> -> vector<16x64xf32>
    %60 = arith.addf %58, %59 : vector<16x64xf32>
    %61 = arith.negf %60 : vector<16x64xf32>
    %62 = math.exp %61 : vector<16x64xf32>
    %cst_41 = arith.constant 1.000000e+00 : f32
    %63 = vector.broadcast %cst_41 : f32 to vector<16x64xf32>
    %64 = arith.addf %63, %62 : vector<16x64xf32>
    %65 = arith.divf %63, %64 : vector<16x64xf32>
    %66 = math.tanh %60 : vector<16x64xf32>
    %67 = vector.extract_strided_slice %65 {offsets = [0, 0], sizes = [16, 16], strides = [1, 1]} : vector<16x64xf32> to vector<16x16xf32>
    %68 = vector.extract_strided_slice %65 {offsets = [0, 16], sizes = [16, 16], strides = [1, 1]} : vector<16x64xf32> to vector<16x16xf32>
    %69 = vector.extract_strided_slice %66 {offsets = [0, 32], sizes = [16, 16], strides = [1, 1]} : vector<16x64xf32> to vector<16x16xf32>
    %70 = vector.extract_strided_slice %65 {offsets = [0, 48], sizes = [16, 16], strides = [1, 1]} : vector<16x64xf32> to vector<16x16xf32>
    %71 = arith.mulf %68, %45 : vector<16x16xf32>
    %72 = arith.mulf %67, %69 : vector<16x16xf32>
    %73 = arith.addf %71, %72 : vector<16x16xf32>
    %74 = math.tanh %73 : vector<16x16xf32>
    %75 = arith.mulf %70, %74 : vector<16x16xf32>
    %76 = arith.index_cast %c1_i32 : i32 to index
    %c0_42 = arith.constant 0 : index
    %c0_43 = arith.constant 0 : index
    %77 = vector.load %arg16[%76, %c0_42, %c0_43] : memref<8x16x16xf32, #tpu.memory_space<vmem>>, vector<1x16x16xf32>
    %78 = vector.shape_cast %77 : vector<1x16x16xf32> to vector<16x16xf32>
    %79 = vector.shape_cast %75 : vector<16x16xf32> to vector<1x16x16xf32>
    tpu.vector_store %arg16[%76, %c0_42, %c0_43], %79 {strides = array<i32>} : memref<8x16x16xf32, #tpu.memory_space<vmem>>, vector<1x16x16xf32>,
    %80 = arith.index_cast %c1_i32 : i32 to index
    %c0_44 = arith.constant 0 : index
    %c0_45 = arith.constant 0 : index
    %81 = vector.load %arg17[%80, %c0_44, %c0_45] : memref<8x16x16xf32, #tpu.memory_space<vmem>>, vector<1x16x16xf32>
    %82 = vector.shape_cast %81 : vector<1x16x16xf32> to vector<16x16xf32>
    %83 = vector.shape_cast %73 : vector<16x16xf32> to vector<1x16x16xf32>
    tpu.vector_store %arg17[%80, %c0_44, %c0_45], %83 {strides = array<i32>} : memref<8x16x16xf32, #tpu.memory_space<vmem>>, vector<1x16x16xf32>,
    %c2_i32 = arith.constant 2 : i32
    %84 = arith.index_cast %c2_i32 : i32 to index
    %c0_46 = arith.constant 0 : index
    %c0_47 = arith.constant 0 : index
    %85 = vector.load %arg15[%84, %c0_46, %c0_47] : memref<8x16x64xf32, #tpu.memory_space<vmem>>, vector<1x16x64xf32>
    %86 = vector.shape_cast %85 : vector<1x16x64xf32> to vector<16x64xf32>
    %cst_48 = arith.constant dense<0.000000e+00> : vector<16x64xf32>
    %87 = tpu.matmul %75, %25, %cst_48 {dimension_numbers = #tpu.dot_dimension_numbers<[1], [0], [0], [1], [0, 0, 1, 1], [], []>} : vector<16x16xf32>, vector<16x64xf32>, vector<16x64xf32> -> vector<16x64xf32>
    %88 = arith.addf %86, %87 : vector<16x64xf32>
    %89 = arith.negf %88 : vector<16x64xf32>
    %90 = math.exp %89 : vector<16x64xf32>
    %cst_49 = arith.constant 1.000000e+00 : f32
    %91 = vector.broadcast %cst_49 : f32 to vector<16x64xf32>
    %92 = arith.addf %91, %90 : vector<16x64xf32>
    %93 = arith.divf %91, %92 : vector<16x64xf32>
    %94 = math.tanh %88 : vector<16x64xf32>
    %95 = vector.extract_strided_slice %93 {offsets = [0, 0], sizes = [16, 16], strides = [1, 1]} : vector<16x64xf32> to vector<16x16xf32>
    %96 = vector.extract_strided_slice %93 {offsets = [0, 16], sizes = [16, 16], strides = [1, 1]} : vector<16x64xf32> to vector<16x16xf32>
    %97 = vector.extract_strided_slice %94 {offsets = [0, 32], sizes = [16, 16], strides = [1, 1]} : vector<16x64xf32> to vector<16x16xf32>
    %98 = vector.extract_strided_slice %93 {offsets = [0, 48], sizes = [16, 16], strides = [1, 1]} : vector<16x64xf32> to vector<16x16xf32>
    %99 = arith.mulf %96, %73 : vector<16x16xf32>
    %100 = arith.mulf %95, %97 : vector<16x16xf32>
    %101 = arith.addf %99, %100 : vector<16x16xf32>
    %102 = math.tanh %101 : vector<16x16xf32>
    %103 = arith.mulf %98, %102 : vector<16x16xf32>
    %104 = arith.index_cast %c2_i32 : i32 to index
    %c0_50 = arith.constant 0 : index
    %c0_51 = arith.constant 0 : index
    %105 = vector.load %arg16[%104, %c0_50, %c0_51] : memref<8x16x16xf32, #tpu.memory_space<vmem>>, vector<1x16x16xf32>
    %106 = vector.shape_cast %105 : vector<1x16x16xf32> to vector<16x16xf32>
    %107 = vector.shape_cast %103 : vector<16x16xf32> to vector<1x16x16xf32>
    tpu.vector_store %arg16[%104, %c0_50, %c0_51], %107 {strides = array<i32>} : memref<8x16x16xf32, #tpu.memory_space<vmem>>, vector<1x16x16xf32>,
    %108 = arith.index_cast %c2_i32 : i32 to index
    %c0_52 = arith.constant 0 : index
    %c0_53 = arith.constant 0 : index
    %109 = vector.load %arg17[%108, %c0_52, %c0_53] : memref<8x16x16xf32, #tpu.memory_space<vmem>>, vector<1x16x16xf32>
    %110 = vector.shape_cast %109 : vector<1x16x16xf32> to vector<16x16xf32>
    %111 = vector.shape_cast %101 : vector<16x16xf32> to vector<1x16x16xf32>
    tpu.vector_store %arg17[%108, %c0_52, %c0_53], %111 {strides = array<i32>} : memref<8x16x16xf32, #tpu.memory_space<vmem>>, vector<1x16x16xf32>,
    %c3_i32 = arith.constant 3 : i32
    %112 = arith.index_cast %c3_i32 : i32 to index
    %c0_54 = arith.constant 0 : index
    %c0_55 = arith.constant 0 : index
    %113 = vector.load %arg15[%112, %c0_54, %c0_55] : memref<8x16x64xf32, #tpu.memory_space<vmem>>, vector<1x16x64xf32>
    %114 = vector.shape_cast %113 : vector<1x16x64xf32> to vector<16x64xf32>
    %cst_56 = arith.constant dense<0.000000e+00> : vector<16x64xf32>
    %115 = tpu.matmul %103, %25, %cst_56 {dimension_numbers = #tpu.dot_dimension_numbers<[1], [0], [0], [1], [0, 0, 1, 1], [], []>} : vector<16x16xf32>, vector<16x64xf32>, vector<16x64xf32> -> vector<16x64xf32>
    %116 = arith.addf %114, %115 : vector<16x64xf32>
    %117 = arith.negf %116 : vector<16x64xf32>
    %118 = math.exp %117 : vector<16x64xf32>
    %cst_57 = arith.constant 1.000000e+00 : f32
    %119 = vector.broadcast %cst_57 : f32 to vector<16x64xf32>
    %120 = arith.addf %119, %118 : vector<16x64xf32>
    %121 = arith.divf %119, %120 : vector<16x64xf32>
    %122 = math.tanh %116 : vector<16x64xf32>
    %123 = vector.extract_strided_slice %121 {offsets = [0, 0], sizes = [16, 16], strides = [1, 1]} : vector<16x64xf32> to vector<16x16xf32>
    %124 = vector.extract_strided_slice %121 {offsets = [0, 16], sizes = [16, 16], strides = [1, 1]} : vector<16x64xf32> to vector<16x16xf32>
    %125 = vector.extract_strided_slice %122 {offsets = [0, 32], sizes = [16, 16], strides = [1, 1]} : vector<16x64xf32> to vector<16x16xf32>
    %126 = vector.extract_strided_slice %121 {offsets = [0, 48], sizes = [16, 16], strides = [1, 1]} : vector<16x64xf32> to vector<16x16xf32>
    %127 = arith.mulf %124, %101 : vector<16x16xf32>
    %128 = arith.mulf %123, %125 : vector<16x16xf32>
    %129 = arith.addf %127, %128 : vector<16x16xf32>
    %130 = math.tanh %129 : vector<16x16xf32>
    %131 = arith.mulf %126, %130 : vector<16x16xf32>
    %132 = arith.index_cast %c3_i32 : i32 to index
    %c0_58 = arith.constant 0 : index
    %c0_59 = arith.constant 0 : index
    %133 = vector.load %arg16[%132, %c0_58, %c0_59] : memref<8x16x16xf32, #tpu.memory_space<vmem>>, vector<1x16x16xf32>
    %134 = vector.shape_cast %133 : vector<1x16x16xf32> to vector<16x16xf32>
    %135 = vector.shape_cast %131 : vector<16x16xf32> to vector<1x16x16xf32>
    tpu.vector_store %arg16[%132, %c0_58, %c0_59], %135 {strides = array<i32>} : memref<8x16x16xf32, #tpu.memory_space<vmem>>, vector<1x16x16xf32>,
    %136 = arith.index_cast %c3_i32 : i32 to index
    %c0_60 = arith.constant 0 : index
    %c0_61 = arith.constant 0 : index
    %137 = vector.load %arg17[%136, %c0_60, %c0_61] : memref<8x16x16xf32, #tpu.memory_space<vmem>>, vector<1x16x16xf32>
    %138 = vector.shape_cast %137 : vector<1x16x16xf32> to vector<16x16xf32>
    %139 = vector.shape_cast %129 : vector<16x16xf32> to vector<1x16x16xf32>
    tpu.vector_store %arg17[%136, %c0_60, %c0_61], %139 {strides = array<i32>} : memref<8x16x16xf32, #tpu.memory_space<vmem>>, vector<1x16x16xf32>,
    %c4_i32 = arith.constant 4 : i32
    %140 = arith.index_cast %c4_i32 : i32 to index
    %c0_62 = arith.constant 0 : index
    %c0_63 = arith.constant 0 : index
    %141 = vector.load %arg15[%140, %c0_62, %c0_63] : memref<8x16x64xf32, #tpu.memory_space<vmem>>, vector<1x16x64xf32>
    %142 = vector.shape_cast %141 : vector<1x16x64xf32> to vector<16x64xf32>
    %cst_64 = arith.constant dense<0.000000e+00> : vector<16x64xf32>
    %143 = tpu.matmul %131, %25, %cst_64 {dimension_numbers = #tpu.dot_dimension_numbers<[1], [0], [0], [1], [0, 0, 1, 1], [], []>} : vector<16x16xf32>, vector<16x64xf32>, vector<16x64xf32> -> vector<16x64xf32>
    %144 = arith.addf %142, %143 : vector<16x64xf32>
    %145 = arith.negf %144 : vector<16x64xf32>
    %146 = math.exp %145 : vector<16x64xf32>
    %cst_65 = arith.constant 1.000000e+00 : f32
    %147 = vector.broadcast %cst_65 : f32 to vector<16x64xf32>
    %148 = arith.addf %147, %146 : vector<16x64xf32>
    %149 = arith.divf %147, %148 : vector<16x64xf32>
    %150 = math.tanh %144 : vector<16x64xf32>
    %151 = vector.extract_strided_slice %149 {offsets = [0, 0], sizes = [16, 16], strides = [1, 1]} : vector<16x64xf32> to vector<16x16xf32>
    %152 = vector.extract_strided_slice %149 {offsets = [0, 16], sizes = [16, 16], strides = [1, 1]} : vector<16x64xf32> to vector<16x16xf32>
    %153 = vector.extract_strided_slice %150 {offsets = [0, 32], sizes = [16, 16], strides = [1, 1]} : vector<16x64xf32> to vector<16x16xf32>
    %154 = vector.extract_strided_slice %149 {offsets = [0, 48], sizes = [16, 16], strides = [1, 1]} : vector<16x64xf32> to vector<16x16xf32>
    %155 = arith.mulf %152, %129 : vector<16x16xf32>
    %156 = arith.mulf %151, %153 : vector<16x16xf32>
    %157 = arith.addf %155, %156 : vector<16x16xf32>
    %158 = math.tanh %157 : vector<16x16xf32>
    %159 = arith.mulf %154, %158 : vector<16x16xf32>
    %160 = arith.index_cast %c4_i32 : i32 to index
    %c0_66 = arith.constant 0 : index
    %c0_67 = arith.constant 0 : index
    %161 = vector.load %arg16[%160, %c0_66, %c0_67] : memref<8x16x16xf32, #tpu.memory_space<vmem>>, vector<1x16x16xf32>
    %162 = vector.shape_cast %161 : vector<1x16x16xf32> to vector<16x16xf32>
    %163 = vector.shape_cast %159 : vector<16x16xf32> to vector<1x16x16xf32>
    tpu.vector_store %arg16[%160, %c0_66, %c0_67], %163 {strides = array<i32>} : memref<8x16x16xf32, #tpu.memory_space<vmem>>, vector<1x16x16xf32>,
    %164 = arith.index_cast %c4_i32 : i32 to index
    %c0_68 = arith.constant 0 : index
    %c0_69 = arith.constant 0 : index
    %165 = vector.load %arg17[%164, %c0_68, %c0_69] : memref<8x16x16xf32, #tpu.memory_space<vmem>>, vector<1x16x16xf32>
    %166 = vector.shape_cast %165 : vector<1x16x16xf32> to vector<16x16xf32>
    %167 = vector.shape_cast %157 : vector<16x16xf32> to vector<1x16x16xf32>
    tpu.vector_store %arg17[%164, %c0_68, %c0_69], %167 {strides = array<i32>} : memref<8x16x16xf32, #tpu.memory_space<vmem>>, vector<1x16x16xf32>,
    %c5_i32 = arith.constant 5 : i32
    %168 = arith.index_cast %c5_i32 : i32 to index
    %c0_70 = arith.constant 0 : index
    %c0_71 = arith.constant 0 : index
    %169 = vector.load %arg15[%168, %c0_70, %c0_71] : memref<8x16x64xf32, #tpu.memory_space<vmem>>, vector<1x16x64xf32>
    %170 = vector.shape_cast %169 : vector<1x16x64xf32> to vector<16x64xf32>
    %cst_72 = arith.constant dense<0.000000e+00> : vector<16x64xf32>
    %171 = tpu.matmul %159, %25, %cst_72 {dimension_numbers = #tpu.dot_dimension_numbers<[1], [0], [0], [1], [0, 0, 1, 1], [], []>} : vector<16x16xf32>, vector<16x64xf32>, vector<16x64xf32> -> vector<16x64xf32>
    %172 = arith.addf %170, %171 : vector<16x64xf32>
    %173 = arith.negf %172 : vector<16x64xf32>
    %174 = math.exp %173 : vector<16x64xf32>
    %cst_73 = arith.constant 1.000000e+00 : f32
    %175 = vector.broadcast %cst_73 : f32 to vector<16x64xf32>
    %176 = arith.addf %175, %174 : vector<16x64xf32>
    %177 = arith.divf %175, %176 : vector<16x64xf32>
    %178 = math.tanh %172 : vector<16x64xf32>
    %179 = vector.extract_strided_slice %177 {offsets = [0, 0], sizes = [16, 16], strides = [1, 1]} : vector<16x64xf32> to vector<16x16xf32>
    %180 = vector.extract_strided_slice %177 {offsets = [0, 16], sizes = [16, 16], strides = [1, 1]} : vector<16x64xf32> to vector<16x16xf32>
    %181 = vector.extract_strided_slice %178 {offsets = [0, 32], sizes = [16, 16], strides = [1, 1]} : vector<16x64xf32> to vector<16x16xf32>
    %182 = vector.extract_strided_slice %177 {offsets = [0, 48], sizes = [16, 16], strides = [1, 1]} : vector<16x64xf32> to vector<16x16xf32>
    %183 = arith.mulf %180, %157 : vector<16x16xf32>
    %184 = arith.mulf %179, %181 : vector<16x16xf32>
    %185 = arith.addf %183, %184 : vector<16x16xf32>
    %186 = math.tanh %185 : vector<16x16xf32>
    %187 = arith.mulf %182, %186 : vector<16x16xf32>
    %188 = arith.index_cast %c5_i32 : i32 to index
    %c0_74 = arith.constant 0 : index
    %c0_75 = arith.constant 0 : index
    %189 = vector.load %arg16[%188, %c0_74, %c0_75] : memref<8x16x16xf32, #tpu.memory_space<vmem>>, vector<1x16x16xf32>
    %190 = vector.shape_cast %189 : vector<1x16x16xf32> to vector<16x16xf32>
    %191 = vector.shape_cast %187 : vector<16x16xf32> to vector<1x16x16xf32>
    tpu.vector_store %arg16[%188, %c0_74, %c0_75], %191 {strides = array<i32>} : memref<8x16x16xf32, #tpu.memory_space<vmem>>, vector<1x16x16xf32>,
    %192 = arith.index_cast %c5_i32 : i32 to index
    %c0_76 = arith.constant 0 : index
    %c0_77 = arith.constant 0 : index
    %193 = vector.load %arg17[%192, %c0_76, %c0_77] : memref<8x16x16xf32, #tpu.memory_space<vmem>>, vector<1x16x16xf32>
    %194 = vector.shape_cast %193 : vector<1x16x16xf32> to vector<16x16xf32>
    %195 = vector.shape_cast %185 : vector<16x16xf32> to vector<1x16x16xf32>
    tpu.vector_store %arg17[%192, %c0_76, %c0_77], %195 {strides = array<i32>} : memref<8x16x16xf32, #tpu.memory_space<vmem>>, vector<1x16x16xf32>,
    %c6_i32 = arith.constant 6 : i32
    %196 = arith.index_cast %c6_i32 : i32 to index
    %c0_78 = arith.constant 0 : index
    %c0_79 = arith.constant 0 : index
    %197 = vector.load %arg15[%196, %c0_78, %c0_79] : memref<8x16x64xf32, #tpu.memory_space<vmem>>, vector<1x16x64xf32>
    %198 = vector.shape_cast %197 : vector<1x16x64xf32> to vector<16x64xf32>
    %cst_80 = arith.constant dense<0.000000e+00> : vector<16x64xf32>
    %199 = tpu.matmul %187, %25, %cst_80 {dimension_numbers = #tpu.dot_dimension_numbers<[1], [0], [0], [1], [0, 0, 1, 1], [], []>} : vector<16x16xf32>, vector<16x64xf32>, vector<16x64xf32> -> vector<16x64xf32>
    %200 = arith.addf %198, %199 : vector<16x64xf32>
    %201 = arith.negf %200 : vector<16x64xf32>
    %202 = math.exp %201 : vector<16x64xf32>
    %cst_81 = arith.constant 1.000000e+00 : f32
    %203 = vector.broadcast %cst_81 : f32 to vector<16x64xf32>
    %204 = arith.addf %203, %202 : vector<16x64xf32>
    %205 = arith.divf %203, %204 : vector<16x64xf32>
    %206 = math.tanh %200 : vector<16x64xf32>
    %207 = vector.extract_strided_slice %205 {offsets = [0, 0], sizes = [16, 16], strides = [1, 1]} : vector<16x64xf32> to vector<16x16xf32>
    %208 = vector.extract_strided_slice %205 {offsets = [0, 16], sizes = [16, 16], strides = [1, 1]} : vector<16x64xf32> to vector<16x16xf32>
    %209 = vector.extract_strided_slice %206 {offsets = [0, 32], sizes = [16, 16], strides = [1, 1]} : vector<16x64xf32> to vector<16x16xf32>
    %210 = vector.extract_strided_slice %205 {offsets = [0, 48], sizes = [16, 16], strides = [1, 1]} : vector<16x64xf32> to vector<16x16xf32>
    %211 = arith.mulf %208, %185 : vector<16x16xf32>
    %212 = arith.mulf %207, %209 : vector<16x16xf32>
    %213 = arith.addf %211, %212 : vector<16x16xf32>
    %214 = math.tanh %213 : vector<16x16xf32>
    %215 = arith.mulf %210, %214 : vector<16x16xf32>
    %216 = arith.index_cast %c6_i32 : i32 to index
    %c0_82 = arith.constant 0 : index
    %c0_83 = arith.constant 0 : index
    %217 = vector.load %arg16[%216, %c0_82, %c0_83] : memref<8x16x16xf32, #tpu.memory_space<vmem>>, vector<1x16x16xf32>
    %218 = vector.shape_cast %217 : vector<1x16x16xf32> to vector<16x16xf32>
    %219 = vector.shape_cast %215 : vector<16x16xf32> to vector<1x16x16xf32>
    tpu.vector_store %arg16[%216, %c0_82, %c0_83], %219 {strides = array<i32>} : memref<8x16x16xf32, #tpu.memory_space<vmem>>, vector<1x16x16xf32>,
    %220 = arith.index_cast %c6_i32 : i32 to index
    %c0_84 = arith.constant 0 : index
    %c0_85 = arith.constant 0 : index
    %221 = vector.load %arg17[%220, %c0_84, %c0_85] : memref<8x16x16xf32, #tpu.memory_space<vmem>>, vector<1x16x16xf32>
    %222 = vector.shape_cast %221 : vector<1x16x16xf32> to vector<16x16xf32>
    %223 = vector.shape_cast %213 : vector<16x16xf32> to vector<1x16x16xf32>
    tpu.vector_store %arg17[%220, %c0_84, %c0_85], %223 {strides = array<i32>} : memref<8x16x16xf32, #tpu.memory_space<vmem>>, vector<1x16x16xf32>,
    %c7_i32 = arith.constant 7 : i32
    %224 = arith.index_cast %c7_i32 : i32 to index
    %c0_86 = arith.constant 0 : index
    %c0_87 = arith.constant 0 : index
    %225 = vector.load %arg15[%224, %c0_86, %c0_87] : memref<8x16x64xf32, #tpu.memory_space<vmem>>, vector<1x16x64xf32>
    %226 = vector.shape_cast %225 : vector<1x16x64xf32> to vector<16x64xf32>
    %cst_88 = arith.constant dense<0.000000e+00> : vector<16x64xf32>
    %227 = tpu.matmul %215, %25, %cst_88 {dimension_numbers = #tpu.dot_dimension_numbers<[1], [0], [0], [1], [0, 0, 1, 1], [], []>} : vector<16x16xf32>, vector<16x64xf32>, vector<16x64xf32> -> vector<16x64xf32>
    %228 = arith.addf %226, %227 : vector<16x64xf32>
    %229 = arith.negf %228 : vector<16x64xf32>
    %230 = math.exp %229 : vector<16x64xf32>
    %cst_89 = arith.constant 1.000000e+00 : f32
    %231 = vector.broadcast %cst_89 : f32 to vector<16x64xf32>
    %232 = arith.addf %231, %230 : vector<16x64xf32>
    %233 = arith.divf %231, %232 : vector<16x64xf32>
    %234 = math.tanh %228 : vector<16x64xf32>
    %235 = vector.extract_strided_slice %233 {offsets = [0, 0], sizes = [16, 16], strides = [1, 1]} : vector<16x64xf32> to vector<16x16xf32>
    %236 = vector.extract_strided_slice %233 {offsets = [0, 16], sizes = [16, 16], strides = [1, 1]} : vector<16x64xf32> to vector<16x16xf32>
    %237 = vector.extract_strided_slice %234 {offsets = [0, 32], sizes = [16, 16], strides = [1, 1]} : vector<16x64xf32> to vector<16x16xf32>
    %238 = vector.extract_strided_slice %233 {offsets = [0, 48], sizes = [16, 16], strides = [1, 1]} : vector<16x64xf32> to vector<16x16xf32>
    %239 = arith.mulf %236, %213 : vector<16x16xf32>
    %240 = arith.mulf %235, %237 : vector<16x16xf32>
    %241 = arith.addf %239, %240 : vector<16x16xf32>
    %242 = math.tanh %241 : vector<16x16xf32>
    %243 = arith.mulf %238, %242 : vector<16x16xf32>
    %244 = arith.index_cast %c7_i32 : i32 to index
    %c0_90 = arith.constant 0 : index
    %c0_91 = arith.constant 0 : index
    %245 = vector.load %arg16[%244, %c0_90, %c0_91] : memref<8x16x16xf32, #tpu.memory_space<vmem>>, vector<1x16x16xf32>
    %246 = vector.shape_cast %245 : vector<1x16x16xf32> to vector<16x16xf32>
    %247 = vector.shape_cast %243 : vector<16x16xf32> to vector<1x16x16xf32>
    tpu.vector_store %arg16[%244, %c0_90, %c0_91], %247 {strides = array<i32>} : memref<8x16x16xf32, #tpu.memory_space<vmem>>, vector<1x16x16xf32>,
    %248 = arith.index_cast %c7_i32 : i32 to index
    %c0_92 = arith.constant 0 : index
    %c0_93 = arith.constant 0 : index
    %249 = vector.load %arg17[%248, %c0_92, %c0_93] : memref<8x16x16xf32, #tpu.memory_space<vmem>>, vector<1x16x16xf32>
    %250 = vector.shape_cast %249 : vector<1x16x16xf32> to vector<16x16xf32>
    %251 = vector.shape_cast %241 : vector<16x16xf32> to vector<1x16x16xf32>
    tpu.vector_store %arg17[%248, %c0_92, %c0_93], %251 {strides = array<i32>} : memref<8x16x16xf32, #tpu.memory_space<vmem>>, vector<1x16x16xf32>,
    %c8_i32 = arith.constant 8 : i32
    %c0_94 = arith.constant 0 : index
    %c0_95 = arith.constant 0 : index
    %c0_96 = arith.constant 0 : index
    %252 = vector.load %arg16[%c0_94, %c0_95, %c0_96] : memref<8x16x16xf32, #tpu.memory_space<vmem>>, vector<8x16x16xf32>
    %253 = vector.shape_cast %252 : vector<8x16x16xf32> to vector<128x16xf32>
    %c0_97 = arith.constant 0 : index
    %c0_98 = arith.constant 0 : index
    %c0_99 = arith.constant 0 : index
    %254 = vector.load %arg17[%c0_97, %c0_98, %c0_99] : memref<8x16x16xf32, #tpu.memory_space<vmem>>, vector<8x16x16xf32>
    %255 = vector.shape_cast %254 : vector<8x16x16xf32> to vector<128x16xf32>
    %c0_100 = arith.constant 0 : index
    %c0_101 = arith.constant 0 : index
    %256 = vector.load %arg12[%c0_100, %c0_101] : memref<16x7xf32, #tpu.memory_space<vmem>>, vector<16x7xf32>
    %cst_102 = arith.constant dense<0.000000e+00> : vector<128x7xf32>
    %257 = tpu.matmul %253, %256, %cst_102 {dimension_numbers = #tpu.dot_dimension_numbers<[1], [0], [0], [1], [0, 0, 1, 1], [], []>} : vector<128x16xf32>, vector<16x7xf32>, vector<128x7xf32> -> vector<128x7xf32>
    %c0_103 = arith.constant 0 : index
    %c0_104 = arith.constant 0 : index
    %258 = vector.load %arg13[%c0_103, %c0_104] : memref<1x7xf32, #tpu.memory_space<vmem>>, vector<1x7xf32>
    %259 = vector.broadcast %258 : vector<1x7xf32> to vector<128x7xf32>
    %260 = arith.addf %257, %259 : vector<128x7xf32>
    %261 = vector.extract_strided_slice %260 {offsets = [0, 0], sizes = [128, 6], strides = [1, 1]} : vector<128x7xf32> to vector<128x6xf32>
    %262 = vector.extract_strided_slice %260 {offsets = [0, 6], sizes = [128, 1], strides = [1, 1]} : vector<128x7xf32> to vector<128x1xf32>
    %cst_105 = arith.constant dense<0xFF800000> : vector<128xf32>
    %263 = vector.multi_reduction <maximumf>, %261, %cst_105 [1] : vector<128x6xf32> to vector<128xf32>
    %264 = vector.shape_cast %263 : vector<128xf32> to vector<128x1xf32>
    %265 = vector.broadcast %264 : vector<128x1xf32> to vector<128x6xf32>
    %266 = arith.subf %261, %265 : vector<128x6xf32>
    %267 = math.exp %266 : vector<128x6xf32>
    %cst_106 = arith.constant dense<0.000000e+00> : vector<128xf32>
    %268 = vector.multi_reduction <add>, %267, %cst_106 [1] : vector<128x6xf32> to vector<128xf32>
    %269 = vector.shape_cast %268 : vector<128xf32> to vector<128x1xf32>
    %270 = math.log %269 : vector<128x1xf32>
    %271 = vector.broadcast %270 : vector<128x1xf32> to vector<128x6xf32>
    %272 = arith.subf %266, %271 : vector<128x6xf32>
    %273 = tpu.reciprocal %269 : vector<128x1xf32> -> vector<128x1xf32>
    %274 = vector.broadcast %273 : vector<128x1xf32> to vector<128x6xf32>
    %275 = arith.mulf %267, %274 : vector<128x6xf32>
    %276 = arith.mulf %272, %275 : vector<128x6xf32>
    %cst_107 = arith.constant dense<0.000000e+00> : vector<128xf32>
    %277 = vector.multi_reduction <add>, %276, %cst_107 [1] : vector<128x6xf32> to vector<128xf32>
    %278 = vector.shape_cast %277 : vector<128xf32> to vector<128x1xf32>
    %cst_108 = arith.constant 0.000000e+00 : f32
    %279 = vector.broadcast %cst_108 : f32 to vector<128x1xf32>
    %280 = arith.subf %279, %278 : vector<128x1xf32>
    %cst_109 = arith.constant 0.000000e+00 : f32
    %281 = vector.broadcast %cst_109 : f32 to vector<128x82xf32>
    %282 = tpu.concatenate %253, %255, %275, %272, %280, %262, %281 in 1 : vector<128x16xf32>, vector<128x16xf32>, vector<128x6xf32>, vector<128x6xf32>, vector<128x1xf32>, vector<128x1xf32>, vector<128x82xf32> -> vector<128x128xf32>
    %283 = vector.shape_cast %282 : vector<128x128xf32> to vector<8x16x128xf32>
    %c0_110 = arith.constant 0 : index
    %c0_111 = arith.constant 0 : index
    %c0_112 = arith.constant 0 : index
    %284 = vector.load %arg14[%c0_110, %c0_111, %c0_112] : memref<8x16x128xf32, #tpu.memory_space<vmem>>, vector<8x16x128xf32>
    tpu.vector_store %arg14[%c0_110, %c0_111, %c0_112], %283 {strides = array<i32>} : memref<8x16x128xf32, #tpu.memory_space<vmem>>, vector<8x16x128xf32>,
    return
  }
  func.func @transform_0(%arg0: i32) -> (i32, i32, i32) {
    %c0_i32 = arith.constant 0 : i32
    %c0_i32_0 = arith.constant 0 : i32
    %c0_i32_1 = arith.constant 0 : i32
    return %c0_i32, %arg0, %c0_i32_0 : i32, i32, i32
  }
  func.func @transform_1(%arg0: i32) -> (i32, i32, i32) {
    %c0_i32 = arith.constant 0 : i32
    %c0_i32_0 = arith.constant 0 : i32
    %c0_i32_1 = arith.constant 0 : i32
    return %c0_i32, %arg0, %c0_i32_0 : i32, i32, i32
  }
  func.func @transform_2(%arg0: i32) -> (i32, i32) {
    %c0_i32 = arith.constant 0 : i32
    %c0_i32_0 = arith.constant 0 : i32
    return %arg0, %c0_i32 : i32, i32
  }
  func.func @transform_3(%arg0: i32) -> (i32, i32) {
    %c0_i32 = arith.constant 0 : i32
    %c0_i32_0 = arith.constant 0 : i32
    return %arg0, %c0_i32 : i32, i32
  }
  func.func @transform_4(%arg0: i32) -> (i32, i32) {
    %c0_i32 = arith.constant 0 : i32
    %c0_i32_0 = arith.constant 0 : i32
    %c0_i32_1 = arith.constant 0 : i32
    return %c0_i32, %c0_i32_0 : i32, i32
  }
  func.func @transform_5(%arg0: i32) -> (i32, i32) {
    %c0_i32 = arith.constant 0 : i32
    %c0_i32_0 = arith.constant 0 : i32
    %c0_i32_1 = arith.constant 0 : i32
    return %c0_i32, %c0_i32_0 : i32, i32
  }
  func.func @transform_6(%arg0: i32) -> (i32, i32) {
    %c0_i32 = arith.constant 0 : i32
    %c0_i32_0 = arith.constant 0 : i32
    %c0_i32_1 = arith.constant 0 : i32
    return %c0_i32, %c0_i32_0 : i32, i32
  }
  func.func @transform_7(%arg0: i32) -> (i32, i32) {
    %c0_i32 = arith.constant 0 : i32
    %c0_i32_0 = arith.constant 0 : i32
    %c0_i32_1 = arith.constant 0 : i32
    return %c0_i32, %c0_i32_0 : i32, i32
  }
  func.func @transform_8(%arg0: i32) -> (i32, i32) {
    %c0_i32 = arith.constant 0 : i32
    %c0_i32_0 = arith.constant 0 : i32
    %c0_i32_1 = arith.constant 0 : i32
    return %c0_i32, %c0_i32_0 : i32, i32
  }
  func.func @transform_9(%arg0: i32) -> (i32, i32) {
    %c0_i32 = arith.constant 0 : i32
    %c0_i32_0 = arith.constant 0 : i32
    %c0_i32_1 = arith.constant 0 : i32
    return %c0_i32, %c0_i32_0 : i32, i32
  }
  func.func @transform_10(%arg0: i32) -> (i32, i32) {
    %c0_i32 = arith.constant 0 : i32
    %c0_i32_0 = arith.constant 0 : i32
    %c0_i32_1 = arith.constant 0 : i32
    return %c0_i32, %c0_i32_0 : i32, i32
  }
  func.func @transform_11(%arg0: i32) -> (i32, i32) {
    %c0_i32 = arith.constant 0 : i32
    %c0_i32_0 = arith.constant 0 : i32
    %c0_i32_1 = arith.constant 0 : i32
    return %c0_i32, %c0_i32_0 : i32, i32
  }
  func.func @transform_12(%arg0: i32) -> (i32, i32) {
    %c0_i32 = arith.constant 0 : i32
    %c0_i32_0 = arith.constant 0 : i32
    %c0_i32_1 = arith.constant 0 : i32
    return %c0_i32, %c0_i32_0 : i32, i32
  }
  func.func @transform_13(%arg0: i32) -> (i32, i32, i32) {
    %c0_i32 = arith.constant 0 : i32
    %c0_i32_0 = arith.constant 0 : i32
    %c0_i32_1 = arith.constant 0 : i32
    return %c0_i32, %arg0, %c0_i32_0 : i32, i32, i32
  }
}

</mosaic_0001>

<llo_original>
// kernel: tpu_custom_call.1
$region0: #{tpu_custom_call.1}
  #allocation0 [shape = 'u32[]', space=smem, size = 0x4, offset = 0x4, fixed_abs, tag = 'smem constant byte address 0x4 - core index']
  #allocation1 [shape = 'u32[144,128]{1,0:T(1,128)}', space=vmem, size = 0x12000, scoped, tag = 'internal scratch']
  #allocation2 [shape = 'f32[8,16,64]{2,1,0:T(8,128)}', space=vmem, size = 0x10000, scoped, tag = 'scratch operand']
  #allocation3 [shape = 'f32[8,16,16]{2,1,0:T(8,128)}', space=vmem, size = 0x10000, scoped, tag = 'scratch operand']
  #allocation4 [shape = 'f32[8,16,16]{2,1,0:T(8,128)}', space=vmem, size = 0x10000, scoped, tag = 'scratch operand']
  %s0 = inlined_call_operand.vmem [shape: f32[8,16,128], index: 0, kind: input, shape index: {}]
  %s1 = inlined_call_operand.vmem [shape: f32[8,16,128], index: 1, kind: input, shape index: {}]
  %s2 = inlined_call_operand.hbm [shape: f32[16,16], index: 2, kind: input, shape index: {}]
  %s3 = inlined_call_operand.hbm [shape: f32[16,16], index: 3, kind: input, shape index: {}]
  %s4 = inlined_call_operand.vmem [shape: f32[128,64], index: 4, kind: input, shape index: {}]
  %s5 = inlined_call_operand.hbm [shape: f32[1,64], index: 5, kind: input, shape index: {}]
  %s6 = inlined_call_operand.vmem [shape: f32[64,32], index: 6, kind: input, shape index: {}]
  %s7 = inlined_call_operand.hbm [shape: f32[1,32], index: 7, kind: input, shape index: {}]
  %s8 = inlined_call_operand.vmem [shape: f32[32,64], index: 8, kind: input, shape index: {}]
  %s9 = inlined_call_operand.hbm [shape: f32[16,64], index: 9, kind: input, shape index: {}]
  %s10 = inlined_call_operand.vmem [shape: f32[1,64], index: 10, kind: input, shape index: {}]
  %s11 = inlined_call_operand.vmem [shape: f32[16,7], index: 11, kind: input, shape index: {}]
  %s12 = inlined_call_operand.vmem [shape: f32[1,7], index: 12, kind: input, shape index: {}]
  %s13 = inlined_call_operand.hbm [shape: f32[8,16,128], index: 13, kind: output, shape index: {}]
  %s14 = sld [smem:[#allocation0]]
  $region82: #{tpu_custom_call.1} parent=0
    _
  %s16 = ssub.s32 1, %s14
  %s17 = scalar_select 0, %s16, %s14
  $region1: #{tpu_custom_call.1} parent=0
    #allocation5 [shape = 'u8[8192]{0}', space=vmem, size = 0x2000, scoped, tag = 'input window, operand 2, single buffered']
    #allocation6 [shape = 's32[1]{0}', space=sflag, size = 0x4, scoped, tag = 'scoped memory for tpu_custom_call.1']
    #allocation7 [shape = 's32[1]{0}', space=sflag, size = 0x4, scoped, tag = 'scoped memory for tpu_custom_call.1']
    #allocation8 [shape = 'u8[8192]{0}', space=vmem, size = 0x2000, scoped, tag = 'input window, operand 3, single buffered']
    #allocation9 [shape = 's32[1]{0}', space=sflag, size = 0x4, scoped, tag = 'scoped memory for tpu_custom_call.1']
    #allocation10 [shape = 'u8[512]{0}', space=vmem, size = 0x400, scoped, tag = 'input window, operand 5, single buffered']
    #allocation11 [shape = 'u8[512]{0}', space=vmem, size = 0x400, scoped, tag = 'input window, operand 7, single buffered']
    #allocation12 [shape = 's32[1]{0}', space=sflag, size = 0x4, scoped, tag = 'scoped memory for tpu_custom_call.1']
    #allocation13 [shape = 'u8[8192]{0}', space=vmem, size = 0x2000, scoped, tag = 'input window, operand 9, single buffered']
    #allocation14 [shape = 'u8[65536]{0}', space=vmem, size = 0x10000, scoped, tag = 'output window, operand 0, single buffered']
    %18 = vsyncpa [#allocation6], 0
    %19 = vsyncpa [#allocation9], 0
    %20 = vsyncpa [#allocation12], 0
    %21 = vsyncpa [#allocation7], 0
    // Predicated region
    $region2: #{tpu_custom_call.1} parent=1 // pred_check
      _
    $region3: #{tpu_custom_call.1} parent=1 // pred_check_branch
      %23 = sbr.rel (0) target = $region5
    $region4: #{tpu_custom_call.1} parent=1 // pred_region
      _
    $region5: #{tpu_custom_call.1} parent=1 // pred_fallthru
      _
    // Predicated region
    $region6: #{tpu_custom_call.1} parent=1 // pred_check
      _
    $region7: #{tpu_custom_call.1} parent=1 // pred_check_branch
      %25 = sbr.rel (0) target = $region9
    $region8: #{tpu_custom_call.1} parent=1 // pred_region
      _
    $region9: #{tpu_custom_call.1} parent=1 // pred_fallthru
      _
    // Predicated region
    $region10: #{tpu_custom_call.1} parent=1 // pred_check
      _
    $region11: #{tpu_custom_call.1} parent=1 // pred_check_branch
      %27 = sbr.rel (0) target = $region13
    $region12: #{tpu_custom_call.1} parent=1 // pred_region
      %s29 = ssub.s32 256, 256
      %30 = vsyncadd [#allocation6], %s29
      %s31 = sshll.u32 [#allocation5], 4
      %s32 = int_to_ptr.vmem [resolvable:$true] %s31
      %37 = dma.hbm_to_vmem [thread:$0]  %s2, 256, %s32, [#allocation6], 128, 128, 8
    $region13: #{tpu_custom_call.1} parent=1 // pred_fallthru
      _
    // Predicated region
    $region14: #{tpu_custom_call.1} parent=1 // pred_check
      _
    $region15: #{tpu_custom_call.1} parent=1 // pred_check_branch
      %39 = sbr.rel (0) target = $region17
    $region16: #{tpu_custom_call.1} parent=1 // pred_region
      %s41 = ssub.s32 256, 256
      %42 = vsyncadd [#allocation9], %s41
      %s43 = sshll.u32 [#allocation8], 4
      %s44 = int_to_ptr.vmem [resolvable:$true] %s43
      %49 = dma.hbm_to_vmem [thread:$0]  %s3, 256, %s44, [#allocation9], 128, 128, 8
    $region17: #{tpu_custom_call.1} parent=1 // pred_fallthru
      _
    // Predicated region
    $region18: #{tpu_custom_call.1} parent=1 // pred_check
      _
    $region19: #{tpu_custom_call.1} parent=1 // pred_check_branch
      %51 = sbr.rel (0) target = $region21
    $region20: #{tpu_custom_call.1} parent=1 // pred_region
      _
    $region21: #{tpu_custom_call.1} parent=1 // pred_fallthru
      _
    // Predicated region
    $region22: #{tpu_custom_call.1} parent=1 // pred_check
      _
    $region23: #{tpu_custom_call.1} parent=1 // pred_check_branch
      %53 = sbr.rel (0) target = $region25
    $region24: #{tpu_custom_call.1} parent=1 // pred_region
      %s55 = ssub.s32 16, 16
      %56 = vsyncadd [#allocation9], %s55
      %s58 = sshll.u32 [#allocation10], 4
      %s59 = int_to_ptr.vmem [resolvable:$true] %s58
      %61 = dma.hbm_to_vmem [thread:$0]  %s5, 16, %s59, [#allocation9]
    $region25: #{tpu_custom_call.1} parent=1 // pred_fallthru
      _
    // Predicated region
    $region26: #{tpu_custom_call.1} parent=1 // pred_check
      _
    $region27: #{tpu_custom_call.1} parent=1 // pred_check_branch
      %63 = sbr.rel (0) target = $region29
    $region28: #{tpu_custom_call.1} parent=1 // pred_region
      _
    $region29: #{tpu_custom_call.1} parent=1 // pred_fallthru
      _
    // Predicated region
    $region30: #{tpu_custom_call.1} parent=1 // pred_check
      _
    $region31: #{tpu_custom_call.1} parent=1 // pred_check_branch
      %65 = sbr.rel (0) target = $region33
    $region32: #{tpu_custom_call.1} parent=1 // pred_region
      %s67 = ssub.s32 16, 16
      %68 = vsyncadd [#allocation12], %s67
      %s70 = sshll.u32 [#allocation11], 4
      %s71 = int_to_ptr.vmem [resolvable:$true] %s70
      %73 = dma.hbm_to_vmem [thread:$0]  %s7, 16, %s71, [#allocation12]
    $region33: #{tpu_custom_call.1} parent=1 // pred_fallthru
      _
    // Predicated region
    $region34: #{tpu_custom_call.1} parent=1 // pred_check
      _
    $region35: #{tpu_custom_call.1} parent=1 // pred_check_branch
      %75 = sbr.rel (0) target = $region37
    $region36: #{tpu_custom_call.1} parent=1 // pred_region
      _
    $region37: #{tpu_custom_call.1} parent=1 // pred_fallthru
      _
    // Predicated region
    $region38: #{tpu_custom_call.1} parent=1 // pred_check
      _
    $region39: #{tpu_custom_call.1} parent=1 // pred_check_branch
      %77 = sbr.rel (0) target = $region41
    $region40: #{tpu_custom_call.1} parent=1 // pred_region
      %s79 = ssub.s32 256, 256
      %80 = vsyncadd [#allocation12], %s79
      %s81 = sshll.u32 [#allocation13], 4
      %s82 = int_to_ptr.vmem [resolvable:$true] %s81
      %87 = dma.hbm_to_vmem [thread:$0]  %s9, 256, %s82, [#allocation12], 128, 128, 8
    $region41: #{tpu_custom_call.1} parent=1 // pred_fallthru
      _
    // Predicated region
    $region42: #{tpu_custom_call.1} parent=1 // pred_check
      _
    $region43: #{tpu_custom_call.1} parent=1 // pred_check_branch
      %89 = sbr.rel (0) target = $region45
    $region44: #{tpu_custom_call.1} parent=1 // pred_region
      _
    $region45: #{tpu_custom_call.1} parent=1 // pred_fallthru
      _
    // Predicated region
    $region46: #{tpu_custom_call.1} parent=1 // pred_check
      _
    $region47: #{tpu_custom_call.1} parent=1 // pred_check_branch
      %91 = sbr.rel (0) target = $region49
    $region48: #{tpu_custom_call.1} parent=1 // pred_region
      _
    $region49: #{tpu_custom_call.1} parent=1 // pred_fallthru
      _
    // Predicated region
    $region50: #{tpu_custom_call.1} parent=1 // pred_check
      _
    $region51: #{tpu_custom_call.1} parent=1 // pred_check_branch
      %93 = sbr.rel (0) target = $region53
    $region52: #{tpu_custom_call.1} parent=1 // pred_region
      _
    $region53: #{tpu_custom_call.1} parent=1 // pred_fallthru
      _
    // Predicated region
    $region54: #{tpu_custom_call.1} parent=1 // pred_check
      _
    $region55: #{tpu_custom_call.1} parent=1 // pred_check_branch
      %95 = sbr.rel (0) target = $region57
    $region56: #{tpu_custom_call.1} parent=1 // pred_region
      %96 = dma.done [#allocation6], 256
    $region57: #{tpu_custom_call.1} parent=1 // pred_fallthru
      _
    // Predicated region
    $region58: #{tpu_custom_call.1} parent=1 // pred_check
      _
    $region59: #{tpu_custom_call.1} parent=1 // pred_check_branch
      %98 = sbr.rel (0) target = $region61
    $region60: #{tpu_custom_call.1} parent=1 // pred_region
      %99 = dma.done [#allocation9], 256
    $region61: #{tpu_custom_call.1} parent=1 // pred_fallthru
      _
    // Predicated region
    $region62: #{tpu_custom_call.1} parent=1 // pred_check
      _
    $region63: #{tpu_custom_call.1} parent=1 // pred_check_branch
      %101 = sbr.rel (0) target = $region65
    $region64: #{tpu_custom_call.1} parent=1 // pred_region
      %102 = dma.done [#allocation9], 16
    $region65: #{tpu_custom_call.1} parent=1 // pred_fallthru
      _
    // Predicated region
    $region66: #{tpu_custom_call.1} parent=1 // pred_check
      _
    $region67: #{tpu_custom_call.1} parent=1 // pred_check_branch
      %104 = sbr.rel (0) target = $region69
    $region68: #{tpu_custom_call.1} parent=1 // pred_region
      %105 = dma.done [#allocation12], 16
    $region69: #{tpu_custom_call.1} parent=1 // pred_fallthru
      _
    // Predicated region
    $region70: #{tpu_custom_call.1} parent=1 // pred_check
      _
    $region71: #{tpu_custom_call.1} parent=1 // pred_check_branch
      %107 = sbr.rel (0) target = $region73
    $region72: #{tpu_custom_call.1} parent=1 // pred_region
      %108 = dma.done [#allocation12], 256
    $region73: #{tpu_custom_call.1} parent=1 // pred_fallthru
      _
    %v109 = vld [vmem:[%s0] sm:$0xff]
    %v110 = vld [vmem:[%s0 + $0x8] sm:$0xff]
    %v111 = vld [vmem:[%s0 + $0x10] sm:$0xff]
    %v112 = vld [vmem:[%s0 + $0x18] sm:$0xff]
    %v113 = vld [vmem:[%s0 + $0x20] sm:$0xff]
    %v114 = vld [vmem:[%s0 + $0x28] sm:$0xff]
    %v115 = vld [vmem:[%s0 + $0x30] sm:$0xff]
    %v116 = vld [vmem:[%s0 + $0x38] sm:$0xff]
    %v117 = vld [vmem:[%s0 + $0x40] sm:$0xff]
    %v118 = vld [vmem:[%s0 + $0x48] sm:$0xff]
    %v119 = vld [vmem:[%s0 + $0x50] sm:$0xff]
    %v120 = vld [vmem:[%s0 + $0x58] sm:$0xff]
    %v121 = vld [vmem:[%s0 + $0x60] sm:$0xff]
    %v122 = vld [vmem:[%s0 + $0x68] sm:$0xff]
    %v123 = vld [vmem:[%s0 + $0x70] sm:$0xff]
    %v124 = vld [vmem:[%s0 + $0x78] sm:$0xff]
    %v125 = vld [vmem:[%s1] sm:$0xff]
    %v126 = vld [vmem:[%s1 + $0x8] sm:$0xff]
    %v127 = vld [vmem:[%s1 + $0x10] sm:$0xff]
    %v128 = vld [vmem:[%s1 + $0x18] sm:$0xff]
    %v129 = vld [vmem:[%s1 + $0x20] sm:$0xff]
    %v130 = vld [vmem:[%s1 + $0x28] sm:$0xff]
    %v131 = vld [vmem:[%s1 + $0x30] sm:$0xff]
    %v132 = vld [vmem:[%s1 + $0x38] sm:$0xff]
    %v133 = vld [vmem:[%s1 + $0x40] sm:$0xff]
    %v134 = vld [vmem:[%s1 + $0x48] sm:$0xff]
    %v135 = vld [vmem:[%s1 + $0x50] sm:$0xff]
    %v136 = vld [vmem:[%s1 + $0x58] sm:$0xff]
    %v137 = vld [vmem:[%s1 + $0x60] sm:$0xff]
    %v138 = vld [vmem:[%s1 + $0x68] sm:$0xff]
    %v139 = vld [vmem:[%s1 + $0x70] sm:$0xff]
    %v140 = vld [vmem:[%s1 + $0x78] sm:$0xff]
    %v141 = vsub.f32 %v109, %v125
    %v142 = vsub.f32 %v110, %v126
    %v143 = vsub.f32 %v111, %v127
    %v144 = vsub.f32 %v112, %v128
    %v145 = vsub.f32 %v113, %v129
    %v146 = vsub.f32 %v114, %v130
    %v147 = vsub.f32 %v115, %v131
    %v148 = vsub.f32 %v116, %v132
    %v149 = vsub.f32 %v117, %v133
    %v150 = vsub.f32 %v118, %v134
    %v151 = vsub.f32 %v119, %v135
    %v152 = vsub.f32 %v120, %v136
    %v153 = vsub.f32 %v121, %v137
    %v154 = vsub.f32 %v122, %v138
    %v155 = vsub.f32 %v123, %v139
    %v156 = vsub.f32 %v124, %v140
    %v157 = vld [vmem:[%s4] sm:$0xff]
    %v158 = vld [vmem:[%s4 + $0x8] sm:$0xff]
    %v159 = vld [vmem:[%s4 + $0x10] sm:$0xff]
    %v160 = vld [vmem:[%s4 + $0x18] sm:$0xff]
    %v161 = vld [vmem:[%s4 + $0x20] sm:$0xff]
    %v162 = vld [vmem:[%s4 + $0x28] sm:$0xff]
    %v163 = vld [vmem:[%s4 + $0x30] sm:$0xff]
    %v164 = vld [vmem:[%s4 + $0x38] sm:$0xff]
    %v165 = vld [vmem:[%s4 + $0x40] sm:$0xff]
    %v166 = vld [vmem:[%s4 + $0x48] sm:$0xff]
    %v167 = vld [vmem:[%s4 + $0x50] sm:$0xff]
    %v168 = vld [vmem:[%s4 + $0x58] sm:$0xff]
    %v169 = vld [vmem:[%s4 + $0x60] sm:$0xff]
    %v170 = vld [vmem:[%s4 + $0x68] sm:$0xff]
    %v171 = vld [vmem:[%s4 + $0x70] sm:$0xff]
    %v172 = vld [vmem:[%s4 + $0x78] sm:$0xff]
    %v173 = vld [vmem:[#allocation10] sm:$0x1]
    %v175 = vlaneseq
    %v176 = vshrl.u32 %v175, 7
    %v177 = vsub.s32 0, %v176
    %v178 = vrot.slane %v173, %v177
    %180 = vmatprep.subr.mxu0 0.0
    %181 = vmatpush1.msra.mxu0 %v172
    %182 = vmatprep.subr.mxu0 0.0
    %183 = vmatpush1.msra.mxu0 %v171
    %184 = vmatprep.subr.mxu0 0.0
    %185 = vmatpush1.msra.mxu0 %v170
    %186 = vmatprep.subr.mxu0 0.0
    %187 = vmatpush1.msra.mxu0 %v169
    %188 = vmatprep.subr.mxu0 0.0
    %189 = vmatpush1.msra.mxu0 %v168
    %190 = vmatprep.subr.mxu0 0.0
    %191 = vmatpush1.msra.mxu0 %v167
    %192 = vmatprep.subr.mxu0 0.0
    %193 = vmatpush1.msra.mxu0 %v166
    %194 = vmatprep.subr.mxu0 0.0
    %195 = vmatpush1.msra.mxu0 %v165
    %196 = vmatprep.subr.mxu0 0.0
    %197 = vmatpush1.msra.mxu0 %v164
    %198 = vmatprep.subr.mxu0 0.0
    %199 = vmatpush1.msra.mxu0 %v163
    %200 = vmatprep.subr.mxu0 0.0
    %201 = vmatpush1.msra.mxu0 %v162
    %202 = vmatprep.subr.mxu0 0.0
    %203 = vmatpush1.msra.mxu0 %v161
    %204 = vmatprep.subr.mxu0 0.0
    %205 = vmatpush1.msra.mxu0 %v160
    %206 = vmatprep.subr.mxu0 0.0
    %207 = vmatpush1.msra.mxu0 %v159
    %208 = vmatprep.subr.mxu0 0.0
    %209 = vmatpush1.msra.mxu0 %v158
    %210 = vmatprep.subr.mxu0 0.0
    %211 = vmatpush1.msra.mxu0 %v157
    %212 = vmatprep.subr.mxu0 0.0
    %213 = vmatpush2.msra.mxu0 0.0
    %214 = vmatprep.subr.mxu0 0.0
    %215 = vmatpush2.msra.mxu0 0.0
    %216 = vmatprep.subr.mxu0 0.0
    %217 = vmatpush2.msra.mxu0 0.0
    %218 = vmatprep.subr.mxu0 0.0
    %219 = vmatpush2.msra.mxu0 0.0
    %220 = vmatprep.subr.mxu0 0.0
    %221 = vmatpush2.msra.mxu0 0.0
    %222 = vmatprep.subr.mxu0 0.0
    %223 = vmatpush2.msra.mxu0 0.0
    %224 = vmatprep.subr.mxu0 0.0
    %225 = vmatpush2.msra.mxu0 0.0
    %226 = vmatprep.subr.mxu0 0.0
    %227 = vmatpush2.msra.mxu0 0.0
    %228 = vmatprep.subr.mxu0 0.0
    %229 = vmatpush2.msra.mxu0 0.0
    %230 = vmatprep.subr.mxu0 0.0
    %231 = vmatpush2.msra.mxu0 0.0
    %232 = vmatprep.subr.mxu0 0.0
    %233 = vmatpush2.msra.mxu0 0.0
    %234 = vmatprep.subr.mxu0 0.0
    %235 = vmatpush2.msra.mxu0 0.0
    %236 = vmatprep.subr.mxu0 0.0
    %237 = vmatpush2.msra.mxu0 0.0
    %238 = vmatprep.subr.mxu0 0.0
    %239 = vmatpush2.msra.mxu0 0.0
    %240 = vmatprep.subr.mxu0 0.0
    %241 = vmatpush2.msra.mxu0 0.0
    %242 = vmatprep.subr.mxu0 0.0
    %243 = vmatpush2.msra.mxu0 0.0
    %244 = vmatprep.mubr.f32.mxu0 0.0
    %245 = vmatmul.mubr.f32.gmra.mxu0 %v141
    %v246 = vpop.f32.mrf.mxu0
    %v247 = vadd.f32 %v178, %v246
    %v248 = vpop.f32.mrf.mxu0
    %249 = vmatprep.mubr.f32.mxu0 0.0
    %250 = vmatmul.mubr.f32.gmra.mxu0 %v142
    %v251 = vpop.f32.mrf.mxu0
    %v252 = vadd.f32 %v178, %v251
    %v253 = vpop.f32.mrf.mxu0
    %254 = vmatprep.mubr.f32.mxu0 0.0
    %255 = vmatmul.mubr.f32.gmra.mxu0 %v143
    %v256 = vpop.f32.mrf.mxu0
    %v257 = vadd.f32 %v178, %v256
    %v258 = vpop.f32.mrf.mxu0
    %259 = vmatprep.mubr.f32.mxu0 0.0
    %260 = vmatmul.mubr.f32.gmra.mxu0 %v144
    %v261 = vpop.f32.mrf.mxu0
    %v262 = vadd.f32 %v178, %v261
    %v263 = vpop.f32.mrf.mxu0
    %264 = vmatprep.mubr.f32.mxu0 0.0
    %265 = vmatmul.mubr.f32.gmra.mxu0 %v145
    %v266 = vpop.f32.mrf.mxu0
    %v267 = vadd.f32 %v178, %v266
    %v268 = vpop.f32.mrf.mxu0
    %269 = vmatprep.mubr.f32.mxu0 0.0
    %270 = vmatmul.mubr.f32.gmra.mxu0 %v146
    %v271 = vpop.f32.mrf.mxu0
    %v272 = vadd.f32 %v178, %v271
    %v273 = vpop.f32.mrf.mxu0
    %274 = vmatprep.mubr.f32.mxu0 0.0
    %275 = vmatmul.mubr.f32.gmra.mxu0 %v147
    %v276 = vpop.f32.mrf.mxu0
    %v277 = vadd.f32 %v178, %v276
    %v278 = vpop.f32.mrf.mxu0
    %279 = vmatprep.mubr.f32.mxu0 0.0
    %280 = vmatmul.mubr.f32.gmra.mxu0 %v148
    %v281 = vpop.f32.mrf.mxu0
    %v282 = vadd.f32 %v178, %v281
    %v283 = vpop.f32.mrf.mxu0
    %284 = vmatprep.mubr.f32.mxu0 0.0
    %285 = vmatmul.mubr.f32.gmra.mxu0 %v149
    %v286 = vpop.f32.mrf.mxu0
    %v287 = vadd.f32 %v178, %v286
    %v288 = vpop.f32.mrf.mxu0
    %289 = vmatprep.mubr.f32.mxu0 0.0
    %290 = vmatmul.mubr.f32.gmra.mxu0 %v150
    %v291 = vpop.f32.mrf.mxu0
    %v292 = vadd.f32 %v178, %v291
    %v293 = vpop.f32.mrf.mxu0
    %294 = vmatprep.mubr.f32.mxu0 0.0
    %295 = vmatmul.mubr.f32.gmra.mxu0 %v151
    %v296 = vpop.f32.mrf.mxu0
    %v297 = vadd.f32 %v178, %v296
    %v298 = vpop.f32.mrf.mxu0
    %299 = vmatprep.mubr.f32.mxu0 0.0
    %300 = vmatmul.mubr.f32.gmra.mxu0 %v152
    %v301 = vpop.f32.mrf.mxu0
    %v302 = vadd.f32 %v178, %v301
    %v303 = vpop.f32.mrf.mxu0
    %304 = vmatprep.mubr.f32.mxu0 0.0
    %305 = vmatmul.mubr.f32.gmra.mxu0 %v153
    %v306 = vpop.f32.mrf.mxu0
    %v307 = vadd.f32 %v178, %v306
    %v308 = vpop.f32.mrf.mxu0
    %309 = vmatprep.mubr.f32.mxu0 0.0
    %310 = vmatmul.mubr.f32.gmra.mxu0 %v154
    %v311 = vpop.f32.mrf.mxu0
    %v312 = vadd.f32 %v178, %v311
    %v313 = vpop.f32.mrf.mxu0
    %314 = vmatprep.mubr.f32.mxu0 0.0
    %315 = vmatmul.mubr.f32.gmra.mxu0 %v155
    %v316 = vpop.f32.mrf.mxu0
    %v317 = vadd.f32 %v178, %v316
    %v318 = vpop.f32.mrf.mxu0
    %319 = vmatprep.mubr.f32.mxu0 0.0
    %320 = vmatmul.mubr.f32.gmra.mxu0 %v156
    %v321 = vpop.f32.mrf.mxu0
    %v322 = vadd.f32 %v178, %v321
    %v323 = vpop.f32.mrf.mxu0
    %324 = vdwg.mxu0
    %v325 = vmax.f32 %v247, 0.0
    %v326 = vmax.f32 %v252, 0.0
    %v327 = vmax.f32 %v257, 0.0
    %v328 = vmax.f32 %v262, 0.0
    %v329 = vmax.f32 %v267, 0.0
    %v330 = vmax.f32 %v272, 0.0
    %v331 = vmax.f32 %v277, 0.0
    %v332 = vmax.f32 %v282, 0.0
    %v333 = vmax.f32 %v287, 0.0
    %v334 = vmax.f32 %v292, 0.0
    %v335 = vmax.f32 %v297, 0.0
    %v336 = vmax.f32 %v302, 0.0
    %v337 = vmax.f32 %v307, 0.0
    %v338 = vmax.f32 %v312, 0.0
    %v339 = vmax.f32 %v317, 0.0
    %v340 = vmax.f32 %v322, 0.0
    %v341 = vld [vmem:[%s6] sm:$0xff]
    %v342 = vld [vmem:[%s6 + $0x8] sm:$0xff]
    %v343 = vld [vmem:[%s6 + $0x10] sm:$0xff]
    %v344 = vld [vmem:[%s6 + $0x18] sm:$0xff]
    %v345 = vld [vmem:[%s6 + $0x20] sm:$0xff]
    %v346 = vld [vmem:[%s6 + $0x28] sm:$0xff]
    %v347 = vld [vmem:[%s6 + $0x30] sm:$0xff]
    %v348 = vld [vmem:[%s6 + $0x38] sm:$0xff]
    %v349 = vld [vmem:[#allocation11] sm:$0x1]
    %v351 = vlaneseq
    %v352 = vshrl.u32 %v351, 7
    %v353 = vsub.s32 0, %v352
    %v354 = vrot.slane %v349, %v353
    %vm356 = vcmask 523264
    %v358 = vsel %vm356, %v325, 0
    %v361 = vsel %vm356, %v326, 0
    %v364 = vsel %vm356, %v327, 0
    %v367 = vsel %vm356, %v328, 0
    %v370 = vsel %vm356, %v329, 0
    %v373 = vsel %vm356, %v330, 0
    %v376 = vsel %vm356, %v331, 0
    %v379 = vsel %vm356, %v332, 0
    %v382 = vsel %vm356, %v333, 0
    %v385 = vsel %vm356, %v334, 0
    %v388 = vsel %vm356, %v335, 0
    %v391 = vsel %vm356, %v336, 0
    %v394 = vsel %vm356, %v337, 0
    %v397 = vsel %vm356, %v338, 0
    %v400 = vsel %vm356, %v339, 0
    %v403 = vsel %vm356, %v340, 0
    %405 = vmatprep.subr.mxu0 0.0
    %406 = vmatpush1.msra.mxu0 0.0
    %407 = vmatprep.subr.mxu0 0.0
    %408 = vmatpush1.msra.mxu0 0.0
    %409 = vmatprep.subr.mxu0 0.0
    %410 = vmatpush1.msra.mxu0 0.0
    %411 = vmatprep.subr.mxu0 0.0
    %412 = vmatpush1.msra.mxu0 0.0
    %413 = vmatprep.subr.mxu0 0.0
    %414 = vmatpush1.msra.mxu0 0.0
    %415 = vmatprep.subr.mxu0 0.0
    %416 = vmatpush1.msra.mxu0 0.0
    %417 = vmatprep.subr.mxu0 0.0
    %418 = vmatpush1.msra.mxu0 0.0
    %419 = vmatprep.subr.mxu0 0.0
    %420 = vmatpush1.msra.mxu0 0.0
    %421 = vmatprep.subr.mxu0 0.0
    %422 = vmatpush1.msra.mxu0 %v348
    %423 = vmatprep.subr.mxu0 0.0
    %424 = vmatpush1.msra.mxu0 %v347
    %425 = vmatprep.subr.mxu0 0.0
    %426 = vmatpush1.msra.mxu0 %v346
    %427 = vmatprep.subr.mxu0 0.0
    %428 = vmatpush1.msra.mxu0 %v345
    %429 = vmatprep.subr.mxu0 0.0
    %430 = vmatpush1.msra.mxu0 %v344
    %431 = vmatprep.subr.mxu0 0.0
    %432 = vmatpush1.msra.mxu0 %v343
    %433 = vmatprep.subr.mxu0 0.0
    %434 = vmatpush1.msra.mxu0 %v342
    %435 = vmatprep.subr.mxu0 0.0
    %436 = vmatpush1.msra.mxu0 %v341
    %437 = vmatprep.subr.mxu0 0.0
    %438 = vmatpush2.msra.mxu0 0.0
    %439 = vmatprep.subr.mxu0 0.0
    %440 = vmatpush2.msra.mxu0 0.0
    %441 = vmatprep.subr.mxu0 0.0
    %442 = vmatpush2.msra.mxu0 0.0
    %443 = vmatprep.subr.mxu0 0.0
    %444 = vmatpush2.msra.mxu0 0.0
    %445 = vmatprep.subr.mxu0 0.0
    %446 = vmatpush2.msra.mxu0 0.0
    %447 = vmatprep.subr.mxu0 0.0
    %448 = vmatpush2.msra.mxu0 0.0
    %449 = vmatprep.subr.mxu0 0.0
    %450 = vmatpush2.msra.mxu0 0.0
    %451 = vmatprep.subr.mxu0 0.0
    %452 = vmatpush2.msra.mxu0 0.0
    %453 = vmatprep.subr.mxu0 0.0
    %454 = vmatpush2.msra.mxu0 0.0
    %455 = vmatprep.subr.mxu0 0.0
    %456 = vmatpush2.msra.mxu0 0.0
    %457 = vmatprep.subr.mxu0 0.0
    %458 = vmatpush2.msra.mxu0 0.0
    %459 = vmatprep.subr.mxu0 0.0
    %460 = vmatpush2.msra.mxu0 0.0
    %461 = vmatprep.subr.mxu0 0.0
    %462 = vmatpush2.msra.mxu0 0.0
    %463 = vmatprep.subr.mxu0 0.0
    %464 = vmatpush2.msra.mxu0 0.0
    %465 = vmatprep.subr.mxu0 0.0
    %466 = vmatpush2.msra.mxu0 0.0
    %467 = vmatprep.subr.mxu0 0.0
    %468 = vmatpush2.msra.mxu0 0.0
    %469 = vmatprep.mubr.f32.mxu0 0.0
    %470 = vmatmul.mubr.f32.gmra.mxu0 %v358
    %v471 = vpop.f32.mrf.mxu0
    %v472 = vadd.f32 %v354, %v471
    %v473 = vpop.f32.mrf.mxu0
    %474 = vmatprep.mubr.f32.mxu0 0.0
    %475 = vmatmul.mubr.f32.gmra.mxu0 %v361
    %v476 = vpop.f32.mrf.mxu0
    %v477 = vadd.f32 %v354, %v476
    %v478 = vpop.f32.mrf.mxu0
    %479 = vmatprep.mubr.f32.mxu0 0.0
    %480 = vmatmul.mubr.f32.gmra.mxu0 %v364
    %v481 = vpop.f32.mrf.mxu0
    %v482 = vadd.f32 %v354, %v481
    %v483 = vpop.f32.mrf.mxu0
    %484 = vmatprep.mubr.f32.mxu0 0.0
    %485 = vmatmul.mubr.f32.gmra.mxu0 %v367
    %v486 = vpop.f32.mrf.mxu0
    %v487 = vadd.f32 %v354, %v486
    %v488 = vpop.f32.mrf.mxu0
    %489 = vmatprep.mubr.f32.mxu0 0.0
    %490 = vmatmul.mubr.f32.gmra.mxu0 %v370
    %v491 = vpop.f32.mrf.mxu0
    %v492 = vadd.f32 %v354, %v491
    %v493 = vpop.f32.mrf.mxu0
    %494 = vmatprep.mubr.f32.mxu0 0.0
    %495 = vmatmul.mubr.f32.gmra.mxu0 %v373
    %v496 = vpop.f32.mrf.mxu0
    %v497 = vadd.f32 %v354, %v496
    %v498 = vpop.f32.mrf.mxu0
    %499 = vmatprep.mubr.f32.mxu0 0.0
    %500 = vmatmul.mubr.f32.gmra.mxu0 %v376
    %v501 = vpop.f32.mrf.mxu0
    %v502 = vadd.f32 %v354, %v501
    %v503 = vpop.f32.mrf.mxu0
    %504 = vmatprep.mubr.f32.mxu0 0.0
    %505 = vmatmul.mubr.f32.gmra.mxu0 %v379
    %v506 = vpop.f32.mrf.mxu0
    %v507 = vadd.f32 %v354, %v506
    %v508 = vpop.f32.mrf.mxu0
    %509 = vmatprep.mubr.f32.mxu0 0.0
    %510 = vmatmul.mubr.f32.gmra.mxu0 %v382
    %v511 = vpop.f32.mrf.mxu0
    %v512 = vadd.f32 %v354, %v511
    %v513 = vpop.f32.mrf.mxu0
    %514 = vmatprep.mubr.f32.mxu0 0.0
    %515 = vmatmul.mubr.f32.gmra.mxu0 %v385
    %v516 = vpop.f32.mrf.mxu0
    %v517 = vadd.f32 %v354, %v516
    %v518 = vpop.f32.mrf.mxu0
    %519 = vmatprep.mubr.f32.mxu0 0.0
    %520 = vmatmul.mubr.f32.gmra.mxu0 %v388
    %v521 = vpop.f32.mrf.mxu0
    %v522 = vadd.f32 %v354, %v521
    %v523 = vpop.f32.mrf.mxu0
    %524 = vmatprep.mubr.f32.mxu0 0.0
    %525 = vmatmul.mubr.f32.gmra.mxu0 %v391
    %v526 = vpop.f32.mrf.mxu0
    %v527 = vadd.f32 %v354, %v526
    %v528 = vpop.f32.mrf.mxu0
    %529 = vmatprep.mubr.f32.mxu0 0.0
    %530 = vmatmul.mubr.f32.gmra.mxu0 %v394
    %v531 = vpop.f32.mrf.mxu0
    %v532 = vadd.f32 %v354, %v531
    %v533 = vpop.f32.mrf.mxu0
    %534 = vmatprep.mubr.f32.mxu0 0.0
    %535 = vmatmul.mubr.f32.gmra.mxu0 %v397
    %v536 = vpop.f32.mrf.mxu0
    %v537 = vadd.f32 %v354, %v536
    %v538 = vpop.f32.mrf.mxu0
    %539 = vmatprep.mubr.f32.mxu0 0.0
    %540 = vmatmul.mubr.f32.gmra.mxu0 %v400
    %v541 = vpop.f32.mrf.mxu0
    %v542 = vadd.f32 %v354, %v541
    %v543 = vpop.f32.mrf.mxu0
    %544 = vmatprep.mubr.f32.mxu0 0.0
    %545 = vmatmul.mubr.f32.gmra.mxu0 %v403
    %v546 = vpop.f32.mrf.mxu0
    %v547 = vadd.f32 %v354, %v546
    %v548 = vpop.f32.mrf.mxu0
    %549 = vdwg.mxu0
    %v550 = vmax.f32 %v472, 0.0
    %v551 = vmax.f32 %v477, 0.0
    %v552 = vmax.f32 %v482, 0.0
    %v553 = vmax.f32 %v487, 0.0
    %v554 = vmax.f32 %v492, 0.0
    %v555 = vmax.f32 %v497, 0.0
    %v556 = vmax.f32 %v502, 0.0
    %v557 = vmax.f32 %v507, 0.0
    %v558 = vmax.f32 %v512, 0.0
    %v559 = vmax.f32 %v517, 0.0
    %v560 = vmax.f32 %v522, 0.0
    %v561 = vmax.f32 %v527, 0.0
    %v562 = vmax.f32 %v532, 0.0
    %v563 = vmax.f32 %v537, 0.0
    %v564 = vmax.f32 %v542, 0.0
    %v565 = vmax.f32 %v547, 0.0
    %v566 = vld [vmem:[%s8] sm:$0xff]
    %v567 = vld [vmem:[%s8 + $0x8] sm:$0xff]
    %v568 = vld [vmem:[%s8 + $0x10] sm:$0xff]
    %v569 = vld [vmem:[%s8 + $0x18] sm:$0xff]
    %v570 = vld [vmem:[%s10] sm:$0x1]
    %v572 = vlaneseq
    %v573 = vshrl.u32 %v572, 7
    %v574 = vsub.s32 0, %v573
    %v575 = vrot.slane %v570, %v574
    %vm577 = vcmask 261120
    %v579 = vsel %vm577, %v550, 0
    %v582 = vsel %vm577, %v551, 0
    %v585 = vsel %vm577, %v552, 0
    %v588 = vsel %vm577, %v553, 0
    %v591 = vsel %vm577, %v554, 0
    %v594 = vsel %vm577, %v555, 0
    %v597 = vsel %vm577, %v556, 0
    %v600 = vsel %vm577, %v557, 0
    %v603 = vsel %vm577, %v558, 0
    %v606 = vsel %vm577, %v559, 0
    %v609 = vsel %vm577, %v560, 0
    %v612 = vsel %vm577, %v561, 0
    %v615 = vsel %vm577, %v562, 0
    %v618 = vsel %vm577, %v563, 0
    %v621 = vsel %vm577, %v564, 0
    %v624 = vsel %vm577, %v565, 0
    %626 = vmatprep.subr.mxu0 0.0
    %627 = vmatpush1.msra.mxu0 0.0
    %628 = vmatprep.subr.mxu0 0.0
    %629 = vmatpush1.msra.mxu0 0.0
    %630 = vmatprep.subr.mxu0 0.0
    %631 = vmatpush1.msra.mxu0 0.0
    %632 = vmatprep.subr.mxu0 0.0
    %633 = vmatpush1.msra.mxu0 0.0
    %634 = vmatprep.subr.mxu0 0.0
    %635 = vmatpush1.msra.mxu0 0.0
    %636 = vmatprep.subr.mxu0 0.0
    %637 = vmatpush1.msra.mxu0 0.0
    %638 = vmatprep.subr.mxu0 0.0
    %639 = vmatpush1.msra.mxu0 0.0
    %640 = vmatprep.subr.mxu0 0.0
    %641 = vmatpush1.msra.mxu0 0.0
    %642 = vmatprep.subr.mxu0 0.0
    %643 = vmatpush1.msra.mxu0 0.0
    %644 = vmatprep.subr.mxu0 0.0
    %645 = vmatpush1.msra.mxu0 0.0
    %646 = vmatprep.subr.mxu0 0.0
    %647 = vmatpush1.msra.mxu0 0.0
    %648 = vmatprep.subr.mxu0 0.0
    %649 = vmatpush1.msra.mxu0 0.0
    %650 = vmatprep.subr.mxu0 0.0
    %651 = vmatpush1.msra.mxu0 %v569
    %652 = vmatprep.subr.mxu0 0.0
    %653 = vmatpush1.msra.mxu0 %v568
    %654 = vmatprep.subr.mxu0 0.0
    %655 = vmatpush1.msra.mxu0 %v567
    %656 = vmatprep.subr.mxu0 0.0
    %657 = vmatpush1.msra.mxu0 %v566
    %658 = vmatprep.subr.mxu0 0.0
    %659 = vmatpush2.msra.mxu0 0.0
    %660 = vmatprep.subr.mxu0 0.0
    %661 = vmatpush2.msra.mxu0 0.0
    %662 = vmatprep.subr.mxu0 0.0
    %663 = vmatpush2.msra.mxu0 0.0
    %664 = vmatprep.subr.mxu0 0.0
    %665 = vmatpush2.msra.mxu0 0.0
    %666 = vmatprep.subr.mxu0 0.0
    %667 = vmatpush2.msra.mxu0 0.0
    %668 = vmatprep.subr.mxu0 0.0
    %669 = vmatpush2.msra.mxu0 0.0
    %670 = vmatprep.subr.mxu0 0.0
    %671 = vmatpush2.msra.mxu0 0.0
    %672 = vmatprep.subr.mxu0 0.0
    %673 = vmatpush2.msra.mxu0 0.0
    %674 = vmatprep.subr.mxu0 0.0
    %675 = vmatpush2.msra.mxu0 0.0
    %676 = vmatprep.subr.mxu0 0.0
    %677 = vmatpush2.msra.mxu0 0.0
    %678 = vmatprep.subr.mxu0 0.0
    %679 = vmatpush2.msra.mxu0 0.0
    %680 = vmatprep.subr.mxu0 0.0
    %681 = vmatpush2.msra.mxu0 0.0
    %682 = vmatprep.subr.mxu0 0.0
    %683 = vmatpush2.msra.mxu0 0.0
    %684 = vmatprep.subr.mxu0 0.0
    %685 = vmatpush2.msra.mxu0 0.0
    %686 = vmatprep.subr.mxu0 0.0
    %687 = vmatpush2.msra.mxu0 0.0
    %688 = vmatprep.subr.mxu0 0.0
    %689 = vmatpush2.msra.mxu0 0.0
    %690 = vmatprep.mubr.f32.mxu0 0.0
    %691 = vmatmul.mubr.f32.gmra.mxu0 %v579
    %v692 = vpop.f32.mrf.mxu0
    %v693 = vadd.f32 %v575, %v692
    %v694 = vpop.f32.mrf.mxu0
    %695 = vmatprep.mubr.f32.mxu0 0.0
    %696 = vmatmul.mubr.f32.gmra.mxu0 %v582
    %v697 = vpop.f32.mrf.mxu0
    %v698 = vadd.f32 %v575, %v697
    %v699 = vpop.f32.mrf.mxu0
    %700 = vmatprep.mubr.f32.mxu0 0.0
    %701 = vmatmul.mubr.f32.gmra.mxu0 %v585
    %v702 = vpop.f32.mrf.mxu0
    %v703 = vadd.f32 %v575, %v702
    %v704 = vpop.f32.mrf.mxu0
    %705 = vmatprep.mubr.f32.mxu0 0.0
    %706 = vmatmul.mubr.f32.gmra.mxu0 %v588
    %v707 = vpop.f32.mrf.mxu0
    %v708 = vadd.f32 %v575, %v707
    %v709 = vpop.f32.mrf.mxu0
    %710 = vmatprep.mubr.f32.mxu0 0.0
    %711 = vmatmul.mubr.f32.gmra.mxu0 %v591
    %v712 = vpop.f32.mrf.mxu0
    %v713 = vadd.f32 %v575, %v712
    %v714 = vpop.f32.mrf.mxu0
    %715 = vmatprep.mubr.f32.mxu0 0.0
    %716 = vmatmul.mubr.f32.gmra.mxu0 %v594
    %v717 = vpop.f32.mrf.mxu0
    %v718 = vadd.f32 %v575, %v717
    %v719 = vpop.f32.mrf.mxu0
    %720 = vmatprep.mubr.f32.mxu0 0.0
    %721 = vmatmul.mubr.f32.gmra.mxu0 %v597
    %v722 = vpop.f32.mrf.mxu0
    %v723 = vadd.f32 %v575, %v722
    %v724 = vpop.f32.mrf.mxu0
    %725 = vmatprep.mubr.f32.mxu0 0.0
    %726 = vmatmul.mubr.f32.gmra.mxu0 %v600
    %v727 = vpop.f32.mrf.mxu0
    %v728 = vadd.f32 %v575, %v727
    %v729 = vpop.f32.mrf.mxu0
    %730 = vmatprep.mubr.f32.mxu0 0.0
    %731 = vmatmul.mubr.f32.gmra.mxu0 %v603
    %v732 = vpop.f32.mrf.mxu0
    %v733 = vadd.f32 %v575, %v732
    %v734 = vpop.f32.mrf.mxu0
    %735 = vmatprep.mubr.f32.mxu0 0.0
    %736 = vmatmul.mubr.f32.gmra.mxu0 %v606
    %v737 = vpop.f32.mrf.mxu0
    %v738 = vadd.f32 %v575, %v737
    %v739 = vpop.f32.mrf.mxu0
    %740 = vmatprep.mubr.f32.mxu0 0.0
    %741 = vmatmul.mubr.f32.gmra.mxu0 %v609
    %v742 = vpop.f32.mrf.mxu0
    %v743 = vadd.f32 %v575, %v742
    %v744 = vpop.f32.mrf.mxu0
    %745 = vmatprep.mubr.f32.mxu0 0.0
    %746 = vmatmul.mubr.f32.gmra.mxu0 %v612
    %v747 = vpop.f32.mrf.mxu0
    %v748 = vadd.f32 %v575, %v747
    %v749 = vpop.f32.mrf.mxu0
    %750 = vmatprep.mubr.f32.mxu0 0.0
    %751 = vmatmul.mubr.f32.gmra.mxu0 %v615
    %v752 = vpop.f32.mrf.mxu0
    %v753 = vadd.f32 %v575, %v752
    %v754 = vpop.f32.mrf.mxu0
    %755 = vmatprep.mubr.f32.mxu0 0.0
    %756 = vmatmul.mubr.f32.gmra.mxu0 %v618
    %v757 = vpop.f32.mrf.mxu0
    %v758 = vadd.f32 %v575, %v757
    %v759 = vpop.f32.mrf.mxu0
    %760 = vmatprep.mubr.f32.mxu0 0.0
    %761 = vmatmul.mubr.f32.gmra.mxu0 %v621
    %v762 = vpop.f32.mrf.mxu0
    %v763 = vadd.f32 %v575, %v762
    %v764 = vpop.f32.mrf.mxu0
    %765 = vmatprep.mubr.f32.mxu0 0.0
    %766 = vmatmul.mubr.f32.gmra.mxu0 %v624
    %v767 = vpop.f32.mrf.mxu0
    %v768 = vadd.f32 %v575, %v767
    %v769 = vpop.f32.mrf.mxu0
    %770 = vdwg.mxu0
    %771 = vst.msk [vmem:[#allocation2] sm:$0xff] %vm356, %v693
    %772 = vst.msk [vmem:[#allocation2 + $0x8] sm:$0xff] %vm356, %v698
    %773 = vst.msk [vmem:[#allocation2 + $0x10] sm:$0xff] %vm356, %v703
    %774 = vst.msk [vmem:[#allocation2 + $0x18] sm:$0xff] %vm356, %v708
    %775 = vst.msk [vmem:[#allocation2 + $0x20] sm:$0xff] %vm356, %v713
    %776 = vst.msk [vmem:[#allocation2 + $0x28] sm:$0xff] %vm356, %v718
    %777 = vst.msk [vmem:[#allocation2 + $0x30] sm:$0xff] %vm356, %v723
    %778 = vst.msk [vmem:[#allocation2 + $0x38] sm:$0xff] %vm356, %v728
    %779 = vst.msk [vmem:[#allocation2 + $0x40] sm:$0xff] %vm356, %v733
    %780 = vst.msk [vmem:[#allocation2 + $0x48] sm:$0xff] %vm356, %v738
    %781 = vst.msk [vmem:[#allocation2 + $0x50] sm:$0xff] %vm356, %v743
    %782 = vst.msk [vmem:[#allocation2 + $0x58] sm:$0xff] %vm356, %v748
    %783 = vst.msk [vmem:[#allocation2 + $0x60] sm:$0xff] %vm356, %v753
    %784 = vst.msk [vmem:[#allocation2 + $0x68] sm:$0xff] %vm356, %v758
    %785 = vst.msk [vmem:[#allocation2 + $0x70] sm:$0xff] %vm356, %v763
    %786 = vst.msk [vmem:[#allocation2 + $0x78] sm:$0xff] %vm356, %v768
    %v787 = vld [vmem:[#allocation13] sm:$0xff]
    %v788 = vld [vmem:[#allocation13 + $0x8] sm:$0xff]
    %v789 = vld [vmem:[#allocation5] sm:$0xff]
    %v790 = vld [vmem:[#allocation5 + $0x8] sm:$0xff]
    %v791 = vld [vmem:[#allocation8] sm:$0xff]
    %v792 = vld [vmem:[#allocation8 + $0x8] sm:$0xff]
    %v793 = vld [vmem:[#allocation2] sm:$0xff]
    %v794 = vld [vmem:[#allocation2 + $0x8] sm:$0xff]
    %vm795 = vcmask 130048
    %v797 = vsel %vm795, %v789, 0
    %v800 = vsel %vm795, %v790, 0
    %802 = vmatprep.subr.mxu0 0.0
    %803 = vmatpush1.msra.mxu0 0.0
    %804 = vmatprep.subr.mxu0 0.0
    %805 = vmatpush1.msra.mxu0 0.0
    %806 = vmatprep.subr.mxu0 0.0
    %807 = vmatpush1.msra.mxu0 0.0
    %808 = vmatprep.subr.mxu0 0.0
    %809 = vmatpush1.msra.mxu0 0.0
    %810 = vmatprep.subr.mxu0 0.0
    %811 = vmatpush1.msra.mxu0 0.0
    %812 = vmatprep.subr.mxu0 0.0
    %813 = vmatpush1.msra.mxu0 0.0
    %814 = vmatprep.subr.mxu0 0.0
    %815 = vmatpush1.msra.mxu0 0.0
    %816 = vmatprep.subr.mxu0 0.0
    %817 = vmatpush1.msra.mxu0 0.0
    %818 = vmatprep.subr.mxu0 0.0
    %819 = vmatpush1.msra.mxu0 0.0
    %820 = vmatprep.subr.mxu0 0.0
    %821 = vmatpush1.msra.mxu0 0.0
    %822 = vmatprep.subr.mxu0 0.0
    %823 = vmatpush1.msra.mxu0 0.0
    %824 = vmatprep.subr.mxu0 0.0
    %825 = vmatpush1.msra.mxu0 0.0
    %826 = vmatprep.subr.mxu0 0.0
    %827 = vmatpush1.msra.mxu0 0.0
    %828 = vmatprep.subr.mxu0 0.0
    %829 = vmatpush1.msra.mxu0 0.0
    %830 = vmatprep.subr.mxu0 0.0
    %831 = vmatpush1.msra.mxu0 %v788
    %832 = vmatprep.subr.mxu0 0.0
    %833 = vmatpush1.msra.mxu0 %v787
    %834 = vmatprep.subr.mxu0 0.0
    %835 = vmatpush2.msra.mxu0 0.0
    %836 = vmatprep.subr.mxu0 0.0
    %837 = vmatpush2.msra.mxu0 0.0
    %838 = vmatprep.subr.mxu0 0.0
    %839 = vmatpush2.msra.mxu0 0.0
    %840 = vmatprep.subr.mxu0 0.0
    %841 = vmatpush2.msra.mxu0 0.0
    %842 = vmatprep.subr.mxu0 0.0
    %843 = vmatpush2.msra.mxu0 0.0
    %844 = vmatprep.subr.mxu0 0.0
    %845 = vmatpush2.msra.mxu0 0.0
    %846 = vmatprep.subr.mxu0 0.0
    %847 = vmatpush2.msra.mxu0 0.0
    %848 = vmatprep.subr.mxu0 0.0
    %849 = vmatpush2.msra.mxu0 0.0
    %850 = vmatprep.subr.mxu0 0.0
    %851 = vmatpush2.msra.mxu0 0.0
    %852 = vmatprep.subr.mxu0 0.0
    %853 = vmatpush2.msra.mxu0 0.0
    %854 = vmatprep.subr.mxu0 0.0
    %855 = vmatpush2.msra.mxu0 0.0
    %856 = vmatprep.subr.mxu0 0.0
    %857 = vmatpush2.msra.mxu0 0.0
    %858 = vmatprep.subr.mxu0 0.0
    %859 = vmatpush2.msra.mxu0 0.0
    %860 = vmatprep.subr.mxu0 0.0
    %861 = vmatpush2.msra.mxu0 0.0
    %862 = vmatprep.subr.mxu0 0.0
    %863 = vmatpush2.msra.mxu0 0.0
    %864 = vmatprep.subr.mxu0 0.0
    %865 = vmatpush2.msra.mxu0 0.0
    %866 = vmatprep.mubr.f32.mxu0 0.0
    %867 = vmatmul.mubr.f32.gmra.mxu0 %v797
    %v868 = vpop.f32.mrf.mxu0
    %v869 = vadd.f32 0.0, %v868
    %v870 = vpop.f32.mrf.mxu0
    %871 = vmatprep.mubr.f32.mxu0 0.0
    %872 = vmatmul.mubr.f32.gmra.mxu0 %v800
    %v873 = vpop.f32.mrf.mxu0
    %v874 = vadd.f32 0.0, %v873
    %v875 = vpop.f32.mrf.mxu0
    %876 = vdwg.mxu0
    %v877 = vadd.f32 %v793, %v869
    %v878 = vadd.f32 %v794, %v874
    %v879 = vxor.u32 %v877, 2147483648
    %v880 = vxor.u32 %v878, 2147483648
    %v881 = vmul.f32 %v879, 1.442695
    %v882 = vpow.pop %v881
    %v883 = vmul.f32 %v880, 1.442695
    %v884 = vpow.pop %v883
    %v885 = vadd.f32 %v882, 1.0
    %v886 = vadd.f32 %v884, 1.0
    %v887 = vrcp.pop %v885
    %v888 = vmul.f32 1.0, %v887
    %v889 = vrcp.pop %v886
    %v890 = vmul.f32 1.0, %v889
    %v891 = vtanh.pop %v877
    %v892 = vtanh.pop %v878
    %895 = vrot.lane.b32.xlu0 %v791, 16
    %v896 = vpop.permute.xlu0 %895
    %897 = vrot.lane.b32.xlu0 %v792, 16
    %v898 = vpop.permute.xlu0 %897
    %v901 = vmul.f32 %v888, %v896
    %v902 = vmul.f32 %v890, %v898
    %905 = vrot.lane.b32.xlu0 %v891, 96
    %v906 = vpop.permute.xlu0 %905
    %907 = vrot.lane.b32.xlu0 %v892, 96
    %v908 = vpop.permute.xlu0 %907
    %v911 = vmul.f32 %v888, %v906
    %v912 = vmul.f32 %v890, %v908
    %915 = vrot.lane.b32.xlu0 %v911, 16
    %v916 = vpop.permute.xlu0 %915
    %917 = vrot.lane.b32.xlu0 %v912, 16
    %v918 = vpop.permute.xlu0 %917
    %v921 = vadd.f32 %v901, %v916
    %v922 = vadd.f32 %v902, %v918
    %v923 = vtanh.pop %v921
    %v924 = vtanh.pop %v922
    %927 = vrot.lane.b32.xlu0 %v923, 32
    %v928 = vpop.permute.xlu0 %927
    %929 = vrot.lane.b32.xlu0 %v924, 32
    %v930 = vpop.permute.xlu0 %929
    %v933 = vmul.f32 %v888, %v928
    %v934 = vmul.f32 %v890, %v930
    %937 = vrot.lane.b32.xlu0 %v933, 80
    %v938 = vpop.permute.xlu0 %937
    %939 = vrot.lane.b32.xlu0 %v934, 80
    %v940 = vpop.permute.xlu0 %939
    %943 = vst.msk [vmem:[#allocation3] sm:$0xff] %vm795, %v938
    %944 = vst.msk [vmem:[#allocation3 + $0x8] sm:$0xff] %vm795, %v940
    %947 = vrot.lane.b32.xlu0 %v921, 112
    %v948 = vpop.permute.xlu0 %947
    %949 = vrot.lane.b32.xlu0 %v922, 112
    %v950 = vpop.permute.xlu0 %949
    %953 = vst.msk [vmem:[#allocation4] sm:$0xff] %vm795, %v948
    %954 = vst.msk [vmem:[#allocation4 + $0x8] sm:$0xff] %vm795, %v950
    %s955 = scalar_lea.vmem [#allocation2], 16
    %v956 = vld [vmem:[%s955] sm:$0xff]
    %v957 = vld [vmem:[%s955 + $0x8] sm:$0xff]
    %v958 = vsel %vm795, %v938, 0
    %v960 = vsel %vm795, %v940, 0
    %962 = vmatprep.subr.mxu0 0.0
    %963 = vmatpush1.msra.mxu0 0.0
    %964 = vmatprep.subr.mxu0 0.0
    %965 = vmatpush1.msra.mxu0 0.0
    %966 = vmatprep.subr.mxu0 0.0
    %967 = vmatpush1.msra.mxu0 0.0
    %968 = vmatprep.subr.mxu0 0.0
    %969 = vmatpush1.msra.mxu0 0.0
    %970 = vmatprep.subr.mxu0 0.0
    %971 = vmatpush1.msra.mxu0 0.0
    %972 = vmatprep.subr.mxu0 0.0
    %973 = vmatpush1.msra.mxu0 0.0
    %974 = vmatprep.subr.mxu0 0.0
    %975 = vmatpush1.msra.mxu0 0.0
    %976 = vmatprep.subr.mxu0 0.0
    %977 = vmatpush1.msra.mxu0 0.0
    %978 = vmatprep.subr.mxu0 0.0
    %979 = vmatpush1.msra.mxu0 0.0
    %980 = vmatprep.subr.mxu0 0.0
    %981 = vmatpush1.msra.mxu0 0.0
    %982 = vmatprep.subr.mxu0 0.0
    %983 = vmatpush1.msra.mxu0 0.0
    %984 = vmatprep.subr.mxu0 0.0
    %985 = vmatpush1.msra.mxu0 0.0
    %986 = vmatprep.subr.mxu0 0.0
    %987 = vmatpush1.msra.mxu0 0.0
    %988 = vmatprep.subr.mxu0 0.0
    %989 = vmatpush1.msra.mxu0 0.0
    %990 = vmatprep.subr.mxu0 0.0
    %991 = vmatpush1.msra.mxu0 %v788
    %992 = vmatprep.subr.mxu0 0.0
    %993 = vmatpush1.msra.mxu0 %v787
    %994 = vmatprep.subr.mxu0 0.0
    %995 = vmatpush2.msra.mxu0 0.0
    %996 = vmatprep.subr.mxu0 0.0
    %997 = vmatpush2.msra.mxu0 0.0
    %998 = vmatprep.subr.mxu0 0.0
    %999 = vmatpush2.msra.mxu0 0.0
    %1000 = vmatprep.subr.mxu0 0.0
    %1001 = vmatpush2.msra.mxu0 0.0
    %1002 = vmatprep.subr.mxu0 0.0
    %1003 = vmatpush2.msra.mxu0 0.0
    %1004 = vmatprep.subr.mxu0 0.0
    %1005 = vmatpush2.msra.mxu0 0.0
    %1006 = vmatprep.subr.mxu0 0.0
    %1007 = vmatpush2.msra.mxu0 0.0
    %1008 = vmatprep.subr.mxu0 0.0
    %1009 = vmatpush2.msra.mxu0 0.0
    %1010 = vmatprep.subr.mxu0 0.0
    %1011 = vmatpush2.msra.mxu0 0.0
    %1012 = vmatprep.subr.mxu0 0.0
    %1013 = vmatpush2.msra.mxu0 0.0
    %1014 = vmatprep.subr.mxu0 0.0
    %1015 = vmatpush2.msra.mxu0 0.0
    %1016 = vmatprep.subr.mxu0 0.0
    %1017 = vmatpush2.msra.mxu0 0.0
    %1018 = vmatprep.subr.mxu0 0.0
    %1019 = vmatpush2.msra.mxu0 0.0
    %1020 = vmatprep.subr.mxu0 0.0
    %1021 = vmatpush2.msra.mxu0 0.0
    %1022 = vmatprep.subr.mxu0 0.0
    %1023 = vmatpush2.msra.mxu0 0.0
    %1024 = vmatprep.subr.mxu0 0.0
    %1025 = vmatpush2.msra.mxu0 0.0
    %1026 = vmatprep.mubr.f32.mxu0 0.0
    %1027 = vmatmul.mubr.f32.gmra.mxu0 %v958
    %v1028 = vpop.f32.mrf.mxu0
    %v1029 = vadd.f32 0.0, %v1028
    %v1030 = vpop.f32.mrf.mxu0
    %1031 = vmatprep.mubr.f32.mxu0 0.0
    %1032 = vmatmul.mubr.f32.gmra.mxu0 %v960
    %v1033 = vpop.f32.mrf.mxu0
    %v1034 = vadd.f32 0.0, %v1033
    %v1035 = vpop.f32.mrf.mxu0
    %1036 = vdwg.mxu0
    %v1037 = vadd.f32 %v956, %v1029
    %v1038 = vadd.f32 %v957, %v1034
    %v1039 = vxor.u32 %v1037, 2147483648
    %v1040 = vxor.u32 %v1038, 2147483648
    %v1041 = vmul.f32 %v1039, 1.442695
    %v1042 = vpow.pop %v1041
    %v1043 = vmul.f32 %v1040, 1.442695
    %v1044 = vpow.pop %v1043
    %v1045 = vadd.f32 %v1042, 1.0
    %v1046 = vadd.f32 %v1044, 1.0
    %v1047 = vrcp.pop %v1045
    %v1048 = vmul.f32 1.0, %v1047
    %v1049 = vrcp.pop %v1046
    %v1050 = vmul.f32 1.0, %v1049
    %v1051 = vtanh.pop %v1037
    %v1052 = vtanh.pop %v1038
    %v1053 = vmul.f32 %v1048, %v921
    %v1054 = vmul.f32 %v1050, %v922
    %1057 = vrot.lane.b32.xlu0 %v1051, 96
    %v1058 = vpop.permute.xlu0 %1057
    %1059 = vrot.lane.b32.xlu0 %v1052, 96
    %v1060 = vpop.permute.xlu0 %1059
    %v1063 = vmul.f32 %v1048, %v1058
    %v1064 = vmul.f32 %v1050, %v1060
    %1067 = vrot.lane.b32.xlu0 %v1063, 16
    %v1068 = vpop.permute.xlu0 %1067
    %1069 = vrot.lane.b32.xlu0 %v1064, 16
    %v1070 = vpop.permute.xlu0 %1069
    %v1073 = vadd.f32 %v1053, %v1068
    %v1074 = vadd.f32 %v1054, %v1070
    %v1075 = vtanh.pop %v1073
    %v1076 = vtanh.pop %v1074
    %1079 = vrot.lane.b32.xlu0 %v1075, 32
    %v1080 = vpop.permute.xlu0 %1079
    %1081 = vrot.lane.b32.xlu0 %v1076, 32
    %v1082 = vpop.permute.xlu0 %1081
    %v1085 = vmul.f32 %v1048, %v1080
    %v1086 = vmul.f32 %v1050, %v1082
    %1089 = vrot.lane.b32.xlu0 %v1085, 80
    %v1090 = vpop.permute.xlu0 %1089
    %1091 = vrot.lane.b32.xlu0 %v1086, 80
    %v1092 = vpop.permute.xlu0 %1091
    %s1095 = scalar_lea.vmem [#allocation3], 16
    %1096 = vst.msk [vmem:[%s1095] sm:$0xff] %vm795, %v1090
    %1097 = vst.msk [vmem:[%s1095 + $0x8] sm:$0xff] %vm795, %v1092
    %1100 = vrot.lane.b32.xlu0 %v1073, 112
    %v1101 = vpop.permute.xlu0 %1100
    %1102 = vrot.lane.b32.xlu0 %v1074, 112
    %v1103 = vpop.permute.xlu0 %1102
    %s1106 = scalar_lea.vmem [#allocation4], 16
    %1107 = vst.msk [vmem:[%s1106] sm:$0xff] %vm795, %v1101
    %1108 = vst.msk [vmem:[%s1106 + $0x8] sm:$0xff] %vm795, %v1103
    %s1109 = scalar_lea.vmem [#allocation2], 32
    %v1110 = vld [vmem:[%s1109] sm:$0xff]
    %v1111 = vld [vmem:[%s1109 + $0x8] sm:$0xff]
    %v1112 = vsel %vm795, %v1090, 0
    %v1114 = vsel %vm795, %v1092, 0
    %1116 = vmatprep.subr.mxu0 0.0
    %1117 = vmatpush1.msra.mxu0 0.0
    %1118 = vmatprep.subr.mxu0 0.0
    %1119 = vmatpush1.msra.mxu0 0.0
    %1120 = vmatprep.subr.mxu0 0.0
    %1121 = vmatpush1.msra.mxu0 0.0
    %1122 = vmatprep.subr.mxu0 0.0
    %1123 = vmatpush1.msra.mxu0 0.0
    %1124 = vmatprep.subr.mxu0 0.0
    %1125 = vmatpush1.msra.mxu0 0.0
    %1126 = vmatprep.subr.mxu0 0.0
    %1127 = vmatpush1.msra.mxu0 0.0
    %1128 = vmatprep.subr.mxu0 0.0
    %1129 = vmatpush1.msra.mxu0 0.0
    %1130 = vmatprep.subr.mxu0 0.0
    %1131 = vmatpush1.msra.mxu0 0.0
    %1132 = vmatprep.subr.mxu0 0.0
    %1133 = vmatpush1.msra.mxu0 0.0
    %1134 = vmatprep.subr.mxu0 0.0
    %1135 = vmatpush1.msra.mxu0 0.0
    %1136 = vmatprep.subr.mxu0 0.0
    %1137 = vmatpush1.msra.mxu0 0.0
    %1138 = vmatprep.subr.mxu0 0.0
    %1139 = vmatpush1.msra.mxu0 0.0
    %1140 = vmatprep.subr.mxu0 0.0
    %1141 = vmatpush1.msra.mxu0 0.0
    %1142 = vmatprep.subr.mxu0 0.0
    %1143 = vmatpush1.msra.mxu0 0.0
    %1144 = vmatprep.subr.mxu0 0.0
    %1145 = vmatpush1.msra.mxu0 %v788
    %1146 = vmatprep.subr.mxu0 0.0
    %1147 = vmatpush1.msra.mxu0 %v787
    %1148 = vmatprep.subr.mxu0 0.0
    %1149 = vmatpush2.msra.mxu0 0.0
    %1150 = vmatprep.subr.mxu0 0.0
    %1151 = vmatpush2.msra.mxu0 0.0
    %1152 = vmatprep.subr.mxu0 0.0
    %1153 = vmatpush2.msra.mxu0 0.0
    %1154 = vmatprep.subr.mxu0 0.0
    %1155 = vmatpush2.msra.mxu0 0.0
    %1156 = vmatprep.subr.mxu0 0.0
    %1157 = vmatpush2.msra.mxu0 0.0
    %1158 = vmatprep.subr.mxu0 0.0
    %1159 = vmatpush2.msra.mxu0 0.0
    %1160 = vmatprep.subr.mxu0 0.0
    %1161 = vmatpush2.msra.mxu0 0.0
    %1162 = vmatprep.subr.mxu0 0.0
    %1163 = vmatpush2.msra.mxu0 0.0
    %1164 = vmatprep.subr.mxu0 0.0
    %1165 = vmatpush2.msra.mxu0 0.0
    %1166 = vmatprep.subr.mxu0 0.0
    %1167 = vmatpush2.msra.mxu0 0.0
    %1168 = vmatprep.subr.mxu0 0.0
    %1169 = vmatpush2.msra.mxu0 0.0
    %1170 = vmatprep.subr.mxu0 0.0
    %1171 = vmatpush2.msra.mxu0 0.0
    %1172 = vmatprep.subr.mxu0 0.0
    %1173 = vmatpush2.msra.mxu0 0.0
    %1174 = vmatprep.subr.mxu0 0.0
    %1175 = vmatpush2.msra.mxu0 0.0
    %1176 = vmatprep.subr.mxu0 0.0
    %1177 = vmatpush2.msra.mxu0 0.0
    %1178 = vmatprep.subr.mxu0 0.0
    %1179 = vmatpush2.msra.mxu0 0.0
    %1180 = vmatprep.mubr.f32.mxu0 0.0
    %1181 = vmatmul.mubr.f32.gmra.mxu0 %v1112
    %v1182 = vpop.f32.mrf.mxu0
    %v1183 = vadd.f32 0.0, %v1182
    %v1184 = vpop.f32.mrf.mxu0
    %1185 = vmatprep.mubr.f32.mxu0 0.0
    %1186 = vmatmul.mubr.f32.gmra.mxu0 %v1114
    %v1187 = vpop.f32.mrf.mxu0
    %v1188 = vadd.f32 0.0, %v1187
    %v1189 = vpop.f32.mrf.mxu0
    %1190 = vdwg.mxu0
    %v1191 = vadd.f32 %v1110, %v1183
    %v1192 = vadd.f32 %v1111, %v1188
    %v1193 = vxor.u32 %v1191, 2147483648
    %v1194 = vxor.u32 %v1192, 2147483648
    %v1195 = vmul.f32 %v1193, 1.442695
    %v1196 = vpow.pop %v1195
    %v1197 = vmul.f32 %v1194, 1.442695
    %v1198 = vpow.pop %v1197
    %v1199 = vadd.f32 %v1196, 1.0
    %v1200 = vadd.f32 %v1198, 1.0
    %v1201 = vrcp.pop %v1199
    %v1202 = vmul.f32 1.0, %v1201
    %v1203 = vrcp.pop %v1200
    %v1204 = vmul.f32 1.0, %v1203
    %v1205 = vtanh.pop %v1191
    %v1206 = vtanh.pop %v1192
    %v1207 = vmul.f32 %v1202, %v1073
    %v1208 = vmul.f32 %v1204, %v1074
    %1211 = vrot.lane.b32.xlu0 %v1205, 96
    %v1212 = vpop.permute.xlu0 %1211
    %1213 = vrot.lane.b32.xlu0 %v1206, 96
    %v1214 = vpop.permute.xlu0 %1213
    %v1217 = vmul.f32 %v1202, %v1212
    %v1218 = vmul.f32 %v1204, %v1214
    %1221 = vrot.lane.b32.xlu0 %v1217, 16
    %v1222 = vpop.permute.xlu0 %1221
    %1223 = vrot.lane.b32.xlu0 %v1218, 16
    %v1224 = vpop.permute.xlu0 %1223
    %v1227 = vadd.f32 %v1207, %v1222
    %v1228 = vadd.f32 %v1208, %v1224
    %v1229 = vtanh.pop %v1227
    %v1230 = vtanh.pop %v1228
    %1233 = vrot.lane.b32.xlu0 %v1229, 32
    %v1234 = vpop.permute.xlu0 %1233
    %1235 = vrot.lane.b32.xlu0 %v1230, 32
    %v1236 = vpop.permute.xlu0 %1235
    %v1239 = vmul.f32 %v1202, %v1234
    %v1240 = vmul.f32 %v1204, %v1236
    %1243 = vrot.lane.b32.xlu0 %v1239, 80
    %v1244 = vpop.permute.xlu0 %1243
    %1245 = vrot.lane.b32.xlu0 %v1240, 80
    %v1246 = vpop.permute.xlu0 %1245
    %s1249 = scalar_lea.vmem [#allocation3], 32
    %1250 = vst.msk [vmem:[%s1249] sm:$0xff] %vm795, %v1244
    %1251 = vst.msk [vmem:[%s1249 + $0x8] sm:$0xff] %vm795, %v1246
    %1254 = vrot.lane.b32.xlu0 %v1227, 112
    %v1255 = vpop.permute.xlu0 %1254
    %1256 = vrot.lane.b32.xlu0 %v1228, 112
    %v1257 = vpop.permute.xlu0 %1256
    %s1260 = scalar_lea.vmem [#allocation4], 32
    %1261 = vst.msk [vmem:[%s1260] sm:$0xff] %vm795, %v1255
    %1262 = vst.msk [vmem:[%s1260 + $0x8] sm:$0xff] %vm795, %v1257
    %s1263 = scalar_lea.vmem [#allocation2], 48
    %v1264 = vld [vmem:[%s1263] sm:$0xff]
    %v1265 = vld [vmem:[%s1263 + $0x8] sm:$0xff]
    %v1266 = vsel %vm795, %v1244, 0
    %v1268 = vsel %vm795, %v1246, 0
    %1270 = vmatprep.subr.mxu0 0.0
    %1271 = vmatpush1.msra.mxu0 0.0
    %1272 = vmatprep.subr.mxu0 0.0
    %1273 = vmatpush1.msra.mxu0 0.0
    %1274 = vmatprep.subr.mxu0 0.0
    %1275 = vmatpush1.msra.mxu0 0.0
    %1276 = vmatprep.subr.mxu0 0.0
    %1277 = vmatpush1.msra.mxu0 0.0
    %1278 = vmatprep.subr.mxu0 0.0
    %1279 = vmatpush1.msra.mxu0 0.0
    %1280 = vmatprep.subr.mxu0 0.0
    %1281 = vmatpush1.msra.mxu0 0.0
    %1282 = vmatprep.subr.mxu0 0.0
    %1283 = vmatpush1.msra.mxu0 0.0
    %1284 = vmatprep.subr.mxu0 0.0
    %1285 = vmatpush1.msra.mxu0 0.0
    %1286 = vmatprep.subr.mxu0 0.0
    %1287 = vmatpush1.msra.mxu0 0.0
    %1288 = vmatprep.subr.mxu0 0.0
    %1289 = vmatpush1.msra.mxu0 0.0
    %1290 = vmatprep.subr.mxu0 0.0
    %1291 = vmatpush1.msra.mxu0 0.0
    %1292 = vmatprep.subr.mxu0 0.0
    %1293 = vmatpush1.msra.mxu0 0.0
    %1294 = vmatprep.subr.mxu0 0.0
    %1295 = vmatpush1.msra.mxu0 0.0
    %1296 = vmatprep.subr.mxu0 0.0
    %1297 = vmatpush1.msra.mxu0 0.0
    %1298 = vmatprep.subr.mxu0 0.0
    %1299 = vmatpush1.msra.mxu0 %v788
    %1300 = vmatprep.subr.mxu0 0.0
    %1301 = vmatpush1.msra.mxu0 %v787
    %1302 = vmatprep.subr.mxu0 0.0
    %1303 = vmatpush2.msra.mxu0 0.0
    %1304 = vmatprep.subr.mxu0 0.0
    %1305 = vmatpush2.msra.mxu0 0.0
    %1306 = vmatprep.subr.mxu0 0.0
    %1307 = vmatpush2.msra.mxu0 0.0
    %1308 = vmatprep.subr.mxu0 0.0
    %1309 = vmatpush2.msra.mxu0 0.0
    %1310 = vmatprep.subr.mxu0 0.0
    %1311 = vmatpush2.msra.mxu0 0.0
    %1312 = vmatprep.subr.mxu0 0.0
    %1313 = vmatpush2.msra.mxu0 0.0
    %1314 = vmatprep.subr.mxu0 0.0
    %1315 = vmatpush2.msra.mxu0 0.0
    %1316 = vmatprep.subr.mxu0 0.0
    %1317 = vmatpush2.msra.mxu0 0.0
    %1318 = vmatprep.subr.mxu0 0.0
    %1319 = vmatpush2.msra.mxu0 0.0
    %1320 = vmatprep.subr.mxu0 0.0
    %1321 = vmatpush2.msra.mxu0 0.0
    %1322 = vmatprep.subr.mxu0 0.0
    %1323 = vmatpush2.msra.mxu0 0.0
    %1324 = vmatprep.subr.mxu0 0.0
    %1325 = vmatpush2.msra.mxu0 0.0
    %1326 = vmatprep.subr.mxu0 0.0
    %1327 = vmatpush2.msra.mxu0 0.0
    %1328 = vmatprep.subr.mxu0 0.0
    %1329 = vmatpush2.msra.mxu0 0.0
    %1330 = vmatprep.subr.mxu0 0.0
    %1331 = vmatpush2.msra.mxu0 0.0
    %1332 = vmatprep.subr.mxu0 0.0
    %1333 = vmatpush2.msra.mxu0 0.0
    %1334 = vmatprep.mubr.f32.mxu0 0.0
    %1335 = vmatmul.mubr.f32.gmra.mxu0 %v1266
    %v1336 = vpop.f32.mrf.mxu0
    %v1337 = vadd.f32 0.0, %v1336
    %v1338 = vpop.f32.mrf.mxu0
    %1339 = vmatprep.mubr.f32.mxu0 0.0
    %1340 = vmatmul.mubr.f32.gmra.mxu0 %v1268
    %v1341 = vpop.f32.mrf.mxu0
    %v1342 = vadd.f32 0.0, %v1341
    %v1343 = vpop.f32.mrf.mxu0
    %1344 = vdwg.mxu0
    %v1345 = vadd.f32 %v1264, %v1337
    %v1346 = vadd.f32 %v1265, %v1342
    %v1347 = vxor.u32 %v1345, 2147483648
    %v1348 = vxor.u32 %v1346, 2147483648
    %v1349 = vmul.f32 %v1347, 1.442695
    %v1350 = vpow.pop %v1349
    %v1351 = vmul.f32 %v1348, 1.442695
    %v1352 = vpow.pop %v1351
    %v1353 = vadd.f32 %v1350, 1.0
    %v1354 = vadd.f32 %v1352, 1.0
    %v1355 = vrcp.pop %v1353
    %v1356 = vmul.f32 1.0, %v1355
    %v1357 = vrcp.pop %v1354
    %v1358 = vmul.f32 1.0, %v1357
    %v1359 = vtanh.pop %v1345
    %v1360 = vtanh.pop %v1346
    %v1361 = vmul.f32 %v1356, %v1227
    %v1362 = vmul.f32 %v1358, %v1228
    %1365 = vrot.lane.b32.xlu0 %v1359, 96
    %v1366 = vpop.permute.xlu0 %1365
    %1367 = vrot.lane.b32.xlu0 %v1360, 96
    %v1368 = vpop.permute.xlu0 %1367
    %v1371 = vmul.f32 %v1356, %v1366
    %v1372 = vmul.f32 %v1358, %v1368
    %1375 = vrot.lane.b32.xlu0 %v1371, 16
    %v1376 = vpop.permute.xlu0 %1375
    %1377 = vrot.lane.b32.xlu0 %v1372, 16
    %v1378 = vpop.permute.xlu0 %1377
    %v1381 = vadd.f32 %v1361, %v1376
    %v1382 = vadd.f32 %v1362, %v1378
    %v1383 = vtanh.pop %v1381
    %v1384 = vtanh.pop %v1382
    %1387 = vrot.lane.b32.xlu0 %v1383, 32
    %v1388 = vpop.permute.xlu0 %1387
    %1389 = vrot.lane.b32.xlu0 %v1384, 32
    %v1390 = vpop.permute.xlu0 %1389
    %v1393 = vmul.f32 %v1356, %v1388
    %v1394 = vmul.f32 %v1358, %v1390
    %1397 = vrot.lane.b32.xlu0 %v1393, 80
    %v1398 = vpop.permute.xlu0 %1397
    %1399 = vrot.lane.b32.xlu0 %v1394, 80
    %v1400 = vpop.permute.xlu0 %1399
    %s1403 = scalar_lea.vmem [#allocation3], 48
    %1404 = vst.msk [vmem:[%s1403] sm:$0xff] %vm795, %v1398
    %1405 = vst.msk [vmem:[%s1403 + $0x8] sm:$0xff] %vm795, %v1400
    %1408 = vrot.lane.b32.xlu0 %v1381, 112
    %v1409 = vpop.permute.xlu0 %1408
    %1410 = vrot.lane.b32.xlu0 %v1382, 112
    %v1411 = vpop.permute.xlu0 %1410
    %s1414 = scalar_lea.vmem [#allocation4], 48
    %1415 = vst.msk [vmem:[%s1414] sm:$0xff] %vm795, %v1409
    %1416 = vst.msk [vmem:[%s1414 + $0x8] sm:$0xff] %vm795, %v1411
    %s1417 = scalar_lea.vmem [#allocation2], 64
    %v1418 = vld [vmem:[%s1417] sm:$0xff]
    %v1419 = vld [vmem:[%s1417 + $0x8] sm:$0xff]
    %v1420 = vsel %vm795, %v1398, 0
    %v1422 = vsel %vm795, %v1400, 0
    %1424 = vmatprep.subr.mxu0 0.0
    %1425 = vmatpush1.msra.mxu0 0.0
    %1426 = vmatprep.subr.mxu0 0.0
    %1427 = vmatpush1.msra.mxu0 0.0
    %1428 = vmatprep.subr.mxu0 0.0
    %1429 = vmatpush1.msra.mxu0 0.0
    %1430 = vmatprep.subr.mxu0 0.0
    %1431 = vmatpush1.msra.mxu0 0.0
    %1432 = vmatprep.subr.mxu0 0.0
    %1433 = vmatpush1.msra.mxu0 0.0
    %1434 = vmatprep.subr.mxu0 0.0
    %1435 = vmatpush1.msra.mxu0 0.0
    %1436 = vmatprep.subr.mxu0 0.0
    %1437 = vmatpush1.msra.mxu0 0.0
    %1438 = vmatprep.subr.mxu0 0.0
    %1439 = vmatpush1.msra.mxu0 0.0
    %1440 = vmatprep.subr.mxu0 0.0
    %1441 = vmatpush1.msra.mxu0 0.0
    %1442 = vmatprep.subr.mxu0 0.0
    %1443 = vmatpush1.msra.mxu0 0.0
    %1444 = vmatprep.subr.mxu0 0.0
    %1445 = vmatpush1.msra.mxu0 0.0
    %1446 = vmatprep.subr.mxu0 0.0
    %1447 = vmatpush1.msra.mxu0 0.0
    %1448 = vmatprep.subr.mxu0 0.0
    %1449 = vmatpush1.msra.mxu0 0.0
    %1450 = vmatprep.subr.mxu0 0.0
    %1451 = vmatpush1.msra.mxu0 0.0
    %1452 = vmatprep.subr.mxu0 0.0
    %1453 = vmatpush1.msra.mxu0 %v788
    %1454 = vmatprep.subr.mxu0 0.0
    %1455 = vmatpush1.msra.mxu0 %v787
    %1456 = vmatprep.subr.mxu0 0.0
    %1457 = vmatpush2.msra.mxu0 0.0
    %1458 = vmatprep.subr.mxu0 0.0
    %1459 = vmatpush2.msra.mxu0 0.0
    %1460 = vmatprep.subr.mxu0 0.0
    %1461 = vmatpush2.msra.mxu0 0.0
    %1462 = vmatprep.subr.mxu0 0.0
    %1463 = vmatpush2.msra.mxu0 0.0
    %1464 = vmatprep.subr.mxu0 0.0
    %1465 = vmatpush2.msra.mxu0 0.0
    %1466 = vmatprep.subr.mxu0 0.0
    %1467 = vmatpush2.msra.mxu0 0.0
    %1468 = vmatprep.subr.mxu0 0.0
    %1469 = vmatpush2.msra.mxu0 0.0
    %1470 = vmatprep.subr.mxu0 0.0
    %1471 = vmatpush2.msra.mxu0 0.0
    %1472 = vmatprep.subr.mxu0 0.0
    %1473 = vmatpush2.msra.mxu0 0.0
    %1474 = vmatprep.subr.mxu0 0.0
    %1475 = vmatpush2.msra.mxu0 0.0
    %1476 = vmatprep.subr.mxu0 0.0
    %1477 = vmatpush2.msra.mxu0 0.0
    %1478 = vmatprep.subr.mxu0 0.0
    %1479 = vmatpush2.msra.mxu0 0.0
    %1480 = vmatprep.subr.mxu0 0.0
    %1481 = vmatpush2.msra.mxu0 0.0
    %1482 = vmatprep.subr.mxu0 0.0
    %1483 = vmatpush2.msra.mxu0 0.0
    %1484 = vmatprep.subr.mxu0 0.0
    %1485 = vmatpush2.msra.mxu0 0.0
    %1486 = vmatprep.subr.mxu0 0.0
    %1487 = vmatpush2.msra.mxu0 0.0
    %1488 = vmatprep.mubr.f32.mxu0 0.0
    %1489 = vmatmul.mubr.f32.gmra.mxu0 %v1420
    %v1490 = vpop.f32.mrf.mxu0
    %v1491 = vadd.f32 0.0, %v1490
    %v1492 = vpop.f32.mrf.mxu0
    %1493 = vmatprep.mubr.f32.mxu0 0.0
    %1494 = vmatmul.mubr.f32.gmra.mxu0 %v1422
    %v1495 = vpop.f32.mrf.mxu0
    %v1496 = vadd.f32 0.0, %v1495
    %v1497 = vpop.f32.mrf.mxu0
    %1498 = vdwg.mxu0
    %v1499 = vadd.f32 %v1418, %v1491
    %v1500 = vadd.f32 %v1419, %v1496
    %v1501 = vxor.u32 %v1499, 2147483648
    %v1502 = vxor.u32 %v1500, 2147483648
    %v1503 = vmul.f32 %v1501, 1.442695
    %v1504 = vpow.pop %v1503
    %v1505 = vmul.f32 %v1502, 1.442695
    %v1506 = vpow.pop %v1505
    %v1507 = vadd.f32 %v1504, 1.0
    %v1508 = vadd.f32 %v1506, 1.0
    %v1509 = vrcp.pop %v1507
    %v1510 = vmul.f32 1.0, %v1509
    %v1511 = vrcp.pop %v1508
    %v1512 = vmul.f32 1.0, %v1511
    %v1513 = vtanh.pop %v1499
    %v1514 = vtanh.pop %v1500
    %v1515 = vmul.f32 %v1510, %v1381
    %v1516 = vmul.f32 %v1512, %v1382
    %1519 = vrot.lane.b32.xlu0 %v1513, 96
    %v1520 = vpop.permute.xlu0 %1519
    %1521 = vrot.lane.b32.xlu0 %v1514, 96
    %v1522 = vpop.permute.xlu0 %1521
    %v1525 = vmul.f32 %v1510, %v1520
    %v1526 = vmul.f32 %v1512, %v1522
    %1529 = vrot.lane.b32.xlu0 %v1525, 16
    %v1530 = vpop.permute.xlu0 %1529
    %1531 = vrot.lane.b32.xlu0 %v1526, 16
    %v1532 = vpop.permute.xlu0 %1531
    %v1535 = vadd.f32 %v1515, %v1530
    %v1536 = vadd.f32 %v1516, %v1532
    %v1537 = vtanh.pop %v1535
    %v1538 = vtanh.pop %v1536
    %1541 = vrot.lane.b32.xlu0 %v1537, 32
    %v1542 = vpop.permute.xlu0 %1541
    %1543 = vrot.lane.b32.xlu0 %v1538, 32
    %v1544 = vpop.permute.xlu0 %1543
    %v1547 = vmul.f32 %v1510, %v1542
    %v1548 = vmul.f32 %v1512, %v1544
    %1551 = vrot.lane.b32.xlu0 %v1547, 80
    %v1552 = vpop.permute.xlu0 %1551
    %1553 = vrot.lane.b32.xlu0 %v1548, 80
    %v1554 = vpop.permute.xlu0 %1553
    %s1557 = scalar_lea.vmem [#allocation3], 64
    %1558 = vst.msk [vmem:[%s1557] sm:$0xff] %vm795, %v1552
    %1559 = vst.msk [vmem:[%s1557 + $0x8] sm:$0xff] %vm795, %v1554
    %1562 = vrot.lane.b32.xlu0 %v1535, 112
    %v1563 = vpop.permute.xlu0 %1562
    %1564 = vrot.lane.b32.xlu0 %v1536, 112
    %v1565 = vpop.permute.xlu0 %1564
    %s1568 = scalar_lea.vmem [#allocation4], 64
    %1569 = vst.msk [vmem:[%s1568] sm:$0xff] %vm795, %v1563
    %1570 = vst.msk [vmem:[%s1568 + $0x8] sm:$0xff] %vm795, %v1565
    %s1571 = scalar_lea.vmem [#allocation2], 80
    %v1572 = vld [vmem:[%s1571] sm:$0xff]
    %v1573 = vld [vmem:[%s1571 + $0x8] sm:$0xff]
    %v1574 = vsel %vm795, %v1552, 0
    %v1576 = vsel %vm795, %v1554, 0
    %1578 = vmatprep.subr.mxu0 0.0
    %1579 = vmatpush1.msra.mxu0 0.0
    %1580 = vmatprep.subr.mxu0 0.0
    %1581 = vmatpush1.msra.mxu0 0.0
    %1582 = vmatprep.subr.mxu0 0.0
    %1583 = vmatpush1.msra.mxu0 0.0
    %1584 = vmatprep.subr.mxu0 0.0
    %1585 = vmatpush1.msra.mxu0 0.0
    %1586 = vmatprep.subr.mxu0 0.0
    %1587 = vmatpush1.msra.mxu0 0.0
    %1588 = vmatprep.subr.mxu0 0.0
    %1589 = vmatpush1.msra.mxu0 0.0
    %1590 = vmatprep.subr.mxu0 0.0
    %1591 = vmatpush1.msra.mxu0 0.0
    %1592 = vmatprep.subr.mxu0 0.0
    %1593 = vmatpush1.msra.mxu0 0.0
    %1594 = vmatprep.subr.mxu0 0.0
    %1595 = vmatpush1.msra.mxu0 0.0
    %1596 = vmatprep.subr.mxu0 0.0
    %1597 = vmatpush1.msra.mxu0 0.0
    %1598 = vmatprep.subr.mxu0 0.0
    %1599 = vmatpush1.msra.mxu0 0.0
    %1600 = vmatprep.subr.mxu0 0.0
    %1601 = vmatpush1.msra.mxu0 0.0
    %1602 = vmatprep.subr.mxu0 0.0
    %1603 = vmatpush1.msra.mxu0 0.0
    %1604 = vmatprep.subr.mxu0 0.0
    %1605 = vmatpush1.msra.mxu0 0.0
    %1606 = vmatprep.subr.mxu0 0.0
    %1607 = vmatpush1.msra.mxu0 %v788
    %1608 = vmatprep.subr.mxu0 0.0
    %1609 = vmatpush1.msra.mxu0 %v787
    %1610 = vmatprep.subr.mxu0 0.0
    %1611 = vmatpush2.msra.mxu0 0.0
    %1612 = vmatprep.subr.mxu0 0.0
    %1613 = vmatpush2.msra.mxu0 0.0
    %1614 = vmatprep.subr.mxu0 0.0
    %1615 = vmatpush2.msra.mxu0 0.0
    %1616 = vmatprep.subr.mxu0 0.0
    %1617 = vmatpush2.msra.mxu0 0.0
    %1618 = vmatprep.subr.mxu0 0.0
    %1619 = vmatpush2.msra.mxu0 0.0
    %1620 = vmatprep.subr.mxu0 0.0
    %1621 = vmatpush2.msra.mxu0 0.0
    %1622 = vmatprep.subr.mxu0 0.0
    %1623 = vmatpush2.msra.mxu0 0.0
    %1624 = vmatprep.subr.mxu0 0.0
    %1625 = vmatpush2.msra.mxu0 0.0
    %1626 = vmatprep.subr.mxu0 0.0
    %1627 = vmatpush2.msra.mxu0 0.0
    %1628 = vmatprep.subr.mxu0 0.0
    %1629 = vmatpush2.msra.mxu0 0.0
    %1630 = vmatprep.subr.mxu0 0.0
    %1631 = vmatpush2.msra.mxu0 0.0
    %1632 = vmatprep.subr.mxu0 0.0
    %1633 = vmatpush2.msra.mxu0 0.0
    %1634 = vmatprep.subr.mxu0 0.0
    %1635 = vmatpush2.msra.mxu0 0.0
    %1636 = vmatprep.subr.mxu0 0.0
    %1637 = vmatpush2.msra.mxu0 0.0
    %1638 = vmatprep.subr.mxu0 0.0
    %1639 = vmatpush2.msra.mxu0 0.0
    %1640 = vmatprep.subr.mxu0 0.0
    %1641 = vmatpush2.msra.mxu0 0.0
    %1642 = vmatprep.mubr.f32.mxu0 0.0
    %1643 = vmatmul.mubr.f32.gmra.mxu0 %v1574
    %v1644 = vpop.f32.mrf.mxu0
    %v1645 = vadd.f32 0.0, %v1644
    %v1646 = vpop.f32.mrf.mxu0
    %1647 = vmatprep.mubr.f32.mxu0 0.0
    %1648 = vmatmul.mubr.f32.gmra.mxu0 %v1576
    %v1649 = vpop.f32.mrf.mxu0
    %v1650 = vadd.f32 0.0, %v1649
    %v1651 = vpop.f32.mrf.mxu0
    %1652 = vdwg.mxu0
    %v1653 = vadd.f32 %v1572, %v1645
    %v1654 = vadd.f32 %v1573, %v1650
    %v1655 = vxor.u32 %v1653, 2147483648
    %v1656 = vxor.u32 %v1654, 2147483648
    %v1657 = vmul.f32 %v1655, 1.442695
    %v1658 = vpow.pop %v1657
    %v1659 = vmul.f32 %v1656, 1.442695
    %v1660 = vpow.pop %v1659
    %v1661 = vadd.f32 %v1658, 1.0
    %v1662 = vadd.f32 %v1660, 1.0
    %v1663 = vrcp.pop %v1661
    %v1664 = vmul.f32 1.0, %v1663
    %v1665 = vrcp.pop %v1662
    %v1666 = vmul.f32 1.0, %v1665
    %v1667 = vtanh.pop %v1653
    %v1668 = vtanh.pop %v1654
    %v1669 = vmul.f32 %v1664, %v1535
    %v1670 = vmul.f32 %v1666, %v1536
    %1673 = vrot.lane.b32.xlu0 %v1667, 96
    %v1674 = vpop.permute.xlu0 %1673
    %1675 = vrot.lane.b32.xlu0 %v1668, 96
    %v1676 = vpop.permute.xlu0 %1675
    %v1679 = vmul.f32 %v1664, %v1674
    %v1680 = vmul.f32 %v1666, %v1676
    %1683 = vrot.lane.b32.xlu0 %v1679, 16
    %v1684 = vpop.permute.xlu0 %1683
    %1685 = vrot.lane.b32.xlu0 %v1680, 16
    %v1686 = vpop.permute.xlu0 %1685
    %v1689 = vadd.f32 %v1669, %v1684
    %v1690 = vadd.f32 %v1670, %v1686
    %v1691 = vtanh.pop %v1689
    %v1692 = vtanh.pop %v1690
    %1695 = vrot.lane.b32.xlu0 %v1691, 32
    %v1696 = vpop.permute.xlu0 %1695
    %1697 = vrot.lane.b32.xlu0 %v1692, 32
    %v1698 = vpop.permute.xlu0 %1697
    %v1701 = vmul.f32 %v1664, %v1696
    %v1702 = vmul.f32 %v1666, %v1698
    %1705 = vrot.lane.b32.xlu0 %v1701, 80
    %v1706 = vpop.permute.xlu0 %1705
    %1707 = vrot.lane.b32.xlu0 %v1702, 80
    %v1708 = vpop.permute.xlu0 %1707
    %s1711 = scalar_lea.vmem [#allocation3], 80
    %1712 = vst.msk [vmem:[%s1711] sm:$0xff] %vm795, %v1706
    %1713 = vst.msk [vmem:[%s1711 + $0x8] sm:$0xff] %vm795, %v1708
    %1716 = vrot.lane.b32.xlu0 %v1689, 112
    %v1717 = vpop.permute.xlu0 %1716
    %1718 = vrot.lane.b32.xlu0 %v1690, 112
    %v1719 = vpop.permute.xlu0 %1718
    %s1722 = scalar_lea.vmem [#allocation4], 80
    %1723 = vst.msk [vmem:[%s1722] sm:$0xff] %vm795, %v1717
    %1724 = vst.msk [vmem:[%s1722 + $0x8] sm:$0xff] %vm795, %v1719
    %s1725 = scalar_lea.vmem [#allocation2], 96
    %v1726 = vld [vmem:[%s1725] sm:$0xff]
    %v1727 = vld [vmem:[%s1725 + $0x8] sm:$0xff]
    %v1728 = vsel %vm795, %v1706, 0
    %v1730 = vsel %vm795, %v1708, 0
    %1732 = vmatprep.subr.mxu0 0.0
    %1733 = vmatpush1.msra.mxu0 0.0
    %1734 = vmatprep.subr.mxu0 0.0
    %1735 = vmatpush1.msra.mxu0 0.0
    %1736 = vmatprep.subr.mxu0 0.0
    %1737 = vmatpush1.msra.mxu0 0.0
    %1738 = vmatprep.subr.mxu0 0.0
    %1739 = vmatpush1.msra.mxu0 0.0
    %1740 = vmatprep.subr.mxu0 0.0
    %1741 = vmatpush1.msra.mxu0 0.0
    %1742 = vmatprep.subr.mxu0 0.0
    %1743 = vmatpush1.msra.mxu0 0.0
    %1744 = vmatprep.subr.mxu0 0.0
    %1745 = vmatpush1.msra.mxu0 0.0
    %1746 = vmatprep.subr.mxu0 0.0
    %1747 = vmatpush1.msra.mxu0 0.0
    %1748 = vmatprep.subr.mxu0 0.0
    %1749 = vmatpush1.msra.mxu0 0.0
    %1750 = vmatprep.subr.mxu0 0.0
    %1751 = vmatpush1.msra.mxu0 0.0
    %1752 = vmatprep.subr.mxu0 0.0
    %1753 = vmatpush1.msra.mxu0 0.0
    %1754 = vmatprep.subr.mxu0 0.0
    %1755 = vmatpush1.msra.mxu0 0.0
    %1756 = vmatprep.subr.mxu0 0.0
    %1757 = vmatpush1.msra.mxu0 0.0
    %1758 = vmatprep.subr.mxu0 0.0
    %1759 = vmatpush1.msra.mxu0 0.0
    %1760 = vmatprep.subr.mxu0 0.0
    %1761 = vmatpush1.msra.mxu0 %v788
    %1762 = vmatprep.subr.mxu0 0.0
    %1763 = vmatpush1.msra.mxu0 %v787
    %1764 = vmatprep.subr.mxu0 0.0
    %1765 = vmatpush2.msra.mxu0 0.0
    %1766 = vmatprep.subr.mxu0 0.0
    %1767 = vmatpush2.msra.mxu0 0.0
    %1768 = vmatprep.subr.mxu0 0.0
    %1769 = vmatpush2.msra.mxu0 0.0
    %1770 = vmatprep.subr.mxu0 0.0
    %1771 = vmatpush2.msra.mxu0 0.0
    %1772 = vmatprep.subr.mxu0 0.0
    %1773 = vmatpush2.msra.mxu0 0.0
    %1774 = vmatprep.subr.mxu0 0.0
    %1775 = vmatpush2.msra.mxu0 0.0
    %1776 = vmatprep.subr.mxu0 0.0
    %1777 = vmatpush2.msra.mxu0 0.0
    %1778 = vmatprep.subr.mxu0 0.0
    %1779 = vmatpush2.msra.mxu0 0.0
    %1780 = vmatprep.subr.mxu0 0.0
    %1781 = vmatpush2.msra.mxu0 0.0
    %1782 = vmatprep.subr.mxu0 0.0
    %1783 = vmatpush2.msra.mxu0 0.0
    %1784 = vmatprep.subr.mxu0 0.0
    %1785 = vmatpush2.msra.mxu0 0.0
    %1786 = vmatprep.subr.mxu0 0.0
    %1787 = vmatpush2.msra.mxu0 0.0
    %1788 = vmatprep.subr.mxu0 0.0
    %1789 = vmatpush2.msra.mxu0 0.0
    %1790 = vmatprep.subr.mxu0 0.0
    %1791 = vmatpush2.msra.mxu0 0.0
    %1792 = vmatprep.subr.mxu0 0.0
    %1793 = vmatpush2.msra.mxu0 0.0
    %1794 = vmatprep.subr.mxu0 0.0
    %1795 = vmatpush2.msra.mxu0 0.0
    %1796 = vmatprep.mubr.f32.mxu0 0.0
    %1797 = vmatmul.mubr.f32.gmra.mxu0 %v1728
    %v1798 = vpop.f32.mrf.mxu0
    %v1799 = vadd.f32 0.0, %v1798
    %v1800 = vpop.f32.mrf.mxu0
    %1801 = vmatprep.mubr.f32.mxu0 0.0
    %1802 = vmatmul.mubr.f32.gmra.mxu0 %v1730
    %v1803 = vpop.f32.mrf.mxu0
    %v1804 = vadd.f32 0.0, %v1803
    %v1805 = vpop.f32.mrf.mxu0
    %1806 = vdwg.mxu0
    %v1807 = vadd.f32 %v1726, %v1799
    %v1808 = vadd.f32 %v1727, %v1804
    %v1809 = vxor.u32 %v1807, 2147483648
    %v1810 = vxor.u32 %v1808, 2147483648
    %v1811 = vmul.f32 %v1809, 1.442695
    %v1812 = vpow.pop %v1811
    %v1813 = vmul.f32 %v1810, 1.442695
    %v1814 = vpow.pop %v1813
    %v1815 = vadd.f32 %v1812, 1.0
    %v1816 = vadd.f32 %v1814, 1.0
    %v1817 = vrcp.pop %v1815
    %v1818 = vmul.f32 1.0, %v1817
    %v1819 = vrcp.pop %v1816
    %v1820 = vmul.f32 1.0, %v1819
    %v1821 = vtanh.pop %v1807
    %v1822 = vtanh.pop %v1808
    %v1823 = vmul.f32 %v1818, %v1689
    %v1824 = vmul.f32 %v1820, %v1690
    %1827 = vrot.lane.b32.xlu0 %v1821, 96
    %v1828 = vpop.permute.xlu0 %1827
    %1829 = vrot.lane.b32.xlu0 %v1822, 96
    %v1830 = vpop.permute.xlu0 %1829
    %v1833 = vmul.f32 %v1818, %v1828
    %v1834 = vmul.f32 %v1820, %v1830
    %1837 = vrot.lane.b32.xlu0 %v1833, 16
    %v1838 = vpop.permute.xlu0 %1837
    %1839 = vrot.lane.b32.xlu0 %v1834, 16
    %v1840 = vpop.permute.xlu0 %1839
    %v1843 = vadd.f32 %v1823, %v1838
    %v1844 = vadd.f32 %v1824, %v1840
    %v1845 = vtanh.pop %v1843
    %v1846 = vtanh.pop %v1844
    %1849 = vrot.lane.b32.xlu0 %v1845, 32
    %v1850 = vpop.permute.xlu0 %1849
    %1851 = vrot.lane.b32.xlu0 %v1846, 32
    %v1852 = vpop.permute.xlu0 %1851
    %v1855 = vmul.f32 %v1818, %v1850
    %v1856 = vmul.f32 %v1820, %v1852
    %1859 = vrot.lane.b32.xlu0 %v1855, 80
    %v1860 = vpop.permute.xlu0 %1859
    %1861 = vrot.lane.b32.xlu0 %v1856, 80
    %v1862 = vpop.permute.xlu0 %1861
    %s1865 = scalar_lea.vmem [#allocation3], 96
    %1866 = vst.msk [vmem:[%s1865] sm:$0xff] %vm795, %v1860
    %1867 = vst.msk [vmem:[%s1865 + $0x8] sm:$0xff] %vm795, %v1862
    %1870 = vrot.lane.b32.xlu0 %v1843, 112
    %v1871 = vpop.permute.xlu0 %1870
    %1872 = vrot.lane.b32.xlu0 %v1844, 112
    %v1873 = vpop.permute.xlu0 %1872
    %s1876 = scalar_lea.vmem [#allocation4], 96
    %1877 = vst.msk [vmem:[%s1876] sm:$0xff] %vm795, %v1871
    %1878 = vst.msk [vmem:[%s1876 + $0x8] sm:$0xff] %vm795, %v1873
    %s1879 = scalar_lea.vmem [#allocation2], 112
    %v1880 = vld [vmem:[%s1879] sm:$0xff]
    %v1881 = vld [vmem:[%s1879 + $0x8] sm:$0xff]
    %v1882 = vsel %vm795, %v1860, 0
    %v1884 = vsel %vm795, %v1862, 0
    %1886 = vmatprep.subr.mxu0 0.0
    %1887 = vmatpush1.msra.mxu0 0.0
    %1888 = vmatprep.subr.mxu0 0.0
    %1889 = vmatpush1.msra.mxu0 0.0
    %1890 = vmatprep.subr.mxu0 0.0
    %1891 = vmatpush1.msra.mxu0 0.0
    %1892 = vmatprep.subr.mxu0 0.0
    %1893 = vmatpush1.msra.mxu0 0.0
    %1894 = vmatprep.subr.mxu0 0.0
    %1895 = vmatpush1.msra.mxu0 0.0
    %1896 = vmatprep.subr.mxu0 0.0
    %1897 = vmatpush1.msra.mxu0 0.0
    %1898 = vmatprep.subr.mxu0 0.0
    %1899 = vmatpush1.msra.mxu0 0.0
    %1900 = vmatprep.subr.mxu0 0.0
    %1901 = vmatpush1.msra.mxu0 0.0
    %1902 = vmatprep.subr.mxu0 0.0
    %1903 = vmatpush1.msra.mxu0 0.0
    %1904 = vmatprep.subr.mxu0 0.0
    %1905 = vmatpush1.msra.mxu0 0.0
    %1906 = vmatprep.subr.mxu0 0.0
    %1907 = vmatpush1.msra.mxu0 0.0
    %1908 = vmatprep.subr.mxu0 0.0
    %1909 = vmatpush1.msra.mxu0 0.0
    %1910 = vmatprep.subr.mxu0 0.0
    %1911 = vmatpush1.msra.mxu0 0.0
    %1912 = vmatprep.subr.mxu0 0.0
    %1913 = vmatpush1.msra.mxu0 0.0
    %1914 = vmatprep.subr.mxu0 0.0
    %1915 = vmatpush1.msra.mxu0 %v788
    %1916 = vmatprep.subr.mxu0 0.0
    %1917 = vmatpush1.msra.mxu0 %v787
    %1918 = vmatprep.subr.mxu0 0.0
    %1919 = vmatpush2.msra.mxu0 0.0
    %1920 = vmatprep.subr.mxu0 0.0
    %1921 = vmatpush2.msra.mxu0 0.0
    %1922 = vmatprep.subr.mxu0 0.0
    %1923 = vmatpush2.msra.mxu0 0.0
    %1924 = vmatprep.subr.mxu0 0.0
    %1925 = vmatpush2.msra.mxu0 0.0
    %1926 = vmatprep.subr.mxu0 0.0
    %1927 = vmatpush2.msra.mxu0 0.0
    %1928 = vmatprep.subr.mxu0 0.0
    %1929 = vmatpush2.msra.mxu0 0.0
    %1930 = vmatprep.subr.mxu0 0.0
    %1931 = vmatpush2.msra.mxu0 0.0
    %1932 = vmatprep.subr.mxu0 0.0
    %1933 = vmatpush2.msra.mxu0 0.0
    %1934 = vmatprep.subr.mxu0 0.0
    %1935 = vmatpush2.msra.mxu0 0.0
    %1936 = vmatprep.subr.mxu0 0.0
    %1937 = vmatpush2.msra.mxu0 0.0
    %1938 = vmatprep.subr.mxu0 0.0
    %1939 = vmatpush2.msra.mxu0 0.0
    %1940 = vmatprep.subr.mxu0 0.0
    %1941 = vmatpush2.msra.mxu0 0.0
    %1942 = vmatprep.subr.mxu0 0.0
    %1943 = vmatpush2.msra.mxu0 0.0
    %1944 = vmatprep.subr.mxu0 0.0
    %1945 = vmatpush2.msra.mxu0 0.0
    %1946 = vmatprep.subr.mxu0 0.0
    %1947 = vmatpush2.msra.mxu0 0.0
    %1948 = vmatprep.subr.mxu0 0.0
    %1949 = vmatpush2.msra.mxu0 0.0
    %1950 = vmatprep.mubr.f32.mxu0 0.0
    %1951 = vmatmul.mubr.f32.gmra.mxu0 %v1882
    %v1952 = vpop.f32.mrf.mxu0
    %v1953 = vadd.f32 0.0, %v1952
    %v1954 = vpop.f32.mrf.mxu0
    %1955 = vmatprep.mubr.f32.mxu0 0.0
    %1956 = vmatmul.mubr.f32.gmra.mxu0 %v1884
    %v1957 = vpop.f32.mrf.mxu0
    %v1958 = vadd.f32 0.0, %v1957
    %v1959 = vpop.f32.mrf.mxu0
    %1960 = vdwg.mxu0
    %v1961 = vadd.f32 %v1880, %v1953
    %v1962 = vadd.f32 %v1881, %v1958
    %v1963 = vxor.u32 %v1961, 2147483648
    %v1964 = vxor.u32 %v1962, 2147483648
    %v1965 = vmul.f32 %v1963, 1.442695
    %v1966 = vpow.pop %v1965
    %v1967 = vmul.f32 %v1964, 1.442695
    %v1968 = vpow.pop %v1967
    %v1969 = vadd.f32 %v1966, 1.0
    %v1970 = vadd.f32 %v1968, 1.0
    %v1971 = vrcp.pop %v1969
    %v1972 = vmul.f32 1.0, %v1971
    %v1973 = vrcp.pop %v1970
    %v1974 = vmul.f32 1.0, %v1973
    %v1975 = vtanh.pop %v1961
    %v1976 = vtanh.pop %v1962
    %v1977 = vmul.f32 %v1972, %v1843
    %v1978 = vmul.f32 %v1974, %v1844
    %1981 = vrot.lane.b32.xlu0 %v1975, 96
    %v1982 = vpop.permute.xlu0 %1981
    %1983 = vrot.lane.b32.xlu0 %v1976, 96
    %v1984 = vpop.permute.xlu0 %1983
    %v1987 = vmul.f32 %v1972, %v1982
    %v1988 = vmul.f32 %v1974, %v1984
    %1991 = vrot.lane.b32.xlu0 %v1987, 16
    %v1992 = vpop.permute.xlu0 %1991
    %1993 = vrot.lane.b32.xlu0 %v1988, 16
    %v1994 = vpop.permute.xlu0 %1993
    %v1997 = vadd.f32 %v1977, %v1992
    %v1998 = vadd.f32 %v1978, %v1994
    %v1999 = vtanh.pop %v1997
    %v2000 = vtanh.pop %v1998
    %2003 = vrot.lane.b32.xlu0 %v1999, 32
    %v2004 = vpop.permute.xlu0 %2003
    %2005 = vrot.lane.b32.xlu0 %v2000, 32
    %v2006 = vpop.permute.xlu0 %2005
    %v2009 = vmul.f32 %v1972, %v2004
    %v2010 = vmul.f32 %v1974, %v2006
    %2013 = vrot.lane.b32.xlu0 %v2009, 80
    %v2014 = vpop.permute.xlu0 %2013
    %2015 = vrot.lane.b32.xlu0 %v2010, 80
    %v2016 = vpop.permute.xlu0 %2015
    %s2019 = scalar_lea.vmem [#allocation3], 112
    %2020 = vst.msk [vmem:[%s2019] sm:$0xff] %vm795, %v2014
    %2021 = vst.msk [vmem:[%s2019 + $0x8] sm:$0xff] %vm795, %v2016
    %2024 = vrot.lane.b32.xlu0 %v1997, 112
    %v2025 = vpop.permute.xlu0 %2024
    %2026 = vrot.lane.b32.xlu0 %v1998, 112
    %v2027 = vpop.permute.xlu0 %2026
    %s2030 = scalar_lea.vmem [#allocation4], 112
    %2031 = vst.msk [vmem:[%s2030] sm:$0xff] %vm795, %v2025
    %2032 = vst.msk [vmem:[%s2030 + $0x8] sm:$0xff] %vm795, %v2027
    %v2033 = vld [vmem:[#allocation3] sm:$0xff]
    %v2034 = vld [vmem:[#allocation3 + $0x8] sm:$0xff]
    %v2035 = vld [vmem:[#allocation3 + $0x10] sm:$0xff]
    %v2036 = vld [vmem:[#allocation3 + $0x18] sm:$0xff]
    %v2037 = vld [vmem:[#allocation3 + $0x20] sm:$0xff]
    %v2038 = vld [vmem:[#allocation3 + $0x28] sm:$0xff]
    %v2039 = vld [vmem:[#allocation3 + $0x30] sm:$0xff]
    %v2040 = vld [vmem:[#allocation3 + $0x38] sm:$0xff]
    %v2041 = vld [vmem:[#allocation3 + $0x40] sm:$0xff]
    %v2042 = vld [vmem:[#allocation3 + $0x48] sm:$0xff]
    %v2043 = vld [vmem:[#allocation3 + $0x50] sm:$0xff]
    %v2044 = vld [vmem:[#allocation3 + $0x58] sm:$0xff]
    %v2045 = vld [vmem:[#allocation3 + $0x60] sm:$0xff]
    %v2046 = vld [vmem:[#allocation3 + $0x68] sm:$0xff]
    %v2047 = vld [vmem:[#allocation3 + $0x70] sm:$0xff]
    %v2048 = vld [vmem:[#allocation3 + $0x78] sm:$0xff]
    %v2049 = vld [vmem:[#allocation4] sm:$0xff]
    %v2050 = vld [vmem:[#allocation4 + $0x8] sm:$0xff]
    %v2051 = vld [vmem:[#allocation4 + $0x10] sm:$0xff]
    %v2052 = vld [vmem:[#allocation4 + $0x18] sm:$0xff]
    %v2053 = vld [vmem:[#allocation4 + $0x20] sm:$0xff]
    %v2054 = vld [vmem:[#allocation4 + $0x28] sm:$0xff]
    %v2055 = vld [vmem:[#allocation4 + $0x30] sm:$0xff]
    %v2056 = vld [vmem:[#allocation4 + $0x38] sm:$0xff]
    %v2057 = vld [vmem:[#allocation4 + $0x40] sm:$0xff]
    %v2058 = vld [vmem:[#allocation4 + $0x48] sm:$0xff]
    %v2059 = vld [vmem:[#allocation4 + $0x50] sm:$0xff]
    %v2060 = vld [vmem:[#allocation4 + $0x58] sm:$0xff]
    %v2061 = vld [vmem:[#allocation4 + $0x60] sm:$0xff]
    %v2062 = vld [vmem:[#allocation4 + $0x68] sm:$0xff]
    %v2063 = vld [vmem:[#allocation4 + $0x70] sm:$0xff]
    %v2064 = vld [vmem:[#allocation4 + $0x78] sm:$0xff]
    %v2065 = vld [vmem:[%s11] sm:$0xff]
    %v2066 = vld [vmem:[%s11 + $0x8] sm:$0xff]
    %v2067 = vld [vmem:[%s12] sm:$0x1]
    %v2069 = vlaneseq
    %v2070 = vshrl.u32 %v2069, 7
    %v2071 = vsub.s32 0, %v2070
    %v2072 = vrot.slane %v2067, %v2071
    %v2075 = vsel %vm795, %v2033, 0
    %v2078 = vsel %vm795, %v2034, 0
    %v2081 = vsel %vm795, %v2035, 0
    %v2084 = vsel %vm795, %v2036, 0
    %v2087 = vsel %vm795, %v2037, 0
    %v2090 = vsel %vm795, %v2038, 0
    %v2093 = vsel %vm795, %v2039, 0
    %v2096 = vsel %vm795, %v2040, 0
    %v2099 = vsel %vm795, %v2041, 0
    %v2102 = vsel %vm795, %v2042, 0
    %v2105 = vsel %vm795, %v2043, 0
    %v2108 = vsel %vm795, %v2044, 0
    %v2111 = vsel %vm795, %v2045, 0
    %v2114 = vsel %vm795, %v2046, 0
    %v2117 = vsel %vm795, %v2047, 0
    %v2120 = vsel %vm795, %v2048, 0
    %2122 = vmatprep.subr.mxu0 0.0
    %2123 = vmatpush1.msra.mxu0 0.0
    %2124 = vmatprep.subr.mxu0 0.0
    %2125 = vmatpush1.msra.mxu0 0.0
    %2126 = vmatprep.subr.mxu0 0.0
    %2127 = vmatpush1.msra.mxu0 0.0
    %2128 = vmatprep.subr.mxu0 0.0
    %2129 = vmatpush1.msra.mxu0 0.0
    %2130 = vmatprep.subr.mxu0 0.0
    %2131 = vmatpush1.msra.mxu0 0.0
    %2132 = vmatprep.subr.mxu0 0.0
    %2133 = vmatpush1.msra.mxu0 0.0
    %2134 = vmatprep.subr.mxu0 0.0
    %2135 = vmatpush1.msra.mxu0 0.0
    %2136 = vmatprep.subr.mxu0 0.0
    %2137 = vmatpush1.msra.mxu0 0.0
    %2138 = vmatprep.subr.mxu0 0.0
    %2139 = vmatpush1.msra.mxu0 0.0
    %2140 = vmatprep.subr.mxu0 0.0
    %2141 = vmatpush1.msra.mxu0 0.0
    %2142 = vmatprep.subr.mxu0 0.0
    %2143 = vmatpush1.msra.mxu0 0.0
    %2144 = vmatprep.subr.mxu0 0.0
    %2145 = vmatpush1.msra.mxu0 0.0
    %2146 = vmatprep.subr.mxu0 0.0
    %2147 = vmatpush1.msra.mxu0 0.0
    %2148 = vmatprep.subr.mxu0 0.0
    %2149 = vmatpush1.msra.mxu0 0.0
    %2150 = vmatprep.subr.mxu0 0.0
    %2151 = vmatpush1.msra.mxu0 %v2066
    %2152 = vmatprep.subr.mxu0 0.0
    %2153 = vmatpush1.msra.mxu0 %v2065
    %2154 = vmatprep.subr.mxu0 0.0
    %2155 = vmatpush2.msra.mxu0 0.0
    %2156 = vmatprep.subr.mxu0 0.0
    %2157 = vmatpush2.msra.mxu0 0.0
    %2158 = vmatprep.subr.mxu0 0.0
    %2159 = vmatpush2.msra.mxu0 0.0
    %2160 = vmatprep.subr.mxu0 0.0
    %2161 = vmatpush2.msra.mxu0 0.0
    %2162 = vmatprep.subr.mxu0 0.0
    %2163 = vmatpush2.msra.mxu0 0.0
    %2164 = vmatprep.subr.mxu0 0.0
    %2165 = vmatpush2.msra.mxu0 0.0
    %2166 = vmatprep.subr.mxu0 0.0
    %2167 = vmatpush2.msra.mxu0 0.0
    %2168 = vmatprep.subr.mxu0 0.0
    %2169 = vmatpush2.msra.mxu0 0.0
    %2170 = vmatprep.subr.mxu0 0.0
    %2171 = vmatpush2.msra.mxu0 0.0
    %2172 = vmatprep.subr.mxu0 0.0
    %2173 = vmatpush2.msra.mxu0 0.0
    %2174 = vmatprep.subr.mxu0 0.0
    %2175 = vmatpush2.msra.mxu0 0.0
    %2176 = vmatprep.subr.mxu0 0.0
    %2177 = vmatpush2.msra.mxu0 0.0
    %2178 = vmatprep.subr.mxu0 0.0
    %2179 = vmatpush2.msra.mxu0 0.0
    %2180 = vmatprep.subr.mxu0 0.0
    %2181 = vmatpush2.msra.mxu0 0.0
    %2182 = vmatprep.subr.mxu0 0.0
    %2183 = vmatpush2.msra.mxu0 0.0
    %2184 = vmatprep.subr.mxu0 0.0
    %2185 = vmatpush2.msra.mxu0 0.0
    %2186 = vmatprep.mubr.f32.mxu0 0.0
    %2187 = vmatmul.mubr.f32.gmra.mxu0 %v2075
    %v2188 = vpop.f32.mrf.mxu0
    %v2189 = vadd.f32 %v2072, %v2188
    %v2190 = vpop.f32.mrf.mxu0
    %2191 = vmatprep.mubr.f32.mxu0 0.0
    %2192 = vmatmul.mubr.f32.gmra.mxu0 %v2078
    %v2193 = vpop.f32.mrf.mxu0
    %v2194 = vadd.f32 %v2072, %v2193
    %v2195 = vpop.f32.mrf.mxu0
    %2196 = vmatprep.mubr.f32.mxu0 0.0
    %2197 = vmatmul.mubr.f32.gmra.mxu0 %v2081
    %v2198 = vpop.f32.mrf.mxu0
    %v2199 = vadd.f32 %v2072, %v2198
    %v2200 = vpop.f32.mrf.mxu0
    %2201 = vmatprep.mubr.f32.mxu0 0.0
    %2202 = vmatmul.mubr.f32.gmra.mxu0 %v2084
    %v2203 = vpop.f32.mrf.mxu0
    %v2204 = vadd.f32 %v2072, %v2203
    %v2205 = vpop.f32.mrf.mxu0
    %2206 = vmatprep.mubr.f32.mxu0 0.0
    %2207 = vmatmul.mubr.f32.gmra.mxu0 %v2087
    %v2208 = vpop.f32.mrf.mxu0
    %v2209 = vadd.f32 %v2072, %v2208
    %v2210 = vpop.f32.mrf.mxu0
    %2211 = vmatprep.mubr.f32.mxu0 0.0
    %2212 = vmatmul.mubr.f32.gmra.mxu0 %v2090
    %v2213 = vpop.f32.mrf.mxu0
    %v2214 = vadd.f32 %v2072, %v2213
    %v2215 = vpop.f32.mrf.mxu0
    %2216 = vmatprep.mubr.f32.mxu0 0.0
    %2217 = vmatmul.mubr.f32.gmra.mxu0 %v2093
    %v2218 = vpop.f32.mrf.mxu0
    %v2219 = vadd.f32 %v2072, %v2218
    %v2220 = vpop.f32.mrf.mxu0
    %2221 = vmatprep.mubr.f32.mxu0 0.0
    %2222 = vmatmul.mubr.f32.gmra.mxu0 %v2096
    %v2223 = vpop.f32.mrf.mxu0
    %v2224 = vadd.f32 %v2072, %v2223
    %v2225 = vpop.f32.mrf.mxu0
    %2226 = vmatprep.mubr.f32.mxu0 0.0
    %2227 = vmatmul.mubr.f32.gmra.mxu0 %v2099
    %v2228 = vpop.f32.mrf.mxu0
    %v2229 = vadd.f32 %v2072, %v2228
    %v2230 = vpop.f32.mrf.mxu0
    %2231 = vmatprep.mubr.f32.mxu0 0.0
    %2232 = vmatmul.mubr.f32.gmra.mxu0 %v2102
    %v2233 = vpop.f32.mrf.mxu0
    %v2234 = vadd.f32 %v2072, %v2233
    %v2235 = vpop.f32.mrf.mxu0
    %2236 = vmatprep.mubr.f32.mxu0 0.0
    %2237 = vmatmul.mubr.f32.gmra.mxu0 %v2105
    %v2238 = vpop.f32.mrf.mxu0
    %v2239 = vadd.f32 %v2072, %v2238
    %v2240 = vpop.f32.mrf.mxu0
    %2241 = vmatprep.mubr.f32.mxu0 0.0
    %2242 = vmatmul.mubr.f32.gmra.mxu0 %v2108
    %v2243 = vpop.f32.mrf.mxu0
    %v2244 = vadd.f32 %v2072, %v2243
    %v2245 = vpop.f32.mrf.mxu0
    %2246 = vmatprep.mubr.f32.mxu0 0.0
    %2247 = vmatmul.mubr.f32.gmra.mxu0 %v2111
    %v2248 = vpop.f32.mrf.mxu0
    %v2249 = vadd.f32 %v2072, %v2248
    %v2250 = vpop.f32.mrf.mxu0
    %2251 = vmatprep.mubr.f32.mxu0 0.0
    %2252 = vmatmul.mubr.f32.gmra.mxu0 %v2114
    %v2253 = vpop.f32.mrf.mxu0
    %v2254 = vadd.f32 %v2072, %v2253
    %v2255 = vpop.f32.mrf.mxu0
    %2256 = vmatprep.mubr.f32.mxu0 0.0
    %2257 = vmatmul.mubr.f32.gmra.mxu0 %v2117
    %v2258 = vpop.f32.mrf.mxu0
    %v2259 = vadd.f32 %v2072, %v2258
    %v2260 = vpop.f32.mrf.mxu0
    %2261 = vmatprep.mubr.f32.mxu0 0.0
    %2262 = vmatmul.mubr.f32.gmra.mxu0 %v2120
    %v2263 = vpop.f32.mrf.mxu0
    %v2264 = vadd.f32 %v2072, %v2263
    %v2265 = vpop.f32.mrf.mxu0
    %2266 = vdwg.mxu0
    %vm2267 = vcmask 48128
    %v2268 = vsel %vm2267, %v2189, -inf
    %2269 = vmax.xlane.f32.xlu0 %v2268
    %v2270 = vpop.xlane.xlu0 %2269
    %v2271 = vsel %vm2267, %v2194, -inf
    %2272 = vmax.xlane.f32.xlu0 %v2271
    %v2273 = vpop.xlane.xlu0 %2272
    %v2274 = vsel %vm2267, %v2199, -inf
    %2275 = vmax.xlane.f32.xlu0 %v2274
    %v2276 = vpop.xlane.xlu0 %2275
    %v2277 = vsel %vm2267, %v2204, -inf
    %2278 = vmax.xlane.f32.xlu0 %v2277
    %v2279 = vpop.xlane.xlu0 %2278
    %v2280 = vsel %vm2267, %v2209, -inf
    %2281 = vmax.xlane.f32.xlu0 %v2280
    %v2282 = vpop.xlane.xlu0 %2281
    %v2283 = vsel %vm2267, %v2214, -inf
    %2284 = vmax.xlane.f32.xlu0 %v2283
    %v2285 = vpop.xlane.xlu0 %2284
    %v2286 = vsel %vm2267, %v2219, -inf
    %2287 = vmax.xlane.f32.xlu0 %v2286
    %v2288 = vpop.xlane.xlu0 %2287
    %v2289 = vsel %vm2267, %v2224, -inf
    %2290 = vmax.xlane.f32.xlu0 %v2289
    %v2291 = vpop.xlane.xlu0 %2290
    %v2292 = vsel %vm2267, %v2229, -inf
    %2293 = vmax.xlane.f32.xlu0 %v2292
    %v2294 = vpop.xlane.xlu0 %2293
    %v2295 = vsel %vm2267, %v2234, -inf
    %2296 = vmax.xlane.f32.xlu0 %v2295
    %v2297 = vpop.xlane.xlu0 %2296
    %v2298 = vsel %vm2267, %v2239, -inf
    %2299 = vmax.xlane.f32.xlu0 %v2298
    %v2300 = vpop.xlane.xlu0 %2299
    %v2301 = vsel %vm2267, %v2244, -inf
    %2302 = vmax.xlane.f32.xlu0 %v2301
    %v2303 = vpop.xlane.xlu0 %2302
    %v2304 = vsel %vm2267, %v2249, -inf
    %2305 = vmax.xlane.f32.xlu0 %v2304
    %v2306 = vpop.xlane.xlu0 %2305
    %v2307 = vsel %vm2267, %v2254, -inf
    %2308 = vmax.xlane.f32.xlu0 %v2307
    %v2309 = vpop.xlane.xlu0 %2308
    %v2310 = vsel %vm2267, %v2259, -inf
    %2311 = vmax.xlane.f32.xlu0 %v2310
    %v2312 = vpop.xlane.xlu0 %2311
    %v2313 = vsel %vm2267, %v2264, -inf
    %2314 = vmax.xlane.f32.xlu0 %v2313
    %v2315 = vpop.xlane.xlu0 %2314
    %v2316 = vsub.f32 %v2189, %v2270
    %v2317 = vsub.f32 %v2194, %v2273
    %v2318 = vsub.f32 %v2199, %v2276
    %v2319 = vsub.f32 %v2204, %v2279
    %v2320 = vsub.f32 %v2209, %v2282
    %v2321 = vsub.f32 %v2214, %v2285
    %v2322 = vsub.f32 %v2219, %v2288
    %v2323 = vsub.f32 %v2224, %v2291
    %v2324 = vsub.f32 %v2229, %v2294
    %v2325 = vsub.f32 %v2234, %v2297
    %v2326 = vsub.f32 %v2239, %v2300
    %v2327 = vsub.f32 %v2244, %v2303
    %v2328 = vsub.f32 %v2249, %v2306
    %v2329 = vsub.f32 %v2254, %v2309
    %v2330 = vsub.f32 %v2259, %v2312
    %v2331 = vsub.f32 %v2264, %v2315
    %v2332 = vmul.f32 %v2316, 1.442695
    %v2333 = vpow.pop %v2332
    %v2334 = vmul.f32 %v2317, 1.442695
    %v2335 = vpow.pop %v2334
    %v2336 = vmul.f32 %v2318, 1.442695
    %v2337 = vpow.pop %v2336
    %v2338 = vmul.f32 %v2319, 1.442695
    %v2339 = vpow.pop %v2338
    %v2340 = vmul.f32 %v2320, 1.442695
    %v2341 = vpow.pop %v2340
    %v2342 = vmul.f32 %v2321, 1.442695
    %v2343 = vpow.pop %v2342
    %v2344 = vmul.f32 %v2322, 1.442695
    %v2345 = vpow.pop %v2344
    %v2346 = vmul.f32 %v2323, 1.442695
    %v2347 = vpow.pop %v2346
    %v2348 = vmul.f32 %v2324, 1.442695
    %v2349 = vpow.pop %v2348
    %v2350 = vmul.f32 %v2325, 1.442695
    %v2351 = vpow.pop %v2350
    %v2352 = vmul.f32 %v2326, 1.442695
    %v2353 = vpow.pop %v2352
    %v2354 = vmul.f32 %v2327, 1.442695
    %v2355 = vpow.pop %v2354
    %v2356 = vmul.f32 %v2328, 1.442695
    %v2357 = vpow.pop %v2356
    %v2358 = vmul.f32 %v2329, 1.442695
    %v2359 = vpow.pop %v2358
    %v2360 = vmul.f32 %v2330, 1.442695
    %v2361 = vpow.pop %v2360
    %v2362 = vmul.f32 %v2331, 1.442695
    %v2363 = vpow.pop %v2362
    %v2364 = vsel %vm2267, %v2333, 0.0
    %2365 = vadd.xlane.f32.xlu0 %v2364
    %v2366 = vpop.xlane.xlu0 %2365
    %v2367 = vsel %vm2267, %v2335, 0.0
    %2368 = vadd.xlane.f32.xlu0 %v2367
    %v2369 = vpop.xlane.xlu0 %2368
    %v2370 = vsel %vm2267, %v2337, 0.0
    %2371 = vadd.xlane.f32.xlu0 %v2370
    %v2372 = vpop.xlane.xlu0 %2371
    %v2373 = vsel %vm2267, %v2339, 0.0
    %2374 = vadd.xlane.f32.xlu0 %v2373
    %v2375 = vpop.xlane.xlu0 %2374
    %v2376 = vsel %vm2267, %v2341, 0.0
    %2377 = vadd.xlane.f32.xlu0 %v2376
    %v2378 = vpop.xlane.xlu0 %2377
    %v2379 = vsel %vm2267, %v2343, 0.0
    %2380 = vadd.xlane.f32.xlu0 %v2379
    %v2381 = vpop.xlane.xlu0 %2380
    %v2382 = vsel %vm2267, %v2345, 0.0
    %2383 = vadd.xlane.f32.xlu0 %v2382
    %v2384 = vpop.xlane.xlu0 %2383
    %v2385 = vsel %vm2267, %v2347, 0.0
    %2386 = vadd.xlane.f32.xlu0 %v2385
    %v2387 = vpop.xlane.xlu0 %2386
    %v2388 = vsel %vm2267, %v2349, 0.0
    %2389 = vadd.xlane.f32.xlu0 %v2388
    %v2390 = vpop.xlane.xlu0 %2389
    %v2391 = vsel %vm2267, %v2351, 0.0
    %2392 = vadd.xlane.f32.xlu0 %v2391
    %v2393 = vpop.xlane.xlu0 %2392
    %v2394 = vsel %vm2267, %v2353, 0.0
    %2395 = vadd.xlane.f32.xlu0 %v2394
    %v2396 = vpop.xlane.xlu0 %2395
    %v2397 = vsel %vm2267, %v2355, 0.0
    %2398 = vadd.xlane.f32.xlu0 %v2397
    %v2399 = vpop.xlane.xlu0 %2398
    %v2400 = vsel %vm2267, %v2357, 0.0
    %2401 = vadd.xlane.f32.xlu0 %v2400
    %v2402 = vpop.xlane.xlu0 %2401
    %v2403 = vsel %vm2267, %v2359, 0.0
    %2404 = vadd.xlane.f32.xlu0 %v2403
    %v2405 = vpop.xlane.xlu0 %2404
    %v2406 = vsel %vm2267, %v2361, 0.0
    %2407 = vadd.xlane.f32.xlu0 %v2406
    %v2408 = vpop.xlane.xlu0 %2407
    %v2409 = vsel %vm2267, %v2363, 0.0
    %2410 = vadd.xlane.f32.xlu0 %v2409
    %v2411 = vpop.xlane.xlu0 %2410
    %v2412 = vlog2.pop %v2366
    %v2413 = vmul.f32 %v2412, 0.6931472
    %v2414 = vlog2.pop %v2369
    %v2415 = vmul.f32 %v2414, 0.6931472
    %v2416 = vlog2.pop %v2372
    %v2417 = vmul.f32 %v2416, 0.6931472
    %v2418 = vlog2.pop %v2375
    %v2419 = vmul.f32 %v2418, 0.6931472
    %v2420 = vlog2.pop %v2378
    %v2421 = vmul.f32 %v2420, 0.6931472
    %v2422 = vlog2.pop %v2381
    %v2423 = vmul.f32 %v2422, 0.6931472
    %v2424 = vlog2.pop %v2384
    %v2425 = vmul.f32 %v2424, 0.6931472
    %v2426 = vlog2.pop %v2387
    %v2427 = vmul.f32 %v2426, 0.6931472
    %v2428 = vlog2.pop %v2390
    %v2429 = vmul.f32 %v2428, 0.6931472
    %v2430 = vlog2.pop %v2393
    %v2431 = vmul.f32 %v2430, 0.6931472
    %v2432 = vlog2.pop %v2396
    %v2433 = vmul.f32 %v2432, 0.6931472
    %v2434 = vlog2.pop %v2399
    %v2435 = vmul.f32 %v2434, 0.6931472
    %v2436 = vlog2.pop %v2402
    %v2437 = vmul.f32 %v2436, 0.6931472
    %v2438 = vlog2.pop %v2405
    %v2439 = vmul.f32 %v2438, 0.6931472
    %v2440 = vlog2.pop %v2408
    %v2441 = vmul.f32 %v2440, 0.6931472
    %v2442 = vlog2.pop %v2411
    %v2443 = vmul.f32 %v2442, 0.6931472
    %v2444 = vsub.f32 %v2316, %v2413
    %v2445 = vsub.f32 %v2317, %v2415
    %v2446 = vsub.f32 %v2318, %v2417
    %v2447 = vsub.f32 %v2319, %v2419
    %v2448 = vsub.f32 %v2320, %v2421
    %v2449 = vsub.f32 %v2321, %v2423
    %v2450 = vsub.f32 %v2322, %v2425
    %v2451 = vsub.f32 %v2323, %v2427
    %v2452 = vsub.f32 %v2324, %v2429
    %v2453 = vsub.f32 %v2325, %v2431
    %v2454 = vsub.f32 %v2326, %v2433
    %v2455 = vsub.f32 %v2327, %v2435
    %v2456 = vsub.f32 %v2328, %v2437
    %v2457 = vsub.f32 %v2329, %v2439
    %v2458 = vsub.f32 %v2330, %v2441
    %v2459 = vsub.f32 %v2331, %v2443
    %v2460 = vrcp.pop %v2366
    %v2461 = vrcp.pop %v2369
    %v2462 = vrcp.pop %v2372
    %v2463 = vrcp.pop %v2375
    %v2464 = vrcp.pop %v2378
    %v2465 = vrcp.pop %v2381
    %v2466 = vrcp.pop %v2384
    %v2467 = vrcp.pop %v2387
    %v2468 = vrcp.pop %v2390
    %v2469 = vrcp.pop %v2393
    %v2470 = vrcp.pop %v2396
    %v2471 = vrcp.pop %v2399
    %v2472 = vrcp.pop %v2402
    %v2473 = vrcp.pop %v2405
    %v2474 = vrcp.pop %v2408
    %v2475 = vrcp.pop %v2411
    %v2476 = vmul.f32 %v2333, %v2460
    %v2477 = vmul.f32 %v2335, %v2461
    %v2478 = vmul.f32 %v2337, %v2462
    %v2479 = vmul.f32 %v2339, %v2463
    %v2480 = vmul.f32 %v2341, %v2464
    %v2481 = vmul.f32 %v2343, %v2465
    %v2482 = vmul.f32 %v2345, %v2466
    %v2483 = vmul.f32 %v2347, %v2467
    %v2484 = vmul.f32 %v2349, %v2468
    %v2485 = vmul.f32 %v2351, %v2469
    %v2486 = vmul.f32 %v2353, %v2470
    %v2487 = vmul.f32 %v2355, %v2471
    %v2488 = vmul.f32 %v2357, %v2472
    %v2489 = vmul.f32 %v2359, %v2473
    %v2490 = vmul.f32 %v2361, %v2474
    %v2491 = vmul.f32 %v2363, %v2475
    %v2492 = vmul.f32 %v2444, %v2476
    %v2493 = vmul.f32 %v2445, %v2477
    %v2494 = vmul.f32 %v2446, %v2478
    %v2495 = vmul.f32 %v2447, %v2479
    %v2496 = vmul.f32 %v2448, %v2480
    %v2497 = vmul.f32 %v2449, %v2481
    %v2498 = vmul.f32 %v2450, %v2482
    %v2499 = vmul.f32 %v2451, %v2483
    %v2500 = vmul.f32 %v2452, %v2484
    %v2501 = vmul.f32 %v2453, %v2485
    %v2502 = vmul.f32 %v2454, %v2486
    %v2503 = vmul.f32 %v2455, %v2487
    %v2504 = vmul.f32 %v2456, %v2488
    %v2505 = vmul.f32 %v2457, %v2489
    %v2506 = vmul.f32 %v2458, %v2490
    %v2507 = vmul.f32 %v2459, %v2491
    %v2508 = vsel %vm2267, %v2492, 0.0
    %2509 = vadd.xlane.f32.xlu0 %v2508
    %v2510 = vpop.xlane.xlu0 %2509
    %v2511 = vsel %vm2267, %v2493, 0.0
    %2512 = vadd.xlane.f32.xlu0 %v2511
    %v2513 = vpop.xlane.xlu0 %2512
    %v2514 = vsel %vm2267, %v2494, 0.0
    %2515 = vadd.xlane.f32.xlu0 %v2514
    %v2516 = vpop.xlane.xlu0 %2515
    %v2517 = vsel %vm2267, %v2495, 0.0
    %2518 = vadd.xlane.f32.xlu0 %v2517
    %v2519 = vpop.xlane.xlu0 %2518
    %v2520 = vsel %vm2267, %v2496, 0.0
    %2521 = vadd.xlane.f32.xlu0 %v2520
    %v2522 = vpop.xlane.xlu0 %2521
    %v2523 = vsel %vm2267, %v2497, 0.0
    %2524 = vadd.xlane.f32.xlu0 %v2523
    %v2525 = vpop.xlane.xlu0 %2524
    %v2526 = vsel %vm2267, %v2498, 0.0
    %2527 = vadd.xlane.f32.xlu0 %v2526
    %v2528 = vpop.xlane.xlu0 %2527
    %v2529 = vsel %vm2267, %v2499, 0.0
    %2530 = vadd.xlane.f32.xlu0 %v2529
    %v2531 = vpop.xlane.xlu0 %2530
    %v2532 = vsel %vm2267, %v2500, 0.0
    %2533 = vadd.xlane.f32.xlu0 %v2532
    %v2534 = vpop.xlane.xlu0 %2533
    %v2535 = vsel %vm2267, %v2501, 0.0
    %2536 = vadd.xlane.f32.xlu0 %v2535
    %v2537 = vpop.xlane.xlu0 %2536
    %v2538 = vsel %vm2267, %v2502, 0.0
    %2539 = vadd.xlane.f32.xlu0 %v2538
    %v2540 = vpop.xlane.xlu0 %2539
    %v2541 = vsel %vm2267, %v2503, 0.0
    %2542 = vadd.xlane.f32.xlu0 %v2541
    %v2543 = vpop.xlane.xlu0 %2542
    %v2544 = vsel %vm2267, %v2504, 0.0
    %2545 = vadd.xlane.f32.xlu0 %v2544
    %v2546 = vpop.xlane.xlu0 %2545
    %v2547 = vsel %vm2267, %v2505, 0.0
    %2548 = vadd.xlane.f32.xlu0 %v2547
    %v2549 = vpop.xlane.xlu0 %2548
    %v2550 = vsel %vm2267, %v2506, 0.0
    %2551 = vadd.xlane.f32.xlu0 %v2550
    %v2552 = vpop.xlane.xlu0 %2551
    %v2553 = vsel %vm2267, %v2507, 0.0
    %2554 = vadd.xlane.f32.xlu0 %v2553
    %v2555 = vpop.xlane.xlu0 %2554
    %v2556 = vsub.f32 0.0, %v2510
    %v2557 = vsub.f32 0.0, %v2513
    %v2558 = vsub.f32 0.0, %v2516
    %v2559 = vsub.f32 0.0, %v2519
    %v2560 = vsub.f32 0.0, %v2522
    %v2561 = vsub.f32 0.0, %v2525
    %v2562 = vsub.f32 0.0, %v2528
    %v2563 = vsub.f32 0.0, %v2531
    %v2564 = vsub.f32 0.0, %v2534
    %v2565 = vsub.f32 0.0, %v2537
    %v2566 = vsub.f32 0.0, %v2540
    %v2567 = vsub.f32 0.0, %v2543
    %v2568 = vsub.f32 0.0, %v2546
    %v2569 = vsub.f32 0.0, %v2549
    %v2570 = vsub.f32 0.0, %v2552
    %v2571 = vsub.f32 0.0, %v2555
    %2588 = vrot.lane.b32.xlu0 %v2049, 16
    %v2589 = vpop.permute.xlu0 %2588
    %2590 = vrot.lane.b32.xlu0 %v2050, 16
    %v2591 = vpop.permute.xlu0 %2590
    %2592 = vrot.lane.b32.xlu0 %v2051, 16
    %v2593 = vpop.permute.xlu0 %2592
    %2594 = vrot.lane.b32.xlu0 %v2052, 16
    %v2595 = vpop.permute.xlu0 %2594
    %2596 = vrot.lane.b32.xlu0 %v2053, 16
    %v2597 = vpop.permute.xlu0 %2596
    %2598 = vrot.lane.b32.xlu0 %v2054, 16
    %v2599 = vpop.permute.xlu0 %2598
    %2600 = vrot.lane.b32.xlu0 %v2055, 16
    %v2601 = vpop.permute.xlu0 %2600
    %2602 = vrot.lane.b32.xlu0 %v2056, 16
    %v2603 = vpop.permute.xlu0 %2602
    %2604 = vrot.lane.b32.xlu0 %v2057, 16
    %v2605 = vpop.permute.xlu0 %2604
    %2606 = vrot.lane.b32.xlu0 %v2058, 16
    %v2607 = vpop.permute.xlu0 %2606
    %2608 = vrot.lane.b32.xlu0 %v2059, 16
    %v2609 = vpop.permute.xlu0 %2608
    %2610 = vrot.lane.b32.xlu0 %v2060, 16
    %v2611 = vpop.permute.xlu0 %2610
    %2612 = vrot.lane.b32.xlu0 %v2061, 16
    %v2613 = vpop.permute.xlu0 %2612
    %2614 = vrot.lane.b32.xlu0 %v2062, 16
    %v2615 = vpop.permute.xlu0 %2614
    %2616 = vrot.lane.b32.xlu0 %v2063, 16
    %v2617 = vpop.permute.xlu0 %2616
    %2618 = vrot.lane.b32.xlu0 %v2064, 16
    %v2619 = vpop.permute.xlu0 %2618
    %2652 = vrot.lane.b32.xlu0 %v2476, 32
    %v2653 = vpop.permute.xlu0 %2652
    %2654 = vrot.lane.b32.xlu0 %v2477, 32
    %v2655 = vpop.permute.xlu0 %2654
    %2656 = vrot.lane.b32.xlu0 %v2478, 32
    %v2657 = vpop.permute.xlu0 %2656
    %2658 = vrot.lane.b32.xlu0 %v2479, 32
    %v2659 = vpop.permute.xlu0 %2658
    %2660 = vrot.lane.b32.xlu0 %v2480, 32
    %v2661 = vpop.permute.xlu0 %2660
    %2662 = vrot.lane.b32.xlu0 %v2481, 32
    %v2663 = vpop.permute.xlu0 %2662
    %2664 = vrot.lane.b32.xlu0 %v2482, 32
    %v2665 = vpop.permute.xlu0 %2664
    %2666 = vrot.lane.b32.xlu0 %v2483, 32
    %v2667 = vpop.permute.xlu0 %2666
    %2668 = vrot.lane.b32.xlu0 %v2484, 32
    %v2669 = vpop.permute.xlu0 %2668
    %2670 = vrot.lane.b32.xlu0 %v2485, 32
    %v2671 = vpop.permute.xlu0 %2670
    %2672 = vrot.lane.b32.xlu0 %v2486, 32
    %v2673 = vpop.permute.xlu0 %2672
    %2674 = vrot.lane.b32.xlu0 %v2487, 32
    %v2675 = vpop.permute.xlu0 %2674
    %2676 = vrot.lane.b32.xlu0 %v2488, 32
    %v2677 = vpop.permute.xlu0 %2676
    %2678 = vrot.lane.b32.xlu0 %v2489, 32
    %v2679 = vpop.permute.xlu0 %2678
    %2680 = vrot.lane.b32.xlu0 %v2490, 32
    %v2681 = vpop.permute.xlu0 %2680
    %2682 = vrot.lane.b32.xlu0 %v2491, 32
    %v2683 = vpop.permute.xlu0 %2682
    %2716 = vrot.lane.b32.xlu0 %v2444, 38
    %v2717 = vpop.permute.xlu0 %2716
    %2718 = vrot.lane.b32.xlu0 %v2445, 38
    %v2719 = vpop.permute.xlu0 %2718
    %2720 = vrot.lane.b32.xlu0 %v2446, 38
    %v2721 = vpop.permute.xlu0 %2720
    %2722 = vrot.lane.b32.xlu0 %v2447, 38
    %v2723 = vpop.permute.xlu0 %2722
    %2724 = vrot.lane.b32.xlu0 %v2448, 38
    %v2725 = vpop.permute.xlu0 %2724
    %2726 = vrot.lane.b32.xlu0 %v2449, 38
    %v2727 = vpop.permute.xlu0 %2726
    %2728 = vrot.lane.b32.xlu0 %v2450, 38
    %v2729 = vpop.permute.xlu0 %2728
    %2730 = vrot.lane.b32.xlu0 %v2451, 38
    %v2731 = vpop.permute.xlu0 %2730
    %2732 = vrot.lane.b32.xlu0 %v2452, 38
    %v2733 = vpop.permute.xlu0 %2732
    %2734 = vrot.lane.b32.xlu0 %v2453, 38
    %v2735 = vpop.permute.xlu0 %2734
    %2736 = vrot.lane.b32.xlu0 %v2454, 38
    %v2737 = vpop.permute.xlu0 %2736
    %2738 = vrot.lane.b32.xlu0 %v2455, 38
    %v2739 = vpop.permute.xlu0 %2738
    %2740 = vrot.lane.b32.xlu0 %v2456, 38
    %v2741 = vpop.permute.xlu0 %2740
    %2742 = vrot.lane.b32.xlu0 %v2457, 38
    %v2743 = vpop.permute.xlu0 %2742
    %2744 = vrot.lane.b32.xlu0 %v2458, 38
    %v2745 = vpop.permute.xlu0 %2744
    %2746 = vrot.lane.b32.xlu0 %v2459, 38
    %v2747 = vpop.permute.xlu0 %2746
    %2780 = vrot.lane.b32.xlu0 %v2189, 39
    %v2781 = vpop.permute.xlu0 %2780
    %2782 = vrot.lane.b32.xlu0 %v2194, 39
    %v2783 = vpop.permute.xlu0 %2782
    %2784 = vrot.lane.b32.xlu0 %v2199, 39
    %v2785 = vpop.permute.xlu0 %2784
    %2786 = vrot.lane.b32.xlu0 %v2204, 39
    %v2787 = vpop.permute.xlu0 %2786
    %2788 = vrot.lane.b32.xlu0 %v2209, 39
    %v2789 = vpop.permute.xlu0 %2788
    %2790 = vrot.lane.b32.xlu0 %v2214, 39
    %v2791 = vpop.permute.xlu0 %2790
    %2792 = vrot.lane.b32.xlu0 %v2219, 39
    %v2793 = vpop.permute.xlu0 %2792
    %2794 = vrot.lane.b32.xlu0 %v2224, 39
    %v2795 = vpop.permute.xlu0 %2794
    %2796 = vrot.lane.b32.xlu0 %v2229, 39
    %v2797 = vpop.permute.xlu0 %2796
    %2798 = vrot.lane.b32.xlu0 %v2234, 39
    %v2799 = vpop.permute.xlu0 %2798
    %2800 = vrot.lane.b32.xlu0 %v2239, 39
    %v2801 = vpop.permute.xlu0 %2800
    %2802 = vrot.lane.b32.xlu0 %v2244, 39
    %v2803 = vpop.permute.xlu0 %2802
    %2804 = vrot.lane.b32.xlu0 %v2249, 39
    %v2805 = vpop.permute.xlu0 %2804
    %2806 = vrot.lane.b32.xlu0 %v2254, 39
    %v2807 = vpop.permute.xlu0 %2806
    %2808 = vrot.lane.b32.xlu0 %v2259, 39
    %v2809 = vpop.permute.xlu0 %2808
    %2810 = vrot.lane.b32.xlu0 %v2264, 39
    %v2811 = vpop.permute.xlu0 %2810
    %v2828 = vsel %vm795, %v2033, %v2589
    %v2829 = vsel %vm795, %v2034, %v2591
    %v2830 = vsel %vm795, %v2035, %v2593
    %v2831 = vsel %vm795, %v2036, %v2595
    %v2832 = vsel %vm795, %v2037, %v2597
    %v2833 = vsel %vm795, %v2038, %v2599
    %v2834 = vsel %vm795, %v2039, %v2601
    %v2835 = vsel %vm795, %v2040, %v2603
    %v2836 = vsel %vm795, %v2041, %v2605
    %v2837 = vsel %vm795, %v2042, %v2607
    %v2838 = vsel %vm795, %v2043, %v2609
    %v2839 = vsel %vm795, %v2044, %v2611
    %v2840 = vsel %vm795, %v2045, %v2613
    %v2841 = vsel %vm795, %v2046, %v2615
    %v2842 = vsel %vm795, %v2047, %v2617
    %v2843 = vsel %vm795, %v2048, %v2619
    %v2844 = vsel %vm577, %v2828, %v2653
    %v2845 = vsel %vm577, %v2829, %v2655
    %v2846 = vsel %vm577, %v2830, %v2657
    %v2847 = vsel %vm577, %v2831, %v2659
    %v2848 = vsel %vm577, %v2832, %v2661
    %v2849 = vsel %vm577, %v2833, %v2663
    %v2850 = vsel %vm577, %v2834, %v2665
    %v2851 = vsel %vm577, %v2835, %v2667
    %v2852 = vsel %vm577, %v2836, %v2669
    %v2853 = vsel %vm577, %v2837, %v2671
    %v2854 = vsel %vm577, %v2838, %v2673
    %v2855 = vsel %vm577, %v2839, %v2675
    %v2856 = vsel %vm577, %v2840, %v2677
    %v2857 = vsel %vm577, %v2841, %v2679
    %v2858 = vsel %vm577, %v2842, %v2681
    %v2859 = vsel %vm577, %v2843, %v2683
    %vm2860 = vcmask 310272
    %v2861 = vsel %vm2860, %v2844, %v2717
    %v2862 = vsel %vm2860, %v2845, %v2719
    %v2863 = vsel %vm2860, %v2846, %v2721
    %v2864 = vsel %vm2860, %v2847, %v2723
    %v2865 = vsel %vm2860, %v2848, %v2725
    %v2866 = vsel %vm2860, %v2849, %v2727
    %v2867 = vsel %vm2860, %v2850, %v2729
    %v2868 = vsel %vm2860, %v2851, %v2731
    %v2869 = vsel %vm2860, %v2852, %v2733
    %v2870 = vsel %vm2860, %v2853, %v2735
    %v2871 = vsel %vm2860, %v2854, %v2737
    %v2872 = vsel %vm2860, %v2855, %v2739
    %v2873 = vsel %vm2860, %v2856, %v2741
    %v2874 = vsel %vm2860, %v2857, %v2743
    %v2875 = vsel %vm2860, %v2858, %v2745
    %v2876 = vsel %vm2860, %v2859, %v2747
    %vm2877 = vcmask 359424
    %v2878 = vsel %vm2877, %v2861, %v2556
    %v2879 = vsel %vm2877, %v2862, %v2557
    %v2880 = vsel %vm2877, %v2863, %v2558
    %v2881 = vsel %vm2877, %v2864, %v2559
    %v2882 = vsel %vm2877, %v2865, %v2560
    %v2883 = vsel %vm2877, %v2866, %v2561
    %v2884 = vsel %vm2877, %v2867, %v2562
    %v2885 = vsel %vm2877, %v2868, %v2563
    %v2886 = vsel %vm2877, %v2869, %v2564
    %v2887 = vsel %vm2877, %v2870, %v2565
    %v2888 = vsel %vm2877, %v2871, %v2566
    %v2889 = vsel %vm2877, %v2872, %v2567
    %v2890 = vsel %vm2877, %v2873, %v2568
    %v2891 = vsel %vm2877, %v2874, %v2569
    %v2892 = vsel %vm2877, %v2875, %v2570
    %v2893 = vsel %vm2877, %v2876, %v2571
    %vm2894 = vcmask 367616
    %v2895 = vsel %vm2894, %v2878, %v2781
    %v2896 = vsel %vm2894, %v2879, %v2783
    %v2897 = vsel %vm2894, %v2880, %v2785
    %v2898 = vsel %vm2894, %v2881, %v2787
    %v2899 = vsel %vm2894, %v2882, %v2789
    %v2900 = vsel %vm2894, %v2883, %v2791
    %v2901 = vsel %vm2894, %v2884, %v2793
    %v2902 = vsel %vm2894, %v2885, %v2795
    %v2903 = vsel %vm2894, %v2886, %v2797
    %v2904 = vsel %vm2894, %v2887, %v2799
    %v2905 = vsel %vm2894, %v2888, %v2801
    %v2906 = vsel %vm2894, %v2889, %v2803
    %v2907 = vsel %vm2894, %v2890, %v2805
    %v2908 = vsel %vm2894, %v2891, %v2807
    %v2909 = vsel %vm2894, %v2892, %v2809
    %v2910 = vsel %vm2894, %v2893, %v2811
    %vm2911 = vcmask 375808
    %v2912 = vsel %vm2911, %v2895, 0.0
    %v2913 = vsel %vm2911, %v2896, 0.0
    %v2914 = vsel %vm2911, %v2897, 0.0
    %v2915 = vsel %vm2911, %v2898, 0.0
    %v2916 = vsel %vm2911, %v2899, 0.0
    %v2917 = vsel %vm2911, %v2900, 0.0
    %v2918 = vsel %vm2911, %v2901, 0.0
    %v2919 = vsel %vm2911, %v2902, 0.0
    %v2920 = vsel %vm2911, %v2903, 0.0
    %v2921 = vsel %vm2911, %v2904, 0.0
    %v2922 = vsel %vm2911, %v2905, 0.0
    %v2923 = vsel %vm2911, %v2906, 0.0
    %v2924 = vsel %vm2911, %v2907, 0.0
    %v2925 = vsel %vm2911, %v2908, 0.0
    %v2926 = vsel %vm2911, %v2909, 0.0
    %v2927 = vsel %vm2911, %v2910, 0.0
    %2928 = vst [vmem:[#allocation14] sm:$0xff] %v2912
    %2929 = vst [vmem:[#allocation14 + $0x8] sm:$0xff] %v2913
    %2930 = vst [vmem:[#allocation14 + $0x10] sm:$0xff] %v2914
    %2931 = vst [vmem:[#allocation14 + $0x18] sm:$0xff] %v2915
    %2932 = vst [vmem:[#allocation14 + $0x20] sm:$0xff] %v2916
    %2933 = vst [vmem:[#allocation14 + $0x28] sm:$0xff] %v2917
    %2934 = vst [vmem:[#allocation14 + $0x30] sm:$0xff] %v2918
    %2935 = vst [vmem:[#allocation14 + $0x38] sm:$0xff] %v2919
    %2936 = vst [vmem:[#allocation14 + $0x40] sm:$0xff] %v2920
    %2937 = vst [vmem:[#allocation14 + $0x48] sm:$0xff] %v2921
    %2938 = vst [vmem:[#allocation14 + $0x50] sm:$0xff] %v2922
    %2939 = vst [vmem:[#allocation14 + $0x58] sm:$0xff] %v2923
    %2940 = vst [vmem:[#allocation14 + $0x60] sm:$0xff] %v2924
    %2941 = vst [vmem:[#allocation14 + $0x68] sm:$0xff] %v2925
    %2942 = vst [vmem:[#allocation14 + $0x70] sm:$0xff] %v2926
    %2943 = vst [vmem:[#allocation14 + $0x78] sm:$0xff] %v2927
    // Predicated region
    $region74: #{tpu_custom_call.1} parent=1 // pred_check
      _
    $region75: #{tpu_custom_call.1} parent=1 // pred_check_branch
      %2945 = sbr.rel (0) target = $region77
    $region76: #{tpu_custom_call.1} parent=1 // pred_region
      %s2947 = ssub.s32 2048, 2048
      %2948 = vsyncadd [#allocation7], %s2947
      %s2949 = sshll.u32 [#allocation14], 4
      %s2950 = int_to_ptr.vmem [resolvable:$true] %s2949
      %2955 = dma.vmem_to_hbm [thread:$0]  %s2950, 2048, %s13, [#allocation7], 128, 128, 8
    $region77: #{tpu_custom_call.1} parent=1 // pred_fallthru
      _
    // Predicated region
    $region78: #{tpu_custom_call.1} parent=1 // pred_check
      _
    $region79: #{tpu_custom_call.1} parent=1 // pred_check_branch
      %2957 = sbr.rel (0) target = $region81
    $region80: #{tpu_custom_call.1} parent=1 // pred_region
      %2958 = dma.done [#allocation7], 2048
    $region81: #{tpu_custom_call.1} parent=1 // pred_fallthru
      _
    %2959 = vsyncpa [#allocation6], 1
    %2960 = vsyncpa [#allocation9], 1
    %2961 = vsyncpa [#allocation12], 1
    %2962 = vsyncpa [#allocation7], 1

</llo_original>
